<compile_context>
chip_gen: v5e
topology: v5e:2x2
jax: 0.10.0
libtpu: 0.0.40
codegen_flags: <defaults>
</compile_context>

<pallas_src>
import functools

import jax
import jax.numpy as jnp
import numpy as np
from jax import lax
from jax.experimental import pallas as pl
from jax.experimental.pallas import tpu as pltpu


_ROW_CAP = 1024                       # max rows per grid step
_RESIDENT_1BUF_BYTES = 2 * 1024 * 1024  # single-buffer resident blocks above this


def _round_up(x, m):
    return ((x + m - 1) // m) * m


def _pick_row_tile(R, K, cap=_ROW_CAP):
    """Largest row tile that divides R (multiple of 8), capped by `cap` and by
    an ~8 MiB double-buffered patch-tile budget.  Falls back to `cap` (rows
    then get zero-padded) only when no exact divisor exists."""
    byte_cap = max(8, (8 * 1024 * 1024) // max(1, 2 * K))
    cap = max(8, min(cap, (byte_cap // 8) * 8))
    if R <= cap:
        return R                       # single tile; block == full array dims
    for tr in range(cap - cap % 8, 7, -8):
        if R % tr == 0:
            return tr
    return cap                         # rare fallback: padding path


def _resident_spec(shape, nbytes):
    """BlockSpec for blocks whose index never changes (weights / bias / scale).

    Large resident weight slabs request a single pipeline buffer so default
    double-buffering does not double the VMEM footprint (matters on v7x's
    64 MiB VMEM for hidden_dim >= 128).  Small blocks keep the default.
    """
    if nbytes >= _RESIDENT_1BUF_BYTES:
        try:
            return pl.BlockSpec(shape, lambda i: (0, 0),
                                pipeline_mode=pl.Buffered(1))
        except TypeError:              # older jax without pipeline_mode kwarg
            pass
    return pl.BlockSpec(shape, lambda i: (0, 0))


def _vmem_limit(TR, K, Cp, out_bytes):
    """VMEM limit from actual (double-buffered) block footprints + margin."""
    tile_bytes = (2 * (TR * K * 2)            # patch tiles (bf16)
                  + 2 * (K * Cp * 2)          # weights (bf16)
                  + 2 * (Cp * 4)              # bias / scale rows (f32)
                  + 2 * (TR * Cp * out_bytes) # output tiles
                  + 4 * (Cp * 4))             # stats tiles
    limit = int(tile_bytes * 1.25)
    # Never set the limit below the scoped default (compiler-internal scratch).
    return min(max(limit, 32 * 1024 * 1024), 100 * 1024 * 1024)


# ----------------------------- Pallas kernels -----------------------------

def _conv_mm_kernel(p_ref, w_ref, b_ref, o_ref, *, act):
    # p_ref: (TR, K) bf16   w_ref: (K, Cp) bf16   b_ref: (1, Cp) f32
    y = jnp.dot(p_ref[...], w_ref[...], preferred_element_type=jnp.float32)
    y = y + b_ref[...]
    if act == "leaky":
        y = jnp.where(y > 0, y, 0.2 * y)
    elif act == "sigmoid":
        y = 1.0 / (1.0 + jnp.exp(-y))       # exact; final layer is tiny
    o_ref[...] = y.astype(o_ref.dtype)


def _conv_mm_stats_kernel(p_ref, w_ref, b_ref, o_ref, s_ref, ss_ref):
    # Conv matmul + bias; per-tile partial per-channel sum / sum-of-squares of
    # the *pre-bias* activation z (exact under zero row padding, less
    # cancellation than post-bias E[y^2]-E[y]^2). Reduced over tiles in JAX.
    z = jnp.dot(p_ref[...], w_ref[...], preferred_element_type=jnp.float32)
    o_ref[...] = (z + b_ref[...]).astype(o_ref.dtype)
    s_ref[...] = jnp.sum(z, axis=0, keepdims=True)
    ss_ref[...] = jnp.sum(z * z, axis=0, keepdims=True)


def _bn_lrelu_apply_kernel(x_ref, sc_ref, sh_ref, o_ref):
    # x: (TR, Cp) bf16;  scale = g*rsqrt(var+eps), shift = beta - mean*scale.
    y = x_ref[...].astype(jnp.float32) * sc_ref[...] + sh_ref[...]
    o_ref[...] = jnp.where(y > 0, y, 0.2 * y).astype(o_ref.dtype)


# ----------------------------- kernel wrappers -----------------------------

def _prep(patches, w2d, b):
    R, K = patches.shape
    Cout = w2d.shape[1]
    Cp = _round_up(Cout, 128)                 # lane-dense output channels
    TR = _pick_row_tile(R, K)
    Rp = _round_up(R, TR)
    if Rp != R:                               # rare: no exact-divisor tile
        patches = jnp.pad(patches, ((0, Rp - R), (0, 0)))
    patches = patches.astype(jnp.bfloat16)    # no-op when already bf16
    w2d = jnp.pad(w2d, ((0, 0), (0, Cp - Cout))).astype(jnp.bfloat16)
    b2 = jnp.pad(b, (0, Cp - Cout)).reshape(1, Cp).astype(jnp.float32)
    return patches, w2d, b2, R, K, Cout, Rp, Cp, TR


def _in_specs(TR, K, Cp):
    return [
        pl.BlockSpec((TR, K), lambda i: (i, 0)),        # row tile of patches
        _resident_spec((K, Cp), K * Cp * 2),            # weights: resident
        _resident_spec((1, Cp), Cp * 4),                # bias: resident
    ]


def conv_mm(patches, w2d, b, act, out_dtype=jnp.bfloat16):
    """Fused conv-matmul + bias + activation. Returns (R, Cout) in out_dtype."""
    patches, w2d, b2, R, K, Cout, Rp, Cp, TR = _prep(patches, w2d, b)
    nt = Rp // TR
    ob = jnp.dtype(out_dtype).itemsize
    cost = pl.CostEstimate(
        flops=2 * Rp * K * Cp,
        transcendentals=(Rp * Cp if act == "sigmoid" else 0),
        bytes_accessed=Rp * K * 2 + K * Cp * 2 + Cp * 4 + Rp * Cp * ob)
    y = pl.pallas_call(
        functools.partial(_conv_mm_kernel, act=act),
        out_shape=jax.ShapeDtypeStruct((Rp, Cp), out_dtype),
        grid=(nt,),
        in_specs=_in_specs(TR, K, Cp),
        out_specs=pl.BlockSpec((TR, Cp), lambda i: (i, 0)),
        compiler_params=pltpu.CompilerParams(
            dimension_semantics=("parallel",),
            vmem_limit_bytes=_vmem_limit(TR, K, Cp, ob)),
        cost_estimate=cost,
    )(patches, w2d, b2)
    return y[:R, :Cout]


def conv_mm_with_stats(patches, w2d, b):
    """Conv-matmul + bias (bf16 out) with fused per-tile per-channel stats.

    Returns (y_padded (Rp,Cp) bf16, R, Cout, TR, mean (Cout,), var (Cout,)).
    """
    patches, w2d, b2, R, K, Cout, Rp, Cp, TR = _prep(patches, w2d, b)
    nt = Rp // TR
    cost = pl.CostEstimate(
        flops=2 * Rp * K * Cp + 3 * Rp * Cp,
        transcendentals=0,
        bytes_accessed=(Rp * K * 2 + K * Cp * 2 + Cp * 4
                        + Rp * Cp * 2 + 2 * nt * Cp * 4))
    y, s_part, ss_part = pl.pallas_call(
        _conv_mm_stats_kernel,
        out_shape=(
            jax.ShapeDtypeStruct((Rp, Cp), jnp.bfloat16),
            jax.ShapeDtypeStruct((nt, Cp), jnp.float32),
            jax.ShapeDtypeStruct((nt, Cp), jnp.float32),
        ),
        grid=(nt,),
        in_specs=_in_specs(TR, K, Cp),
        out_specs=(
            pl.BlockSpec((TR, Cp), lambda i: (i, 0)),
            pl.BlockSpec((1, Cp), lambda i: (i, 0)),    # per-tile partial sums
            pl.BlockSpec((1, Cp), lambda i: (i, 0)),
        ),
        compiler_params=pltpu.CompilerParams(
            dimension_semantics=("parallel",),          # megacore-friendly
            vmem_limit_bytes=_vmem_limit(TR, K, Cp, 2)),
        cost_estimate=cost,
    )(patches, w2d, b2)

    # Zero-padded rows (if any) contribute exactly 0 to the pre-bias sums.
    s = jnp.sum(s_part, axis=0)[:Cout]
    ss = jnp.sum(ss_part, axis=0)[:Cout]
    mean_z = s / R
    var = ss / R - mean_z * mean_z          # biased (training-mode) variance
    mean = mean_z + b                       # post-bias channel mean
    return y, R, Cout, TR, mean, var


def bn_lrelu_apply(y_pad, R, Cout, TR, mean, var, gamma, beta):
    """Tiled BatchNorm (precomputed batch stats) + LeakyReLU(0.2), bf16 I/O."""
    Rp, Cp = y_pad.shape
    scale = gamma * lax.rsqrt(var + 1e-5)
    shift = beta - mean * scale
    scale = jnp.pad(scale, (0, Cp - Cout)).reshape(1, Cp).astype(jnp.float32)
    shift = jnp.pad(shift, (0, Cp - Cout)).reshape(1, Cp).astype(jnp.float32)
    cost = pl.CostEstimate(flops=3 * Rp * Cp, transcendentals=0,
                           bytes_accessed=2 * Rp * Cp * 2 + 2 * Cp * 4)
    out = pl.pallas_call(
        _bn_lrelu_apply_kernel,
        out_shape=jax.ShapeDtypeStruct((Rp, Cp), jnp.bfloat16),
        grid=(Rp // TR,),
        in_specs=[
            pl.BlockSpec((TR, Cp), lambda i: (i, 0)),
            _resident_spec((1, Cp), Cp * 4),
            _resident_spec((1, Cp), Cp * 4),
        ],
        out_specs=pl.BlockSpec((TR, Cp), lambda i: (i, 0)),
        compiler_params=pltpu.CompilerParams(
            dimension_semantics=("parallel",),
            vmem_limit_bytes=_vmem_limit(TR, Cp, Cp, 2)),
        cost_estimate=cost,
    )(y_pad, scale, shift)
    return out[:R, :Cout]


# ------------------------------- glue (JAX) --------------------------------

def im2col(x_nhwc, k, stride, pad):
    """Return (patches:(N*Ho*Wo, k*k*C), Ho, Wo); patch features = (kh,kw,C).

    Operates on bf16 activations so every gather/transpose/reshape moves half
    the bytes of the previous f32 path.
    """
    x = jnp.pad(x_nhwc, ((0, 0), (pad, pad), (pad, pad), (0, 0)))
    N, Hp, Wp, C = x.shape
    Ho = (Hp - k) // stride + 1
    Wo = (Wp - k) // stride + 1
    ih = jnp.arange(Ho)[:, None] * stride + jnp.arange(k)[None, :]  # (Ho, k)
    iw = jnp.arange(Wo)[:, None] * stride + jnp.arange(k)[None, :]  # (Wo, k)
    p = x[:, ih, :, :]          # (N, Ho, k, Wp, C)
    p = p[:, :, :, iw, :]       # (N, Ho, k, Wo, k, C)
    p = jnp.transpose(p, (0, 1, 3, 2, 4, 5))  # (N, Ho, Wo, kh, kw, C)
    return p.reshape(N * Ho * Wo, k * k * C), Ho, Wo


def _w2d(w_oihw):
    Cout = w_oihw.shape[0]
    return jnp.transpose(w_oihw, (2, 3, 1, 0)).reshape(-1, Cout)  # (kh*kw*Cin, Cout)


def conv_act_block(x_nhwc, w_oihw, b, k, stride, pad, act):
    patches, Ho, Wo = im2col(x_nhwc, k, stride, pad)
    out_dtype = jnp.float32 if act == "sigmoid" else jnp.bfloat16
    y = conv_mm(patches, _w2d(w_oihw), b, act, out_dtype=out_dtype)
    return y, Ho, Wo


def conv_bn_lrelu_block(x_nhwc, w_oihw, b, gamma, beta, k, stride, pad):
    patches, Ho, Wo = im2col(x_nhwc, k, stride, pad)
    y_pad, R, Cout, TR, mean, var = conv_mm_with_stats(patches, _w2d(w_oihw), b)
    y = bn_lrelu_apply(y_pad, R, Cout, TR, mean, var, gamma, beta)
    return y, Ho, Wo


def discriminator_forward(x_nchw, p):
    # Cast once to bf16 *before* any patch extraction (halves all HBM glue).
    x = jnp.transpose(x_nchw, (0, 2, 3, 1)).astype(jnp.bfloat16)  # NHWC
    N = x.shape[0]

    y, Ho, Wo = conv_act_block(x, p["w1"], p["b1"], 4, 2, 1, "leaky")
    x = y.reshape(N, Ho, Wo, -1)

    y, Ho, Wo = conv_bn_lrelu_block(x, p["w2"], p["b2"], p["g2"], p["bt2"], 4, 2, 1)
    x = y.reshape(N, Ho, Wo, -1)

    y, Ho, Wo = conv_bn_lrelu_block(x, p["w3"], p["b3"], p["g3"], p["bt3"], 4, 2, 1)
    x = y.reshape(N, Ho, Wo, -1)

    y, Ho, Wo = conv_bn_lrelu_block(x, p["w4"], p["b4"], p["g4"], p["bt4"], 4, 2, 1)
    x = y.reshape(N, Ho, Wo, -1)

    y, Ho, Wo = conv_act_block(x, p["w5"], p["b5"], 4, 1, 0, "sigmoid")
    return y.astype(jnp.float32).reshape(-1, 1)   # matches PyTorch .view(-1, 1)


# --------------------------- pure-JAX reference ----------------------------

def _ref_conv(x, w_oihw, b, stride, pad):
    w_hwio = jnp.transpose(w_oihw, (2, 3, 1, 0))
    y = lax.conv_general_dilated(
        x, w_hwio, (stride, stride), ((pad, pad), (pad, pad)),
        dimension_numbers=("NHWC", "HWIO", "NHWC"),
        precision=lax.Precision.HIGHEST)
    return y + b.reshape(1, 1, 1, -1)


def _ref_bn_lrelu(x, g, bt):
    mean = jnp.mean(x, axis=(0, 1, 2), keepdims=True)
    var = jnp.mean(jnp.square(x - mean), axis=(0, 1, 2), keepdims=True)
    y = (x - mean) * lax.rsqrt(var + 1e-5) * g.reshape(1, 1, 1, -1) + bt.reshape(1, 1, 1, -1)
    return jnp.where(y > 0, y, 0.2 * y)


def reference_forward(x_nchw, p):
    x = jnp.transpose(x_nchw, (0, 2, 3, 1)).astype(jnp.float32)
    y = _ref_conv(x, p["w1"], p["b1"], 2, 1)
    y = jnp.where(y > 0, y, 0.2 * y)
    y = _ref_bn_lrelu(_ref_conv(y, p["w2"], p["b2"], 2, 1), p["g2"], p["bt2"])
    y = _ref_bn_lrelu(_ref_conv(y, p["w3"], p["b3"], 2, 1), p["g3"], p["bt3"])
    y = _ref_bn_lrelu(_ref_conv(y, p["w4"], p["b4"], 2, 1), p["g4"], p["bt4"])
    y = _ref_conv(y, p["w5"], p["b5"], 1, 0)
    y = 1.0 / (1.0 + jnp.exp(-y))
    return y.reshape(-1, 1)


# ---------------------------------- main ----------------------------------

if __name__ == "__main__":
    key = jax.random.PRNGKey(0)
    N, C_in, H, W = 2, 3, 64, 64      # 64x64 input -> final 4x4 conv gives 1x1
    hd = 8                            # small hidden_dim for the synthetic test

    def nrm(k, shape, scale=0.02):
        return scale * jax.random.normal(k, shape, dtype=jnp.float32)

    ks = jax.random.split(key, 16)
    params = {
        "w1": nrm(ks[0], (hd,      C_in,   4, 4)), "b1": nrm(ks[1], (hd,)),
        "w2": nrm(ks[2], (hd * 2,  hd,     4, 4)), "b2": nrm(ks[3], (hd * 2,)),
        "g2": jnp.ones((hd * 2,), jnp.float32),    "bt2": jnp.zeros((hd * 2,), jnp.float32),
        "w3": nrm(ks[4], (hd * 4,  hd * 2, 4, 4)), "b3": nrm(ks[5], (hd * 4,)),
        "g3": jnp.ones((hd * 4,), jnp.float32),    "bt3": jnp.zeros((hd * 4,), jnp.float32),
        "w4": nrm(ks[6], (hd * 8,  hd * 4, 4, 4)), "b4": nrm(ks[7], (hd * 8,)),
        "g4": jnp.ones((hd * 8,), jnp.float32),    "bt4": jnp.zeros((hd * 8,), jnp.float32),
        "w5": nrm(ks[8], (1,       hd * 8, 4, 4)), "b5": nrm(ks[9], (1,)),
    }

    x = jax.random.normal(ks[10], (N, C_in, H, W), dtype=jnp.float32)

    out = jax.block_until_ready(jax.jit(discriminator_forward)(x, params))
    ref = jax.block_until_ready(jax.jit(reference_forward)(x, params))

    assert out.shape == (N, 1), out.shape
    assert bool(jnp.all(jnp.isfinite(out)))
    # bf16 matmul inputs + bf16 intermediates with f32 accumulation/stats
    # -> loosened tolerance vs. the f32 reference.
    np.testing.assert_allclose(np.asarray(out), np.asarray(ref),
                               rtol=3e-2, atol=3e-2)
    print("KERNEL_OK")
</pallas_src>

<mosaic_0001>
module attributes {stable_mosaic.version = 11 : i64} {
  func.func @_conv_mm_kernel(%arg0: i32, %arg1: memref<1024x48xbf16, #tpu.memory_space<vmem>>, %arg2: memref<48x128xbf16, #tpu.memory_space<vmem>>, %arg3: memref<1x128xf32, #tpu.memory_space<vmem>>, %arg4: memref<1024x128xbf16, #tpu.memory_space<vmem>>) attributes {dimension_semantics = [#tpu.dimension_semantics<parallel>], iteration_bounds = array<i64: 2>, scalar_prefetch = 0 : i64, scratch_operands = 0 : i64, tpu.core_type = #tpu.core_type<tc>, window_params = [{transform_indices = @transform_0, window_bounds = array<i64: 1024, 48>}, {pipeline_mode = #tpu.pipeline_mode<synchronous>, transform_indices = @transform_1, window_bounds = array<i64: 48, 128>}, {pipeline_mode = #tpu.pipeline_mode<synchronous>, transform_indices = @transform_2, window_bounds = array<i64: 1, 128>}, {transform_indices = @transform_3, window_bounds = array<i64: 1024, 128>}]} {
    %c0 = arith.constant 0 : index
    %c0_0 = arith.constant 0 : index
    %0 = vector.load %arg1[%c0, %c0_0] : memref<1024x48xbf16, #tpu.memory_space<vmem>>, vector<1024x48xbf16>
    %c0_1 = arith.constant 0 : index
    %c0_2 = arith.constant 0 : index
    %1 = vector.load %arg2[%c0_1, %c0_2] : memref<48x128xbf16, #tpu.memory_space<vmem>>, vector<48x128xbf16>
    %cst = arith.constant dense<0.000000e+00> : vector<1024x128xf32>
    %2 = tpu.matmul %0, %1, %cst {dimension_numbers = #tpu.dot_dimension_numbers<[1], [0], [0], [1], [0, 0, 1, 1], [], []>} : vector<1024x48xbf16>, vector<48x128xbf16>, vector<1024x128xf32> -> vector<1024x128xf32>
    %c0_3 = arith.constant 0 : index
    %c0_4 = arith.constant 0 : index
    %3 = vector.load %arg3[%c0_3, %c0_4] : memref<1x128xf32, #tpu.memory_space<vmem>>, vector<1x128xf32>
    %4 = vector.broadcast %3 : vector<1x128xf32> to vector<1024x128xf32>
    %5 = arith.addf %2, %4 : vector<1024x128xf32>
    %cst_5 = arith.constant 0.000000e+00 : f32
    %6 = vector.broadcast %cst_5 : f32 to vector<1024x128xf32>
    %7 = arith.cmpf ogt, %5, %6 : vector<1024x128xf32>
    %cst_6 = arith.constant 2.000000e-01 : f32
    %8 = vector.broadcast %cst_6 : f32 to vector<1024x128xf32>
    %9 = arith.mulf %8, %5 : vector<1024x128xf32>
    %10 = arith.select %7, %5, %9 : vector<1024x128xi1>, vector<1024x128xf32>
    %11 = arith.truncf %10 : vector<1024x128xf32> to vector<1024x128xbf16>
    %c0_7 = arith.constant 0 : index
    %c0_8 = arith.constant 0 : index
    %12 = vector.load %arg4[%c0_7, %c0_8] : memref<1024x128xbf16, #tpu.memory_space<vmem>>, vector<1024x128xbf16>
    tpu.vector_store %arg4[%c0_7, %c0_8], %11 {strides = array<i32>} : memref<1024x128xbf16, #tpu.memory_space<vmem>>, vector<1024x128xbf16>,
    return
  }
  func.func @transform_0(%arg0: i32) -> (i32, i32) {
    %c0_i32 = arith.constant 0 : i32
    %c0_i32_0 = arith.constant 0 : i32
    return %arg0, %c0_i32 : i32, i32
  }
  func.func @transform_1(%arg0: i32) -> (i32, i32) {
    %c0_i32 = arith.constant 0 : i32
    %c0_i32_0 = arith.constant 0 : i32
    %c0_i32_1 = arith.constant 0 : i32
    return %c0_i32, %c0_i32_0 : i32, i32
  }
  func.func @transform_2(%arg0: i32) -> (i32, i32) {
    %c0_i32 = arith.constant 0 : i32
    %c0_i32_0 = arith.constant 0 : i32
    %c0_i32_1 = arith.constant 0 : i32
    return %c0_i32, %c0_i32_0 : i32, i32
  }
  func.func @transform_3(%arg0: i32) -> (i32, i32) {
    %c0_i32 = arith.constant 0 : i32
    %c0_i32_0 = arith.constant 0 : i32
    return %arg0, %c0_i32 : i32, i32
  }
}

module attributes {stable_mosaic.version = 11 : i64} {
  func.func @_bn_lrelu_apply_kernel(%arg0: i32, %arg1: memref<512x128xbf16, #tpu.memory_space<vmem>>, %arg2: memref<1x128xf32, #tpu.memory_space<vmem>>, %arg3: memref<1x128xf32, #tpu.memory_space<vmem>>, %arg4: memref<512x128xbf16, #tpu.memory_space<vmem>>) attributes {dimension_semantics = [#tpu.dimension_semantics<parallel>], iteration_bounds = array<i64: 1>, scalar_prefetch = 0 : i64, scratch_operands = 0 : i64, tpu.core_type = #tpu.core_type<tc>, window_params = [{transform_indices = @transform_0, window_bounds = array<i64: 512, 128>}, {pipeline_mode = #tpu.pipeline_mode<synchronous>, transform_indices = @transform_1, window_bounds = array<i64: 1, 128>}, {pipeline_mode = #tpu.pipeline_mode<synchronous>, transform_indices = @transform_2, window_bounds = array<i64: 1, 128>}, {transform_indices = @transform_3, window_bounds = array<i64: 512, 128>}]} {
    %c0 = arith.constant 0 : index
    %c0_0 = arith.constant 0 : index
    %0 = vector.load %arg1[%c0, %c0_0] : memref<512x128xbf16, #tpu.memory_space<vmem>>, vector<512x128xbf16>
    %1 = arith.extf %0 : vector<512x128xbf16> to vector<512x128xf32>
    %c0_1 = arith.constant 0 : index
    %c0_2 = arith.constant 0 : index
    %2 = vector.load %arg2[%c0_1, %c0_2] : memref<1x128xf32, #tpu.memory_space<vmem>>, vector<1x128xf32>
    %3 = vector.broadcast %2 : vector<1x128xf32> to vector<512x128xf32>
    %4 = arith.mulf %1, %3 : vector<512x128xf32>
    %c0_3 = arith.constant 0 : index
    %c0_4 = arith.constant 0 : index
    %5 = vector.load %arg3[%c0_3, %c0_4] : memref<1x128xf32, #tpu.memory_space<vmem>>, vector<1x128xf32>
    %6 = vector.broadcast %5 : vector<1x128xf32> to vector<512x128xf32>
    %7 = arith.addf %4, %6 : vector<512x128xf32>
    %cst = arith.constant 0.000000e+00 : f32
    %8 = vector.broadcast %cst : f32 to vector<512x128xf32>
    %9 = arith.cmpf ogt, %7, %8 : vector<512x128xf32>
    %cst_5 = arith.constant 2.000000e-01 : f32
    %10 = vector.broadcast %cst_5 : f32 to vector<512x128xf32>
    %11 = arith.mulf %10, %7 : vector<512x128xf32>
    %12 = arith.select %9, %7, %11 : vector<512x128xi1>, vector<512x128xf32>
    %13 = arith.truncf %12 : vector<512x128xf32> to vector<512x128xbf16>
    %c0_6 = arith.constant 0 : index
    %c0_7 = arith.constant 0 : index
    %14 = vector.load %arg4[%c0_6, %c0_7] : memref<512x128xbf16, #tpu.memory_space<vmem>>, vector<512x128xbf16>
    tpu.vector_store %arg4[%c0_6, %c0_7], %13 {strides = array<i32>} : memref<512x128xbf16, #tpu.memory_space<vmem>>, vector<512x128xbf16>,
    return
  }
  func.func @transform_0(%arg0: i32) -> (i32, i32) {
    %c0_i32 = arith.constant 0 : i32
    %c0_i32_0 = arith.constant 0 : i32
    return %arg0, %c0_i32 : i32, i32
  }
  func.func @transform_1(%arg0: i32) -> (i32, i32) {
    %c0_i32 = arith.constant 0 : i32
    %c0_i32_0 = arith.constant 0 : i32
    %c0_i32_1 = arith.constant 0 : i32
    return %c0_i32, %c0_i32_0 : i32, i32
  }
  func.func @transform_2(%arg0: i32) -> (i32, i32) {
    %c0_i32 = arith.constant 0 : i32
    %c0_i32_0 = arith.constant 0 : i32
    %c0_i32_1 = arith.constant 0 : i32
    return %c0_i32, %c0_i32_0 : i32, i32
  }
  func.func @transform_3(%arg0: i32) -> (i32, i32) {
    %c0_i32 = arith.constant 0 : i32
    %c0_i32_0 = arith.constant 0 : i32
    return %arg0, %c0_i32 : i32, i32
  }
}

module attributes {stable_mosaic.version = 11 : i64} {
  func.func @_conv_mm_stats_kernel(%arg0: i32, %arg1: memref<512x128xbf16, #tpu.memory_space<vmem>>, %arg2: memref<128x128xbf16, #tpu.memory_space<vmem>>, %arg3: memref<1x128xf32, #tpu.memory_space<vmem>>, %arg4: memref<512x128xbf16, #tpu.memory_space<vmem>>, %arg5: memref<1x128xf32, #tpu.memory_space<vmem>>, %arg6: memref<1x128xf32, #tpu.memory_space<vmem>>) attributes {dimension_semantics = [#tpu.dimension_semantics<parallel>], iteration_bounds = array<i64: 1>, scalar_prefetch = 0 : i64, scratch_operands = 0 : i64, tpu.core_type = #tpu.core_type<tc>, window_params = [{transform_indices = @transform_0, window_bounds = array<i64: 512, 128>}, {pipeline_mode = #tpu.pipeline_mode<synchronous>, transform_indices = @transform_1, window_bounds = array<i64: 128, 128>}, {pipeline_mode = #tpu.pipeline_mode<synchronous>, transform_indices = @transform_2, window_bounds = array<i64: 1, 128>}, {transform_indices = @transform_3, window_bounds = array<i64: 512, 128>}, {transform_indices = @transform_4, window_bounds = array<i64: 1, 128>}, {transform_indices = @transform_5, window_bounds = array<i64: 1, 128>}]} {
    %c0 = arith.constant 0 : index
    %c0_0 = arith.constant 0 : index
    %0 = vector.load %arg1[%c0, %c0_0] : memref<512x128xbf16, #tpu.memory_space<vmem>>, vector<512x128xbf16>
    %c0_1 = arith.constant 0 : index
    %c0_2 = arith.constant 0 : index
    %1 = vector.load %arg2[%c0_1, %c0_2] : memref<128x128xbf16, #tpu.memory_space<vmem>>, vector<128x128xbf16>
    %cst = arith.constant dense<0.000000e+00> : vector<512x128xf32>
    %2 = tpu.matmul %0, %1, %cst {dimension_numbers = #tpu.dot_dimension_numbers<[1], [0], [0], [1], [0, 0, 1, 1], [], []>} : vector<512x128xbf16>, vector<128x128xbf16>, vector<512x128xf32> -> vector<512x128xf32>
    %c0_3 = arith.constant 0 : index
    %c0_4 = arith.constant 0 : index
    %3 = vector.load %arg3[%c0_3, %c0_4] : memref<1x128xf32, #tpu.memory_space<vmem>>, vector<1x128xf32>
    %4 = vector.broadcast %3 : vector<1x128xf32> to vector<512x128xf32>
    %5 = arith.addf %2, %4 : vector<512x128xf32>
    %6 = arith.truncf %5 : vector<512x128xf32> to vector<512x128xbf16>
    %c0_5 = arith.constant 0 : index
    %c0_6 = arith.constant 0 : index
    %7 = vector.load %arg4[%c0_5, %c0_6] : memref<512x128xbf16, #tpu.memory_space<vmem>>, vector<512x128xbf16>
    tpu.vector_store %arg4[%c0_5, %c0_6], %6 {strides = array<i32>} : memref<512x128xbf16, #tpu.memory_space<vmem>>, vector<512x128xbf16>,
    %cst_7 = arith.constant dense<0.000000e+00> : vector<128xf32>
    %8 = vector.multi_reduction <add>, %2, %cst_7 [0] : vector<512x128xf32> to vector<128xf32>
    %9 = vector.shape_cast %8 : vector<128xf32> to vector<1x128xf32>
    %c0_8 = arith.constant 0 : index
    %c0_9 = arith.constant 0 : index
    %10 = vector.load %arg5[%c0_8, %c0_9] : memref<1x128xf32, #tpu.memory_space<vmem>>, vector<1x128xf32>
    tpu.vector_store %arg5[%c0_8, %c0_9], %9 {strides = array<i32>} : memref<1x128xf32, #tpu.memory_space<vmem>>, vector<1x128xf32>,
    %11 = arith.mulf %2, %2 : vector<512x128xf32>
    %cst_10 = arith.constant dense<0.000000e+00> : vector<128xf32>
    %12 = vector.multi_reduction <add>, %11, %cst_10 [0] : vector<512x128xf32> to vector<128xf32>
    %13 = vector.shape_cast %12 : vector<128xf32> to vector<1x128xf32>
    %c0_11 = arith.constant 0 : index
    %c0_12 = arith.constant 0 : index
    %14 = vector.load %arg6[%c0_11, %c0_12] : memref<1x128xf32, #tpu.memory_space<vmem>>, vector<1x128xf32>
    tpu.vector_store %arg6[%c0_11, %c0_12], %13 {strides = array<i32>} : memref<1x128xf32, #tpu.memory_space<vmem>>, vector<1x128xf32>,
    return
  }
  func.func @transform_0(%arg0: i32) -> (i32, i32) {
    %c0_i32 = arith.constant 0 : i32
    %c0_i32_0 = arith.constant 0 : i32
    return %arg0, %c0_i32 : i32, i32
  }
  func.func @transform_1(%arg0: i32) -> (i32, i32) {
    %c0_i32 = arith.constant 0 : i32
    %c0_i32_0 = arith.constant 0 : i32
    %c0_i32_1 = arith.constant 0 : i32
    return %c0_i32, %c0_i32_0 : i32, i32
  }
  func.func @transform_2(%arg0: i32) -> (i32, i32) {
    %c0_i32 = arith.constant 0 : i32
    %c0_i32_0 = arith.constant 0 : i32
    %c0_i32_1 = arith.constant 0 : i32
    return %c0_i32, %c0_i32_0 : i32, i32
  }
  func.func @transform_3(%arg0: i32) -> (i32, i32) {
    %c0_i32 = arith.constant 0 : i32
    %c0_i32_0 = arith.constant 0 : i32
    return %arg0, %c0_i32 : i32, i32
  }
  func.func @transform_4(%arg0: i32) -> (i32, i32) {
    %c0_i32 = arith.constant 0 : i32
    %c0_i32_0 = arith.constant 0 : i32
    return %arg0, %c0_i32 : i32, i32
  }
  func.func @transform_5(%arg0: i32) -> (i32, i32) {
    %c0_i32 = arith.constant 0 : i32
    %c0_i32_0 = arith.constant 0 : i32
    return %arg0, %c0_i32 : i32, i32
  }
}

module attributes {stable_mosaic.version = 11 : i64} {
  func.func @_conv_mm_stats_kernel(%arg0: i32, %arg1: memref<128x256xbf16, #tpu.memory_space<vmem>>, %arg2: memref<256x128xbf16, #tpu.memory_space<vmem>>, %arg3: memref<1x128xf32, #tpu.memory_space<vmem>>, %arg4: memref<128x128xbf16, #tpu.memory_space<vmem>>, %arg5: memref<1x128xf32, #tpu.memory_space<vmem>>, %arg6: memref<1x128xf32, #tpu.memory_space<vmem>>) attributes {dimension_semantics = [#tpu.dimension_semantics<parallel>], iteration_bounds = array<i64: 1>, scalar_prefetch = 0 : i64, scratch_operands = 0 : i64, tpu.core_type = #tpu.core_type<tc>, window_params = [{transform_indices = @transform_0, window_bounds = array<i64: 128, 256>}, {pipeline_mode = #tpu.pipeline_mode<synchronous>, transform_indices = @transform_1, window_bounds = array<i64: 256, 128>}, {pipeline_mode = #tpu.pipeline_mode<synchronous>, transform_indices = @transform_2, window_bounds = array<i64: 1, 128>}, {transform_indices = @transform_3, window_bounds = array<i64: 128, 128>}, {transform_indices = @transform_4, window_bounds = array<i64: 1, 128>}, {transform_indices = @transform_5, window_bounds = array<i64: 1, 128>}]} {
    %c0 = arith.constant 0 : index
    %c0_0 = arith.constant 0 : index
    %0 = vector.load %arg1[%c0, %c0_0] : memref<128x256xbf16, #tpu.memory_space<vmem>>, vector<128x256xbf16>
    %c0_1 = arith.constant 0 : index
    %c0_2 = arith.constant 0 : index
    %1 = vector.load %arg2[%c0_1, %c0_2] : memref<256x128xbf16, #tpu.memory_space<vmem>>, vector<256x128xbf16>
    %cst = arith.constant dense<0.000000e+00> : vector<128x128xf32>
    %2 = tpu.matmul %0, %1, %cst {dimension_numbers = #tpu.dot_dimension_numbers<[1], [0], [0], [1], [0, 0, 1, 1], [], []>} : vector<128x256xbf16>, vector<256x128xbf16>, vector<128x128xf32> -> vector<128x128xf32>
    %c0_3 = arith.constant 0 : index
    %c0_4 = arith.constant 0 : index
    %3 = vector.load %arg3[%c0_3, %c0_4] : memref<1x128xf32, #tpu.memory_space<vmem>>, vector<1x128xf32>
    %4 = vector.broadcast %3 : vector<1x128xf32> to vector<128x128xf32>
    %5 = arith.addf %2, %4 : vector<128x128xf32>
    %6 = arith.truncf %5 : vector<128x128xf32> to vector<128x128xbf16>
    %c0_5 = arith.constant 0 : index
    %c0_6 = arith.constant 0 : index
    %7 = vector.load %arg4[%c0_5, %c0_6] : memref<128x128xbf16, #tpu.memory_space<vmem>>, vector<128x128xbf16>
    tpu.vector_store %arg4[%c0_5, %c0_6], %6 {strides = array<i32>} : memref<128x128xbf16, #tpu.memory_space<vmem>>, vector<128x128xbf16>,
    %cst_7 = arith.constant dense<0.000000e+00> : vector<128xf32>
    %8 = vector.multi_reduction <add>, %2, %cst_7 [0] : vector<128x128xf32> to vector<128xf32>
    %9 = vector.shape_cast %8 : vector<128xf32> to vector<1x128xf32>
    %c0_8 = arith.constant 0 : index
    %c0_9 = arith.constant 0 : index
    %10 = vector.load %arg5[%c0_8, %c0_9] : memref<1x128xf32, #tpu.memory_space<vmem>>, vector<1x128xf32>
    tpu.vector_store %arg5[%c0_8, %c0_9], %9 {strides = array<i32>} : memref<1x128xf32, #tpu.memory_space<vmem>>, vector<1x128xf32>,
    %11 = arith.mulf %2, %2 : vector<128x128xf32>
    %cst_10 = arith.constant dense<0.000000e+00> : vector<128xf32>
    %12 = vector.multi_reduction <add>, %11, %cst_10 [0] : vector<128x128xf32> to vector<128xf32>
    %13 = vector.shape_cast %12 : vector<128xf32> to vector<1x128xf32>
    %c0_11 = arith.constant 0 : index
    %c0_12 = arith.constant 0 : index
    %14 = vector.load %arg6[%c0_11, %c0_12] : memref<1x128xf32, #tpu.memory_space<vmem>>, vector<1x128xf32>
    tpu.vector_store %arg6[%c0_11, %c0_12], %13 {strides = array<i32>} : memref<1x128xf32, #tpu.memory_space<vmem>>, vector<1x128xf32>,
    return
  }
  func.func @transform_0(%arg0: i32) -> (i32, i32) {
    %c0_i32 = arith.constant 0 : i32
    %c0_i32_0 = arith.constant 0 : i32
    return %arg0, %c0_i32 : i32, i32
  }
  func.func @transform_1(%arg0: i32) -> (i32, i32) {
    %c0_i32 = arith.constant 0 : i32
    %c0_i32_0 = arith.constant 0 : i32
    %c0_i32_1 = arith.constant 0 : i32
    return %c0_i32, %c0_i32_0 : i32, i32
  }
  func.func @transform_2(%arg0: i32) -> (i32, i32) {
    %c0_i32 = arith.constant 0 : i32
    %c0_i32_0 = arith.constant 0 : i32
    %c0_i32_1 = arith.constant 0 : i32
    return %c0_i32, %c0_i32_0 : i32, i32
  }
  func.func @transform_3(%arg0: i32) -> (i32, i32) {
    %c0_i32 = arith.constant 0 : i32
    %c0_i32_0 = arith.constant 0 : i32
    return %arg0, %c0_i32 : i32, i32
  }
  func.func @transform_4(%arg0: i32) -> (i32, i32) {
    %c0_i32 = arith.constant 0 : i32
    %c0_i32_0 = arith.constant 0 : i32
    return %arg0, %c0_i32 : i32, i32
  }
  func.func @transform_5(%arg0: i32) -> (i32, i32) {
    %c0_i32 = arith.constant 0 : i32
    %c0_i32_0 = arith.constant 0 : i32
    return %arg0, %c0_i32 : i32, i32
  }
}

module attributes {stable_mosaic.version = 11 : i64} {
  func.func @_bn_lrelu_apply_kernel(%arg0: i32, %arg1: memref<128x128xbf16, #tpu.memory_space<vmem>>, %arg2: memref<1x128xf32, #tpu.memory_space<vmem>>, %arg3: memref<1x128xf32, #tpu.memory_space<vmem>>, %arg4: memref<128x128xbf16, #tpu.memory_space<vmem>>) attributes {dimension_semantics = [#tpu.dimension_semantics<parallel>], iteration_bounds = array<i64: 1>, scalar_prefetch = 0 : i64, scratch_operands = 0 : i64, tpu.core_type = #tpu.core_type<tc>, window_params = [{transform_indices = @transform_0, window_bounds = array<i64: 128, 128>}, {pipeline_mode = #tpu.pipeline_mode<synchronous>, transform_indices = @transform_1, window_bounds = array<i64: 1, 128>}, {pipeline_mode = #tpu.pipeline_mode<synchronous>, transform_indices = @transform_2, window_bounds = array<i64: 1, 128>}, {transform_indices = @transform_3, window_bounds = array<i64: 128, 128>}]} {
    %c0 = arith.constant 0 : index
    %c0_0 = arith.constant 0 : index
    %0 = vector.load %arg1[%c0, %c0_0] : memref<128x128xbf16, #tpu.memory_space<vmem>>, vector<128x128xbf16>
    %1 = arith.extf %0 : vector<128x128xbf16> to vector<128x128xf32>
    %c0_1 = arith.constant 0 : index
    %c0_2 = arith.constant 0 : index
    %2 = vector.load %arg2[%c0_1, %c0_2] : memref<1x128xf32, #tpu.memory_space<vmem>>, vector<1x128xf32>
    %3 = vector.broadcast %2 : vector<1x128xf32> to vector<128x128xf32>
    %4 = arith.mulf %1, %3 : vector<128x128xf32>
    %c0_3 = arith.constant 0 : index
    %c0_4 = arith.constant 0 : index
    %5 = vector.load %arg3[%c0_3, %c0_4] : memref<1x128xf32, #tpu.memory_space<vmem>>, vector<1x128xf32>
    %6 = vector.broadcast %5 : vector<1x128xf32> to vector<128x128xf32>
    %7 = arith.addf %4, %6 : vector<128x128xf32>
    %cst = arith.constant 0.000000e+00 : f32
    %8 = vector.broadcast %cst : f32 to vector<128x128xf32>
    %9 = arith.cmpf ogt, %7, %8 : vector<128x128xf32>
    %cst_5 = arith.constant 2.000000e-01 : f32
    %10 = vector.broadcast %cst_5 : f32 to vector<128x128xf32>
    %11 = arith.mulf %10, %7 : vector<128x128xf32>
    %12 = arith.select %9, %7, %11 : vector<128x128xi1>, vector<128x128xf32>
    %13 = arith.truncf %12 : vector<128x128xf32> to vector<128x128xbf16>
    %c0_6 = arith.constant 0 : index
    %c0_7 = arith.constant 0 : index
    %14 = vector.load %arg4[%c0_6, %c0_7] : memref<128x128xbf16, #tpu.memory_space<vmem>>, vector<128x128xbf16>
    tpu.vector_store %arg4[%c0_6, %c0_7], %13 {strides = array<i32>} : memref<128x128xbf16, #tpu.memory_space<vmem>>, vector<128x128xbf16>,
    return
  }
  func.func @transform_0(%arg0: i32) -> (i32, i32) {
    %c0_i32 = arith.constant 0 : i32
    %c0_i32_0 = arith.constant 0 : i32
    return %arg0, %c0_i32 : i32, i32
  }
  func.func @transform_1(%arg0: i32) -> (i32, i32) {
    %c0_i32 = arith.constant 0 : i32
    %c0_i32_0 = arith.constant 0 : i32
    %c0_i32_1 = arith.constant 0 : i32
    return %c0_i32, %c0_i32_0 : i32, i32
  }
  func.func @transform_2(%arg0: i32) -> (i32, i32) {
    %c0_i32 = arith.constant 0 : i32
    %c0_i32_0 = arith.constant 0 : i32
    %c0_i32_1 = arith.constant 0 : i32
    return %c0_i32, %c0_i32_0 : i32, i32
  }
  func.func @transform_3(%arg0: i32) -> (i32, i32) {
    %c0_i32 = arith.constant 0 : i32
    %c0_i32_0 = arith.constant 0 : i32
    return %arg0, %c0_i32 : i32, i32
  }
}

module attributes {stable_mosaic.version = 11 : i64} {
  func.func @_conv_mm_stats_kernel(%arg0: i32, %arg1: memref<32x512xbf16, #tpu.memory_space<vmem>>, %arg2: memref<512x128xbf16, #tpu.memory_space<vmem>>, %arg3: memref<1x128xf32, #tpu.memory_space<vmem>>, %arg4: memref<32x128xbf16, #tpu.memory_space<vmem>>, %arg5: memref<1x128xf32, #tpu.memory_space<vmem>>, %arg6: memref<1x128xf32, #tpu.memory_space<vmem>>) attributes {dimension_semantics = [#tpu.dimension_semantics<parallel>], iteration_bounds = array<i64: 1>, scalar_prefetch = 0 : i64, scratch_operands = 0 : i64, tpu.core_type = #tpu.core_type<tc>, window_params = [{transform_indices = @transform_0, window_bounds = array<i64: 32, 512>}, {pipeline_mode = #tpu.pipeline_mode<synchronous>, transform_indices = @transform_1, window_bounds = array<i64: 512, 128>}, {pipeline_mode = #tpu.pipeline_mode<synchronous>, transform_indices = @transform_2, window_bounds = array<i64: 1, 128>}, {transform_indices = @transform_3, window_bounds = array<i64: 32, 128>}, {transform_indices = @transform_4, window_bounds = array<i64: 1, 128>}, {transform_indices = @transform_5, window_bounds = array<i64: 1, 128>}]} {
    %c0 = arith.constant 0 : index
    %c0_0 = arith.constant 0 : index
    %0 = vector.load %arg1[%c0, %c0_0] : memref<32x512xbf16, #tpu.memory_space<vmem>>, vector<32x512xbf16>
    %c0_1 = arith.constant 0 : index
    %c0_2 = arith.constant 0 : index
    %1 = vector.load %arg2[%c0_1, %c0_2] : memref<512x128xbf16, #tpu.memory_space<vmem>>, vector<512x128xbf16>
    %cst = arith.constant dense<0.000000e+00> : vector<32x128xf32>
    %2 = tpu.matmul %0, %1, %cst {dimension_numbers = #tpu.dot_dimension_numbers<[1], [0], [0], [1], [0, 0, 1, 1], [], []>} : vector<32x512xbf16>, vector<512x128xbf16>, vector<32x128xf32> -> vector<32x128xf32>
    %c0_3 = arith.constant 0 : index
    %c0_4 = arith.constant 0 : index
    %3 = vector.load %arg3[%c0_3, %c0_4] : memref<1x128xf32, #tpu.memory_space<vmem>>, vector<1x128xf32>
    %4 = vector.broadcast %3 : vector<1x128xf32> to vector<32x128xf32>
    %5 = arith.addf %2, %4 : vector<32x128xf32>
    %6 = arith.truncf %5 : vector<32x128xf32> to vector<32x128xbf16>
    %c0_5 = arith.constant 0 : index
    %c0_6 = arith.constant 0 : index
    %7 = vector.load %arg4[%c0_5, %c0_6] : memref<32x128xbf16, #tpu.memory_space<vmem>>, vector<32x128xbf16>
    tpu.vector_store %arg4[%c0_5, %c0_6], %6 {strides = array<i32>} : memref<32x128xbf16, #tpu.memory_space<vmem>>, vector<32x128xbf16>,
    %cst_7 = arith.constant dense<0.000000e+00> : vector<128xf32>
    %8 = vector.multi_reduction <add>, %2, %cst_7 [0] : vector<32x128xf32> to vector<128xf32>
    %9 = vector.shape_cast %8 : vector<128xf32> to vector<1x128xf32>
    %c0_8 = arith.constant 0 : index
    %c0_9 = arith.constant 0 : index
    %10 = vector.load %arg5[%c0_8, %c0_9] : memref<1x128xf32, #tpu.memory_space<vmem>>, vector<1x128xf32>
    tpu.vector_store %arg5[%c0_8, %c0_9], %9 {strides = array<i32>} : memref<1x128xf32, #tpu.memory_space<vmem>>, vector<1x128xf32>,
    %11 = arith.mulf %2, %2 : vector<32x128xf32>
    %cst_10 = arith.constant dense<0.000000e+00> : vector<128xf32>
    %12 = vector.multi_reduction <add>, %11, %cst_10 [0] : vector<32x128xf32> to vector<128xf32>
    %13 = vector.shape_cast %12 : vector<128xf32> to vector<1x128xf32>
    %c0_11 = arith.constant 0 : index
    %c0_12 = arith.constant 0 : index
    %14 = vector.load %arg6[%c0_11, %c0_12] : memref<1x128xf32, #tpu.memory_space<vmem>>, vector<1x128xf32>
    tpu.vector_store %arg6[%c0_11, %c0_12], %13 {strides = array<i32>} : memref<1x128xf32, #tpu.memory_space<vmem>>, vector<1x128xf32>,
    return
  }
  func.func @transform_0(%arg0: i32) -> (i32, i32) {
    %c0_i32 = arith.constant 0 : i32
    %c0_i32_0 = arith.constant 0 : i32
    return %arg0, %c0_i32 : i32, i32
  }
  func.func @transform_1(%arg0: i32) -> (i32, i32) {
    %c0_i32 = arith.constant 0 : i32
    %c0_i32_0 = arith.constant 0 : i32
    %c0_i32_1 = arith.constant 0 : i32
    return %c0_i32, %c0_i32_0 : i32, i32
  }
  func.func @transform_2(%arg0: i32) -> (i32, i32) {
    %c0_i32 = arith.constant 0 : i32
    %c0_i32_0 = arith.constant 0 : i32
    %c0_i32_1 = arith.constant 0 : i32
    return %c0_i32, %c0_i32_0 : i32, i32
  }
  func.func @transform_3(%arg0: i32) -> (i32, i32) {
    %c0_i32 = arith.constant 0 : i32
    %c0_i32_0 = arith.constant 0 : i32
    return %arg0, %c0_i32 : i32, i32
  }
  func.func @transform_4(%arg0: i32) -> (i32, i32) {
    %c0_i32 = arith.constant 0 : i32
    %c0_i32_0 = arith.constant 0 : i32
    return %arg0, %c0_i32 : i32, i32
  }
  func.func @transform_5(%arg0: i32) -> (i32, i32) {
    %c0_i32 = arith.constant 0 : i32
    %c0_i32_0 = arith.constant 0 : i32
    return %arg0, %c0_i32 : i32, i32
  }
}

module attributes {stable_mosaic.version = 11 : i64} {
  func.func @_bn_lrelu_apply_kernel(%arg0: i32, %arg1: memref<32x128xbf16, #tpu.memory_space<vmem>>, %arg2: memref<1x128xf32, #tpu.memory_space<vmem>>, %arg3: memref<1x128xf32, #tpu.memory_space<vmem>>, %arg4: memref<32x128xbf16, #tpu.memory_space<vmem>>) attributes {dimension_semantics = [#tpu.dimension_semantics<parallel>], iteration_bounds = array<i64: 1>, scalar_prefetch = 0 : i64, scratch_operands = 0 : i64, tpu.core_type = #tpu.core_type<tc>, window_params = [{transform_indices = @transform_0, window_bounds = array<i64: 32, 128>}, {pipeline_mode = #tpu.pipeline_mode<synchronous>, transform_indices = @transform_1, window_bounds = array<i64: 1, 128>}, {pipeline_mode = #tpu.pipeline_mode<synchronous>, transform_indices = @transform_2, window_bounds = array<i64: 1, 128>}, {transform_indices = @transform_3, window_bounds = array<i64: 32, 128>}]} {
    %c0 = arith.constant 0 : index
    %c0_0 = arith.constant 0 : index
    %0 = vector.load %arg1[%c0, %c0_0] : memref<32x128xbf16, #tpu.memory_space<vmem>>, vector<32x128xbf16>
    %1 = arith.extf %0 : vector<32x128xbf16> to vector<32x128xf32>
    %c0_1 = arith.constant 0 : index
    %c0_2 = arith.constant 0 : index
    %2 = vector.load %arg2[%c0_1, %c0_2] : memref<1x128xf32, #tpu.memory_space<vmem>>, vector<1x128xf32>
    %3 = vector.broadcast %2 : vector<1x128xf32> to vector<32x128xf32>
    %4 = arith.mulf %1, %3 : vector<32x128xf32>
    %c0_3 = arith.constant 0 : index
    %c0_4 = arith.constant 0 : index
    %5 = vector.load %arg3[%c0_3, %c0_4] : memref<1x128xf32, #tpu.memory_space<vmem>>, vector<1x128xf32>
    %6 = vector.broadcast %5 : vector<1x128xf32> to vector<32x128xf32>
    %7 = arith.addf %4, %6 : vector<32x128xf32>
    %cst = arith.constant 0.000000e+00 : f32
    %8 = vector.broadcast %cst : f32 to vector<32x128xf32>
    %9 = arith.cmpf ogt, %7, %8 : vector<32x128xf32>
    %cst_5 = arith.constant 2.000000e-01 : f32
    %10 = vector.broadcast %cst_5 : f32 to vector<32x128xf32>
    %11 = arith.mulf %10, %7 : vector<32x128xf32>
    %12 = arith.select %9, %7, %11 : vector<32x128xi1>, vector<32x128xf32>
    %13 = arith.truncf %12 : vector<32x128xf32> to vector<32x128xbf16>
    %c0_6 = arith.constant 0 : index
    %c0_7 = arith.constant 0 : index
    %14 = vector.load %arg4[%c0_6, %c0_7] : memref<32x128xbf16, #tpu.memory_space<vmem>>, vector<32x128xbf16>
    tpu.vector_store %arg4[%c0_6, %c0_7], %13 {strides = array<i32>} : memref<32x128xbf16, #tpu.memory_space<vmem>>, vector<32x128xbf16>,
    return
  }
  func.func @transform_0(%arg0: i32) -> (i32, i32) {
    %c0_i32 = arith.constant 0 : i32
    %c0_i32_0 = arith.constant 0 : i32
    return %arg0, %c0_i32 : i32, i32
  }
  func.func @transform_1(%arg0: i32) -> (i32, i32) {
    %c0_i32 = arith.constant 0 : i32
    %c0_i32_0 = arith.constant 0 : i32
    %c0_i32_1 = arith.constant 0 : i32
    return %c0_i32, %c0_i32_0 : i32, i32
  }
  func.func @transform_2(%arg0: i32) -> (i32, i32) {
    %c0_i32 = arith.constant 0 : i32
    %c0_i32_0 = arith.constant 0 : i32
    %c0_i32_1 = arith.constant 0 : i32
    return %c0_i32, %c0_i32_0 : i32, i32
  }
  func.func @transform_3(%arg0: i32) -> (i32, i32) {
    %c0_i32 = arith.constant 0 : i32
    %c0_i32_0 = arith.constant 0 : i32
    return %arg0, %c0_i32 : i32, i32
  }
}

module attributes {stable_mosaic.version = 11 : i64} {
  func.func @_conv_mm_kernel(%arg0: i32, %arg1: memref<2x1024xbf16, #tpu.memory_space<vmem>>, %arg2: memref<1024x128xbf16, #tpu.memory_space<vmem>>, %arg3: memref<1x128xf32, #tpu.memory_space<vmem>>, %arg4: memref<2x128xf32, #tpu.memory_space<vmem>>) attributes {dimension_semantics = [#tpu.dimension_semantics<parallel>], iteration_bounds = array<i64: 1>, scalar_prefetch = 0 : i64, scratch_operands = 0 : i64, tpu.core_type = #tpu.core_type<tc>, window_params = [{transform_indices = @transform_0, window_bounds = array<i64: 2, 1024>}, {pipeline_mode = #tpu.pipeline_mode<synchronous>, transform_indices = @transform_1, window_bounds = array<i64: 1024, 128>}, {pipeline_mode = #tpu.pipeline_mode<synchronous>, transform_indices = @transform_2, window_bounds = array<i64: 1, 128>}, {transform_indices = @transform_3, window_bounds = array<i64: 2, 128>}]} {
    %c0 = arith.constant 0 : index
    %c0_0 = arith.constant 0 : index
    %0 = vector.load %arg1[%c0, %c0_0] : memref<2x1024xbf16, #tpu.memory_space<vmem>>, vector<2x1024xbf16>
    %c0_1 = arith.constant 0 : index
    %c0_2 = arith.constant 0 : index
    %1 = vector.load %arg2[%c0_1, %c0_2] : memref<1024x128xbf16, #tpu.memory_space<vmem>>, vector<1024x128xbf16>
    %cst = arith.constant dense<0.000000e+00> : vector<2x128xf32>
    %2 = tpu.matmul %0, %1, %cst {dimension_numbers = #tpu.dot_dimension_numbers<[1], [0], [0], [1], [0, 0, 1, 1], [], []>} : vector<2x1024xbf16>, vector<1024x128xbf16>, vector<2x128xf32> -> vector<2x128xf32>
    %c0_3 = arith.constant 0 : index
    %c0_4 = arith.constant 0 : index
    %3 = vector.load %arg3[%c0_3, %c0_4] : memref<1x128xf32, #tpu.memory_space<vmem>>, vector<1x128xf32>
    %4 = vector.broadcast %3 : vector<1x128xf32> to vector<2x128xf32>
    %5 = arith.addf %2, %4 : vector<2x128xf32>
    %cst_5 = arith.constant 0.000000e+00 : f32
    %6 = vector.broadcast %cst_5 : f32 to vector<2x128xf32>
    %7 = arith.subf %6, %5 : vector<2x128xf32>
    %8 = math.exp %7 : vector<2x128xf32>
    %cst_6 = arith.constant 1.000000e+00 : f32
    %9 = vector.broadcast %cst_6 : f32 to vector<2x128xf32>
    %10 = arith.addf %9, %8 : vector<2x128xf32>
    %cst_7 = arith.constant 1.000000e+00 : f32
    %11 = vector.broadcast %cst_7 : f32 to vector<2x128xf32>
    %12 = arith.divf %11, %10 : vector<2x128xf32>
    %c0_8 = arith.constant 0 : index
    %c0_9 = arith.constant 0 : index
    %13 = vector.load %arg4[%c0_8, %c0_9] : memref<2x128xf32, #tpu.memory_space<vmem>>, vector<2x128xf32>
    tpu.vector_store %arg4[%c0_8, %c0_9], %12 {strides = array<i32>} : memref<2x128xf32, #tpu.memory_space<vmem>>, vector<2x128xf32>,
    return
  }
  func.func @transform_0(%arg0: i32) -> (i32, i32) {
    %c0_i32 = arith.constant 0 : i32
    %c0_i32_0 = arith.constant 0 : i32
    return %arg0, %c0_i32 : i32, i32
  }
  func.func @transform_1(%arg0: i32) -> (i32, i32) {
    %c0_i32 = arith.constant 0 : i32
    %c0_i32_0 = arith.constant 0 : i32
    %c0_i32_1 = arith.constant 0 : i32
    return %c0_i32, %c0_i32_0 : i32, i32
  }
  func.func @transform_2(%arg0: i32) -> (i32, i32) {
    %c0_i32 = arith.constant 0 : i32
    %c0_i32_0 = arith.constant 0 : i32
    %c0_i32_1 = arith.constant 0 : i32
    return %c0_i32, %c0_i32_0 : i32, i32
  }
  func.func @transform_3(%arg0: i32) -> (i32, i32) {
    %c0_i32 = arith.constant 0 : i32
    %c0_i32_0 = arith.constant 0 : i32
    return %arg0, %c0_i32 : i32, i32
  }
}

</mosaic_0001>

<llo_original>
// kernel: discriminator_forward.8
$region0: #{discriminator_forward.8}
  #allocation0 [shape = 'u32[]', space=smem, size = 0x4, offset = 0x4, fixed_abs, tag = 'smem constant byte address 0x4 - core index']
  #allocation1 [shape = 'u32[72,128]{1,0:T(1,128)}', space=vmem, size = 0x9000, scoped, tag = 'internal scratch']
  %s0 = inlined_call_operand.vmem [shape: bf16[2048,48], index: 0, kind: input, shape index: {}]
  %s1 = inlined_call_operand.vmem [shape: bf16[48,128], index: 1, kind: input, shape index: {}]
  %s2 = inlined_call_operand.vmem [shape: f32[1,128], index: 2, kind: input, shape index: {}]
  %s3 = inlined_call_operand.vmem [shape: bf16[2048,128], index: 3, kind: output, shape index: {}]
  %s4 = sld [smem:[#allocation0]]
  $region45: #{discriminator_forward.8} parent=0
    _
  %s6 = ssub.s32 1, %s4
  %s7 = scalar_select 0, %s6, %s4
  loop: start=0, step=1, limit=4
  $region2: #{discriminator_forward.8} parent=0 // loop_pre_header
    _
  $region3: #{discriminator_forward.8} parent=0 // loop_header
    %s9 = sphi 0, %s13
    %p10 = scmp.ge.s32.totalorder %s9, 4
    %s19 = sphi 0, %s21
    %s22 = sphi 0, %s19
    %s23 = sphi 0, %s22
    %s39 = sphi 0, %s23
    %s43 = sphi 0, %s43
    %s45 = sphi 0, %s43
    %s46 = sphi 0, %s45
    %s60 = sphi 0, %s46
    %s64 = sphi 0, %s64
    %s66 = sphi 0, %s64
    %s67 = sphi 0, %s66
    %s81 = sphi 0, %s67
    %s87 = sphi 0, %s89
    %s90 = sphi 0, %s87
    %s91 = sphi 0, %s90
    %s107 = sphi 0, %s91
  $region4: #{discriminator_forward.8} parent=0 // loop_header_branch
    %12 = sbr.rel (%p10) target = $region8
  $region5: #{discriminator_forward.8} parent=0 // loop_body
    %s14 = ssub.s32 %s9, 1
    %s15 = ssub.s32 %s9, 2
    %s16 = sadd.s32 %s9, 1
    %s17 = ssub.s32 %s9, %s16
    %p18 = scmp.eq.s32.totalorder %s17, 0
    %s20 = sadd.s32 %s19, 1
    %s21 = scalar_select %p18, %s19, %s20
    %p24 = pneg %p18
    %p25 = scmp.eq.s32.totalorder %s9, 1
    %p26 = por %p24, %p25
    %p27 = scmp.ne.s32.totalorder %s19, %s22
    %p28 = scmp.eq.s32.totalorder %s9, 0
    %p29 = por %p27, %p28
    %p30 = scmp.ne.s32.totalorder %s19, %s22
    %p31 = scmp.eq.s32.totalorder %s14, 1
    %p32 = por %p30, %p31
    %p33 = scmp.ne.s32.totalorder %s22, %s23
    %p34 = scmp.eq.s32.totalorder %s14, 0
    %p35 = por %p33, %p34
    %p36 = scmp.ne.s32.totalorder %s22, %s23
    %p37 = scmp.eq.s32.totalorder %s15, 1
    %p38 = por %p36, %p37
    %p40 = scmp.ne.s32.totalorder %s23, %s39
    %p41 = scmp.eq.s32.totalorder %s15, 0
    %p42 = por %p40, %p41
    %s44 = sadd.s32 %s43, 1
    %p47 = scmp.eq.s32.totalorder %s9, 1
    %p48 = scmp.ne.s32.totalorder %s43, %s45
    %p49 = scmp.eq.s32.totalorder %s9, 0
    %p50 = por %p48, %p49
    %p51 = scmp.ne.s32.totalorder %s43, %s45
    %p52 = scmp.eq.s32.totalorder %s14, 1
    %p53 = por %p51, %p52
    %p54 = scmp.ne.s32.totalorder %s45, %s46
    %p55 = scmp.eq.s32.totalorder %s14, 0
    %p56 = por %p54, %p55
    %p57 = scmp.ne.s32.totalorder %s45, %s46
    %p58 = scmp.eq.s32.totalorder %s15, 1
    %p59 = por %p57, %p58
    %p61 = scmp.ne.s32.totalorder %s46, %s60
    %p62 = scmp.eq.s32.totalorder %s15, 0
    %p63 = por %p61, %p62
    %s65 = sadd.s32 %s64, 1
    %p68 = scmp.eq.s32.totalorder %s9, 1
    %p69 = scmp.ne.s32.totalorder %s64, %s66
    %p70 = scmp.eq.s32.totalorder %s9, 0
    %p71 = por %p69, %p70
    %p72 = scmp.ne.s32.totalorder %s64, %s66
    %p73 = scmp.eq.s32.totalorder %s14, 1
    %p74 = por %p72, %p73
    %p75 = scmp.ne.s32.totalorder %s66, %s67
    %p76 = scmp.eq.s32.totalorder %s14, 0
    %p77 = por %p75, %p76
    %p78 = scmp.ne.s32.totalorder %s66, %s67
    %p79 = scmp.eq.s32.totalorder %s15, 1
    %p80 = por %p78, %p79
    %p82 = scmp.ne.s32.totalorder %s67, %s81
    %p83 = scmp.eq.s32.totalorder %s15, 0
    %p84 = por %p82, %p83
    %s85 = ssub.s32 %s9, %s16
    %p86 = scmp.eq.s32.totalorder %s85, 0
    %s88 = sadd.s32 %s87, 1
    %s89 = scalar_select %p86, %s87, %s88
    %p92 = pneg %p86
    %p93 = scmp.eq.s32.totalorder %s9, 1
    %p94 = por %p92, %p93
    %p95 = scmp.ne.s32.totalorder %s87, %s90
    %p96 = scmp.eq.s32.totalorder %s9, 0
    %p97 = por %p95, %p96
    %p98 = scmp.ne.s32.totalorder %s87, %s90
    %p99 = scmp.eq.s32.totalorder %s14, 1
    %p100 = por %p98, %p99
    %p101 = scmp.ne.s32.totalorder %s90, %s91
    %p102 = scmp.eq.s32.totalorder %s14, 0
    %p103 = por %p101, %p102
    %p104 = scmp.ne.s32.totalorder %s90, %s91
    %p105 = scmp.eq.s32.totalorder %s15, 1
    %p106 = por %p104, %p105
    %p108 = scmp.ne.s32.totalorder %s91, %s107
    %p109 = scmp.eq.s32.totalorder %s15, 0
    %p110 = por %p108, %p109
    %p111 = scmp.le.s32.totalorder 1, %s9
    %p112 = scmp.lt.s32.totalorder %s9, 3
    %p113 = pnand %p111, %p112
    %p114 = pneg %p113
    // Predicated region
    $region9: #{discriminator_forward.8} parent=5 // pred_check
      _
    $region10: #{discriminator_forward.8} parent=5 // pred_check_branch
      %116 = sbr.rel (%p113) target = $region12
    $region11: #{discriminator_forward.8} parent=5 // pred_region
      %s117 = ssub.s32 %s9, 1
      // Predicated region
      $region13: #{discriminator_forward.8} parent=11 // pred_check
        %p118 = pneg %p56
      $region14: #{discriminator_forward.8} parent=11 // pred_check_branch
        %120 = sbr.rel (%p118) target = $region16
      $region15: #{discriminator_forward.8} parent=11 // pred_region
        _
      $region16: #{discriminator_forward.8} parent=11 // pred_fallthru
        _
      // Predicated region
      $region17: #{discriminator_forward.8} parent=11 // pred_check
        %p121 = pneg %p77
      $region18: #{discriminator_forward.8} parent=11 // pred_check_branch
        %123 = sbr.rel (%p121) target = $region20
      $region19: #{discriminator_forward.8} parent=11 // pred_region
        _
      $region20: #{discriminator_forward.8} parent=11 // pred_fallthru
        _
    $region12: #{discriminator_forward.8} parent=5 // pred_fallthru
      _
    %p124 = scmp.lt.s32.totalorder %s9, 2
    // Predicated region
    $region21: #{discriminator_forward.8} parent=5 // pred_check
      %p125 = pneg %p124
    $region22: #{discriminator_forward.8} parent=5 // pred_check_branch
      %127 = sbr.rel (%p125) target = $region24
    $region23: #{discriminator_forward.8} parent=5 // pred_region
      // Predicated region
      $region25: #{discriminator_forward.8} parent=23 // pred_check
        %p128 = pneg %p29
      $region26: #{discriminator_forward.8} parent=23 // pred_check_branch
        %130 = sbr.rel (%p128) target = $region28
      $region27: #{discriminator_forward.8} parent=23 // pred_region
        %s131 = smul.u32 128, %s9
        %p132 = scmp.lt.s32.totalorder %s131, 255
        %s133 = scalar_select %p132, %s131, 255
        %s134 = smul.addr %s133, 4
        %s135 = scalar_lea.vmem %s0, %s134
        %s136 = smul.u32 128, %s9
      $region28: #{discriminator_forward.8} parent=23 // pred_fallthru
        _
    $region24: #{discriminator_forward.8} parent=5 // pred_fallthru
      _
    %p137 = scmp.le.s32.totalorder 1, %s9
    %p138 = scmp.lt.s32.totalorder %s9, 3
    %p139 = pnand %p137, %p138
    %p140 = pneg %p139
    // Predicated region
    $region29: #{discriminator_forward.8} parent=5 // pred_check
      _
    $region30: #{discriminator_forward.8} parent=5 // pred_check_branch
      %142 = sbr.rel (%p139) target = $region32
    $region31: #{discriminator_forward.8} parent=5 // pred_region
      %s143 = ssub.s32 %s9, 1
      %s144 = smul.u32 128, %s14
      %p145 = scmp.lt.s32.totalorder %s144, 255
      %s146 = scalar_select %p145, %s144, 255
      %s147 = smul.addr %s146, 4
      %s148 = scalar_lea.vmem %s0, %s147
      %p149 = pneg %p35
      %p150 = pneg %p32
      %p151 = pneg %p56
      %p152 = pneg %p53
      %p153 = pneg %p77
      %p154 = pneg %p74
      %p155 = pneg %p103
      %p156 = pneg %p100
      %s157 = smul.u32 128, %s14
      %p158 = scmp.lt.s32.totalorder %s157, 255
      %s159 = scalar_select %p158, %s157, 255
      %s160 = smul.addr %s159, 4
      %s161 = scalar_lea.vmem %s3, %s160
      %s162 = smul.u32 128, %s14
      %p163 = scmp.lt.s32.totalorder %s162, 255
      %s164 = scalar_select %p163, %s162, 255
      %s165 = smul.addr %s164, 4
      %s166 = scalar_lea.vmem %s0, %s165
      %s167 = smul.u32 128, %s14
      %s168 = smul.u32 128, %s14
      %p169 = scmp.lt.s32.totalorder %s168, 255
      %s170 = scalar_select %p169, %s168, 255
      %s171 = smul.addr %s170, 4
      %s172 = scalar_lea.vmem %s3, %s171
      %s173 = smul.u32 128, %s14
      %v175 = vld [vmem:[%s166] sm:$0xf]
      %v176 = vld [vmem:[%s166 + $0x4] sm:$0xf]
      %v177 = vld [vmem:[%s166 + $0x8] sm:$0xf]
      %v178 = vld [vmem:[%s166 + $0xc] sm:$0xf]
      %v179 = vld [vmem:[%s166 + $0x10] sm:$0xf]
      %v180 = vld [vmem:[%s166 + $0x14] sm:$0xf]
      %v181 = vld [vmem:[%s166 + $0x18] sm:$0xf]
      %v182 = vld [vmem:[%s166 + $0x1c] sm:$0xf]
      %v183 = vld [vmem:[%s166 + $0x20] sm:$0xf]
      %v184 = vld [vmem:[%s166 + $0x24] sm:$0xf]
      %v185 = vld [vmem:[%s166 + $0x28] sm:$0xf]
      %v186 = vld [vmem:[%s166 + $0x2c] sm:$0xf]
      %v187 = vld [vmem:[%s166 + $0x30] sm:$0xf]
      %v188 = vld [vmem:[%s166 + $0x34] sm:$0xf]
      %v189 = vld [vmem:[%s166 + $0x38] sm:$0xf]
      %v190 = vld [vmem:[%s166 + $0x3c] sm:$0xf]
      %v191 = vld [vmem:[%s166 + $0x40] sm:$0xf]
      %v192 = vld [vmem:[%s166 + $0x44] sm:$0xf]
      %v193 = vld [vmem:[%s166 + $0x48] sm:$0xf]
      %v194 = vld [vmem:[%s166 + $0x4c] sm:$0xf]
      %v195 = vld [vmem:[%s166 + $0x50] sm:$0xf]
      %v196 = vld [vmem:[%s166 + $0x54] sm:$0xf]
      %v197 = vld [vmem:[%s166 + $0x58] sm:$0xf]
      %v198 = vld [vmem:[%s166 + $0x5c] sm:$0xf]
      %v199 = vld [vmem:[%s166 + $0x60] sm:$0xf]
      %v200 = vld [vmem:[%s166 + $0x64] sm:$0xf]
      %v201 = vld [vmem:[%s166 + $0x68] sm:$0xf]
      %v202 = vld [vmem:[%s166 + $0x6c] sm:$0xf]
      %v203 = vld [vmem:[%s166 + $0x70] sm:$0xf]
      %v204 = vld [vmem:[%s166 + $0x74] sm:$0xf]
      %v205 = vld [vmem:[%s166 + $0x78] sm:$0xf]
      %v206 = vld [vmem:[%s166 + $0x7c] sm:$0xf]
      %v207 = vld [vmem:[%s166 + $0x80] sm:$0xf]
      %v208 = vld [vmem:[%s166 + $0x84] sm:$0xf]
      %v209 = vld [vmem:[%s166 + $0x88] sm:$0xf]
      %v210 = vld [vmem:[%s166 + $0x8c] sm:$0xf]
      %v211 = vld [vmem:[%s166 + $0x90] sm:$0xf]
      %v212 = vld [vmem:[%s166 + $0x94] sm:$0xf]
      %v213 = vld [vmem:[%s166 + $0x98] sm:$0xf]
      %v214 = vld [vmem:[%s166 + $0x9c] sm:$0xf]
      %v215 = vld [vmem:[%s166 + $0xa0] sm:$0xf]
      %v216 = vld [vmem:[%s166 + $0xa4] sm:$0xf]
      %v217 = vld [vmem:[%s166 + $0xa8] sm:$0xf]
      %v218 = vld [vmem:[%s166 + $0xac] sm:$0xf]
      %v219 = vld [vmem:[%s166 + $0xb0] sm:$0xf]
      %v220 = vld [vmem:[%s166 + $0xb4] sm:$0xf]
      %v221 = vld [vmem:[%s166 + $0xb8] sm:$0xf]
      %v222 = vld [vmem:[%s166 + $0xbc] sm:$0xf]
      %v223 = vld [vmem:[%s166 + $0xc0] sm:$0xf]
      %v224 = vld [vmem:[%s166 + $0xc4] sm:$0xf]
      %v225 = vld [vmem:[%s166 + $0xc8] sm:$0xf]
      %v226 = vld [vmem:[%s166 + $0xcc] sm:$0xf]
      %v227 = vld [vmem:[%s166 + $0xd0] sm:$0xf]
      %v228 = vld [vmem:[%s166 + $0xd4] sm:$0xf]
      %v229 = vld [vmem:[%s166 + $0xd8] sm:$0xf]
      %v230 = vld [vmem:[%s166 + $0xdc] sm:$0xf]
      %v231 = vld [vmem:[%s166 + $0xe0] sm:$0xf]
      %v232 = vld [vmem:[%s166 + $0xe4] sm:$0xf]
      %v233 = vld [vmem:[%s166 + $0xe8] sm:$0xf]
      %v234 = vld [vmem:[%s166 + $0xec] sm:$0xf]
      %v235 = vld [vmem:[%s166 + $0xf0] sm:$0xf]
      %v236 = vld [vmem:[%s166 + $0xf4] sm:$0xf]
      %v237 = vld [vmem:[%s166 + $0xf8] sm:$0xf]
      %v238 = vld [vmem:[%s166 + $0xfc] sm:$0xf]
      %v239 = vld [vmem:[%s166 + $0x100] sm:$0xf]
      %v240 = vld [vmem:[%s166 + $0x104] sm:$0xf]
      %v241 = vld [vmem:[%s166 + $0x108] sm:$0xf]
      %v242 = vld [vmem:[%s166 + $0x10c] sm:$0xf]
      %v243 = vld [vmem:[%s166 + $0x110] sm:$0xf]
      %v244 = vld [vmem:[%s166 + $0x114] sm:$0xf]
      %v245 = vld [vmem:[%s166 + $0x118] sm:$0xf]
      %v246 = vld [vmem:[%s166 + $0x11c] sm:$0xf]
      %v247 = vld [vmem:[%s166 + $0x120] sm:$0xf]
      %v248 = vld [vmem:[%s166 + $0x124] sm:$0xf]
      %v249 = vld [vmem:[%s166 + $0x128] sm:$0xf]
      %v250 = vld [vmem:[%s166 + $0x12c] sm:$0xf]
      %v251 = vld [vmem:[%s166 + $0x130] sm:$0xf]
      %v252 = vld [vmem:[%s166 + $0x134] sm:$0xf]
      %v253 = vld [vmem:[%s166 + $0x138] sm:$0xf]
      %v254 = vld [vmem:[%s166 + $0x13c] sm:$0xf]
      %v255 = vld [vmem:[%s166 + $0x140] sm:$0xf]
      %v256 = vld [vmem:[%s166 + $0x144] sm:$0xf]
      %v257 = vld [vmem:[%s166 + $0x148] sm:$0xf]
      %v258 = vld [vmem:[%s166 + $0x14c] sm:$0xf]
      %v259 = vld [vmem:[%s166 + $0x150] sm:$0xf]
      %v260 = vld [vmem:[%s166 + $0x154] sm:$0xf]
      %v261 = vld [vmem:[%s166 + $0x158] sm:$0xf]
      %v262 = vld [vmem:[%s166 + $0x15c] sm:$0xf]
      %v263 = vld [vmem:[%s166 + $0x160] sm:$0xf]
      %v264 = vld [vmem:[%s166 + $0x164] sm:$0xf]
      %v265 = vld [vmem:[%s166 + $0x168] sm:$0xf]
      %v266 = vld [vmem:[%s166 + $0x16c] sm:$0xf]
      %v267 = vld [vmem:[%s166 + $0x170] sm:$0xf]
      %v268 = vld [vmem:[%s166 + $0x174] sm:$0xf]
      %v269 = vld [vmem:[%s166 + $0x178] sm:$0xf]
      %v270 = vld [vmem:[%s166 + $0x17c] sm:$0xf]
      %v271 = vld [vmem:[%s166 + $0x180] sm:$0xf]
      %v272 = vld [vmem:[%s166 + $0x184] sm:$0xf]
      %v273 = vld [vmem:[%s166 + $0x188] sm:$0xf]
      %v274 = vld [vmem:[%s166 + $0x18c] sm:$0xf]
      %v275 = vld [vmem:[%s166 + $0x190] sm:$0xf]
      %v276 = vld [vmem:[%s166 + $0x194] sm:$0xf]
      %v277 = vld [vmem:[%s166 + $0x198] sm:$0xf]
      %v278 = vld [vmem:[%s166 + $0x19c] sm:$0xf]
      %v279 = vld [vmem:[%s166 + $0x1a0] sm:$0xf]
      %v280 = vld [vmem:[%s166 + $0x1a4] sm:$0xf]
      %v281 = vld [vmem:[%s166 + $0x1a8] sm:$0xf]
      %v282 = vld [vmem:[%s166 + $0x1ac] sm:$0xf]
      %v283 = vld [vmem:[%s166 + $0x1b0] sm:$0xf]
      %v284 = vld [vmem:[%s166 + $0x1b4] sm:$0xf]
      %v285 = vld [vmem:[%s166 + $0x1b8] sm:$0xf]
      %v286 = vld [vmem:[%s166 + $0x1bc] sm:$0xf]
      %v287 = vld [vmem:[%s166 + $0x1c0] sm:$0xf]
      %v288 = vld [vmem:[%s166 + $0x1c4] sm:$0xf]
      %v289 = vld [vmem:[%s166 + $0x1c8] sm:$0xf]
      %v290 = vld [vmem:[%s166 + $0x1cc] sm:$0xf]
      %v291 = vld [vmem:[%s166 + $0x1d0] sm:$0xf]
      %v292 = vld [vmem:[%s166 + $0x1d4] sm:$0xf]
      %v293 = vld [vmem:[%s166 + $0x1d8] sm:$0xf]
      %v294 = vld [vmem:[%s166 + $0x1dc] sm:$0xf]
      %v295 = vld [vmem:[%s166 + $0x1e0] sm:$0xf]
      %v296 = vld [vmem:[%s166 + $0x1e4] sm:$0xf]
      %v297 = vld [vmem:[%s166 + $0x1e8] sm:$0xf]
      %v298 = vld [vmem:[%s166 + $0x1ec] sm:$0xf]
      %v299 = vld [vmem:[%s166 + $0x1f0] sm:$0xf]
      %v300 = vld [vmem:[%s166 + $0x1f4] sm:$0xf]
      %v301 = vld [vmem:[%s166 + $0x1f8] sm:$0xf]
      %v302 = vld [vmem:[%s166 + $0x1fc] sm:$0xf]
      %v303 = vld [vmem:[%s1] sm:$0xf]
      %v304 = vld [vmem:[%s1 + $0x4] sm:$0xf]
      %v305 = vld [vmem:[%s1 + $0x8] sm:$0xf]
      %v306 = vld [vmem:[%s1 + $0xc] sm:$0xf]
      %v307 = vld [vmem:[%s1 + $0x10] sm:$0xf]
      %v308 = vld [vmem:[%s1 + $0x14] sm:$0xf]
      %v309 = vld [vmem:[%s2] sm:$0x1]
      %v311 = vperm.slane %v309, 0
      %v441 = vunpack.c.l.b16 %v175
      %v442 = vunpack.c.l.b16 %v176
      %v443 = vunpack.c.l.b16 %v177
      %v444 = vunpack.c.l.b16 %v178
      %v445 = vunpack.c.l.b16 %v179
      %v446 = vunpack.c.l.b16 %v180
      %v447 = vunpack.c.l.b16 %v181
      %v448 = vunpack.c.l.b16 %v182
      %v449 = vunpack.c.l.b16 %v183
      %v450 = vunpack.c.l.b16 %v184
      %v451 = vunpack.c.l.b16 %v185
      %v452 = vunpack.c.l.b16 %v186
      %v453 = vunpack.c.l.b16 %v187
      %v454 = vunpack.c.l.b16 %v188
      %v455 = vunpack.c.l.b16 %v189
      %v456 = vunpack.c.l.b16 %v190
      %v457 = vunpack.c.l.b16 %v191
      %v458 = vunpack.c.l.b16 %v192
      %v459 = vunpack.c.l.b16 %v193
      %v460 = vunpack.c.l.b16 %v194
      %v461 = vunpack.c.l.b16 %v195
      %v462 = vunpack.c.l.b16 %v196
      %v463 = vunpack.c.l.b16 %v197
      %v464 = vunpack.c.l.b16 %v198
      %v465 = vunpack.c.l.b16 %v199
      %v466 = vunpack.c.l.b16 %v200
      %v467 = vunpack.c.l.b16 %v201
      %v468 = vunpack.c.l.b16 %v202
      %v469 = vunpack.c.l.b16 %v203
      %v470 = vunpack.c.l.b16 %v204
      %v471 = vunpack.c.l.b16 %v205
      %v472 = vunpack.c.l.b16 %v206
      %v473 = vunpack.c.l.b16 %v207
      %v474 = vunpack.c.l.b16 %v208
      %v475 = vunpack.c.l.b16 %v209
      %v476 = vunpack.c.l.b16 %v210
      %v477 = vunpack.c.l.b16 %v211
      %v478 = vunpack.c.l.b16 %v212
      %v479 = vunpack.c.l.b16 %v213
      %v480 = vunpack.c.l.b16 %v214
      %v481 = vunpack.c.l.b16 %v215
      %v482 = vunpack.c.l.b16 %v216
      %v483 = vunpack.c.l.b16 %v217
      %v484 = vunpack.c.l.b16 %v218
      %v485 = vunpack.c.l.b16 %v219
      %v486 = vunpack.c.l.b16 %v220
      %v487 = vunpack.c.l.b16 %v221
      %v488 = vunpack.c.l.b16 %v222
      %v489 = vunpack.c.l.b16 %v223
      %v490 = vunpack.c.l.b16 %v224
      %v491 = vunpack.c.l.b16 %v225
      %v492 = vunpack.c.l.b16 %v226
      %v493 = vunpack.c.l.b16 %v227
      %v494 = vunpack.c.l.b16 %v228
      %v495 = vunpack.c.l.b16 %v229
      %v496 = vunpack.c.l.b16 %v230
      %v497 = vunpack.c.l.b16 %v231
      %v498 = vunpack.c.l.b16 %v232
      %v499 = vunpack.c.l.b16 %v233
      %v500 = vunpack.c.l.b16 %v234
      %v501 = vunpack.c.l.b16 %v235
      %v502 = vunpack.c.l.b16 %v236
      %v503 = vunpack.c.l.b16 %v237
      %v504 = vunpack.c.l.b16 %v238
      %v505 = vunpack.c.l.b16 %v239
      %v506 = vunpack.c.l.b16 %v240
      %v507 = vunpack.c.l.b16 %v241
      %v508 = vunpack.c.l.b16 %v242
      %v509 = vunpack.c.l.b16 %v243
      %v510 = vunpack.c.l.b16 %v244
      %v511 = vunpack.c.l.b16 %v245
      %v512 = vunpack.c.l.b16 %v246
      %v513 = vunpack.c.l.b16 %v247
      %v514 = vunpack.c.l.b16 %v248
      %v515 = vunpack.c.l.b16 %v249
      %v516 = vunpack.c.l.b16 %v250
      %v517 = vunpack.c.l.b16 %v251
      %v518 = vunpack.c.l.b16 %v252
      %v519 = vunpack.c.l.b16 %v253
      %v520 = vunpack.c.l.b16 %v254
      %v521 = vunpack.c.l.b16 %v255
      %v522 = vunpack.c.l.b16 %v256
      %v523 = vunpack.c.l.b16 %v257
      %v524 = vunpack.c.l.b16 %v258
      %v525 = vunpack.c.l.b16 %v259
      %v526 = vunpack.c.l.b16 %v260
      %v527 = vunpack.c.l.b16 %v261
      %v528 = vunpack.c.l.b16 %v262
      %v529 = vunpack.c.l.b16 %v263
      %v530 = vunpack.c.l.b16 %v264
      %v531 = vunpack.c.l.b16 %v265
      %v532 = vunpack.c.l.b16 %v266
      %v533 = vunpack.c.l.b16 %v267
      %v534 = vunpack.c.l.b16 %v268
      %v535 = vunpack.c.l.b16 %v269
      %v536 = vunpack.c.l.b16 %v270
      %v537 = vunpack.c.l.b16 %v271
      %v538 = vunpack.c.l.b16 %v272
      %v539 = vunpack.c.l.b16 %v273
      %v540 = vunpack.c.l.b16 %v274
      %v541 = vunpack.c.l.b16 %v275
      %v542 = vunpack.c.l.b16 %v276
      %v543 = vunpack.c.l.b16 %v277
      %v544 = vunpack.c.l.b16 %v278
      %v545 = vunpack.c.l.b16 %v279
      %v546 = vunpack.c.l.b16 %v280
      %v547 = vunpack.c.l.b16 %v281
      %v548 = vunpack.c.l.b16 %v282
      %v549 = vunpack.c.l.b16 %v283
      %v550 = vunpack.c.l.b16 %v284
      %v551 = vunpack.c.l.b16 %v285
      %v552 = vunpack.c.l.b16 %v286
      %v553 = vunpack.c.l.b16 %v287
      %v554 = vunpack.c.l.b16 %v288
      %v555 = vunpack.c.l.b16 %v289
      %v556 = vunpack.c.l.b16 %v290
      %v557 = vunpack.c.l.b16 %v291
      %v558 = vunpack.c.l.b16 %v292
      %v559 = vunpack.c.l.b16 %v293
      %v560 = vunpack.c.l.b16 %v294
      %v561 = vunpack.c.l.b16 %v295
      %v562 = vunpack.c.l.b16 %v296
      %v563 = vunpack.c.l.b16 %v297
      %v564 = vunpack.c.l.b16 %v298
      %v565 = vunpack.c.l.b16 %v299
      %v566 = vunpack.c.l.b16 %v300
      %v567 = vunpack.c.l.b16 %v301
      %v568 = vunpack.c.l.b16 %v302
      %v569 = vpack.c.b16 %v442, %v441
      %v570 = vpack.c.b16 %v444, %v443
      %v571 = vpack.c.b16 %v446, %v445
      %v572 = vpack.c.b16 %v448, %v447
      %v573 = vpack.c.b16 %v450, %v449
      %v574 = vpack.c.b16 %v452, %v451
      %v575 = vpack.c.b16 %v454, %v453
      %v576 = vpack.c.b16 %v456, %v455
      %v577 = vpack.c.b16 %v458, %v457
      %v578 = vpack.c.b16 %v460, %v459
      %v579 = vpack.c.b16 %v462, %v461
      %v580 = vpack.c.b16 %v464, %v463
      %v581 = vpack.c.b16 %v466, %v465
      %v582 = vpack.c.b16 %v468, %v467
      %v583 = vpack.c.b16 %v470, %v469
      %v584 = vpack.c.b16 %v472, %v471
      %v585 = vpack.c.b16 %v474, %v473
      %v586 = vpack.c.b16 %v476, %v475
      %v587 = vpack.c.b16 %v478, %v477
      %v588 = vpack.c.b16 %v480, %v479
      %v589 = vpack.c.b16 %v482, %v481
      %v590 = vpack.c.b16 %v484, %v483
      %v591 = vpack.c.b16 %v486, %v485
      %v592 = vpack.c.b16 %v488, %v487
      %v593 = vpack.c.b16 %v490, %v489
      %v594 = vpack.c.b16 %v492, %v491
      %v595 = vpack.c.b16 %v494, %v493
      %v596 = vpack.c.b16 %v496, %v495
      %v597 = vpack.c.b16 %v498, %v497
      %v598 = vpack.c.b16 %v500, %v499
      %v599 = vpack.c.b16 %v502, %v501
      %v600 = vpack.c.b16 %v504, %v503
      %v601 = vpack.c.b16 %v506, %v505
      %v602 = vpack.c.b16 %v508, %v507
      %v603 = vpack.c.b16 %v510, %v509
      %v604 = vpack.c.b16 %v512, %v511
      %v605 = vpack.c.b16 %v514, %v513
      %v606 = vpack.c.b16 %v516, %v515
      %v607 = vpack.c.b16 %v518, %v517
      %v608 = vpack.c.b16 %v520, %v519
      %v609 = vpack.c.b16 %v522, %v521
      %v610 = vpack.c.b16 %v524, %v523
      %v611 = vpack.c.b16 %v526, %v525
      %v612 = vpack.c.b16 %v528, %v527
      %v613 = vpack.c.b16 %v530, %v529
      %v614 = vpack.c.b16 %v532, %v531
      %v615 = vpack.c.b16 %v534, %v533
      %v616 = vpack.c.b16 %v536, %v535
      %v617 = vpack.c.b16 %v538, %v537
      %v618 = vpack.c.b16 %v540, %v539
      %v619 = vpack.c.b16 %v542, %v541
      %v620 = vpack.c.b16 %v544, %v543
      %v621 = vpack.c.b16 %v546, %v545
      %v622 = vpack.c.b16 %v548, %v547
      %v623 = vpack.c.b16 %v550, %v549
      %v624 = vpack.c.b16 %v552, %v551
      %v625 = vpack.c.b16 %v554, %v553
      %v626 = vpack.c.b16 %v556, %v555
      %v627 = vpack.c.b16 %v558, %v557
      %v628 = vpack.c.b16 %v560, %v559
      %v629 = vpack.c.b16 %v562, %v561
      %v630 = vpack.c.b16 %v564, %v563
      %v631 = vpack.c.b16 %v566, %v565
      %v632 = vpack.c.b16 %v568, %v567
      %v639 = vunpack.c.l.b16 %v303
      %v640 = vunpack.c.l.b16 %v304
      %v641 = vunpack.c.l.b16 %v305
      %v642 = vunpack.c.l.b16 %v306
      %v643 = vunpack.c.l.b16 %v307
      %v644 = vunpack.c.l.b16 %v308
      %v645 = vpack.c.b16 %v640, %v639
      %v646 = vpack.c.b16 %v642, %v641
      %v647 = vpack.c.b16 %v644, %v643
      %vm651 = vcmask 392192
      %v653 = vsel %vm651, %v569, 0
      %v656 = vsel %vm651, %v570, 0
      %v659 = vsel %vm651, %v571, 0
      %v662 = vsel %vm651, %v572, 0
      %v665 = vsel %vm651, %v573, 0
      %v668 = vsel %vm651, %v574, 0
      %v671 = vsel %vm651, %v575, 0
      %v674 = vsel %vm651, %v576, 0
      %v677 = vsel %vm651, %v577, 0
      %v680 = vsel %vm651, %v578, 0
      %v683 = vsel %vm651, %v579, 0
      %v686 = vsel %vm651, %v580, 0
      %v689 = vsel %vm651, %v581, 0
      %v692 = vsel %vm651, %v582, 0
      %v695 = vsel %vm651, %v583, 0
      %v698 = vsel %vm651, %v584, 0
      %v701 = vsel %vm651, %v585, 0
      %v704 = vsel %vm651, %v586, 0
      %v707 = vsel %vm651, %v587, 0
      %v710 = vsel %vm651, %v588, 0
      %v713 = vsel %vm651, %v589, 0
      %v716 = vsel %vm651, %v590, 0
      %v719 = vsel %vm651, %v591, 0
      %v722 = vsel %vm651, %v592, 0
      %v725 = vsel %vm651, %v593, 0
      %v728 = vsel %vm651, %v594, 0
      %v731 = vsel %vm651, %v595, 0
      %v734 = vsel %vm651, %v596, 0
      %v737 = vsel %vm651, %v597, 0
      %v740 = vsel %vm651, %v598, 0
      %v743 = vsel %vm651, %v599, 0
      %v746 = vsel %vm651, %v600, 0
      %v749 = vsel %vm651, %v601, 0
      %v752 = vsel %vm651, %v602, 0
      %v755 = vsel %vm651, %v603, 0
      %v758 = vsel %vm651, %v604, 0
      %v761 = vsel %vm651, %v605, 0
      %v764 = vsel %vm651, %v606, 0
      %v767 = vsel %vm651, %v607, 0
      %v770 = vsel %vm651, %v608, 0
      %v773 = vsel %vm651, %v609, 0
      %v776 = vsel %vm651, %v610, 0
      %v779 = vsel %vm651, %v611, 0
      %v782 = vsel %vm651, %v612, 0
      %v785 = vsel %vm651, %v613, 0
      %v788 = vsel %vm651, %v614, 0
      %v791 = vsel %vm651, %v615, 0
      %v794 = vsel %vm651, %v616, 0
      %v797 = vsel %vm651, %v617, 0
      %v800 = vsel %vm651, %v618, 0
      %v803 = vsel %vm651, %v619, 0
      %v806 = vsel %vm651, %v620, 0
      %v809 = vsel %vm651, %v621, 0
      %v812 = vsel %vm651, %v622, 0
      %v815 = vsel %vm651, %v623, 0
      %v818 = vsel %vm651, %v624, 0
      %v821 = vsel %vm651, %v625, 0
      %v824 = vsel %vm651, %v626, 0
      %v827 = vsel %vm651, %v627, 0
      %v830 = vsel %vm651, %v628, 0
      %v833 = vsel %vm651, %v629, 0
      %v836 = vsel %vm651, %v630, 0
      %v839 = vsel %vm651, %v631, 0
      %v842 = vsel %vm651, %v632, 0
      %844 = vmatpush.bf16.msra.mxu0 0
      %845 = vmatpush.bf16.msra.mxu0 0
      %846 = vmatpush.bf16.msra.mxu0 0
      %847 = vmatpush.bf16.msra.mxu0 0
      %848 = vmatpush.bf16.msra.mxu0 0
      %849 = vmatpush.bf16.msra.mxu0 %v647
      %850 = vmatpush.bf16.msra.mxu0 %v646
      %851 = vmatpush.bf16.msra.mxu0 %v645
      %852 = vmatmul.bf16.gmra.mxu0 %v653
      %v853 = vpop.f32.mrf.mxu0
      %v854 = vadd.f32 %v311, %v853
      %v855 = vpop.f32.mrf.mxu0
      %v856 = vadd.f32 %v311, %v855
      %857 = vmatmul.bf16.gmra.mxu0 %v656
      %v858 = vpop.f32.mrf.mxu0
      %v859 = vadd.f32 %v311, %v858
      %v860 = vpop.f32.mrf.mxu0
      %v861 = vadd.f32 %v311, %v860
      %862 = vmatmul.bf16.gmra.mxu0 %v659
      %v863 = vpop.f32.mrf.mxu0
      %v864 = vadd.f32 %v311, %v863
      %v865 = vpop.f32.mrf.mxu0
      %v866 = vadd.f32 %v311, %v865
      %867 = vmatmul.bf16.gmra.mxu0 %v662
      %v868 = vpop.f32.mrf.mxu0
      %v869 = vadd.f32 %v311, %v868
      %v870 = vpop.f32.mrf.mxu0
      %v871 = vadd.f32 %v311, %v870
      %872 = vmatmul.bf16.gmra.mxu0 %v665
      %v873 = vpop.f32.mrf.mxu0
      %v874 = vadd.f32 %v311, %v873
      %v875 = vpop.f32.mrf.mxu0
      %v876 = vadd.f32 %v311, %v875
      %877 = vmatmul.bf16.gmra.mxu0 %v668
      %v878 = vpop.f32.mrf.mxu0
      %v879 = vadd.f32 %v311, %v878
      %v880 = vpop.f32.mrf.mxu0
      %v881 = vadd.f32 %v311, %v880
      %882 = vmatmul.bf16.gmra.mxu0 %v671
      %v883 = vpop.f32.mrf.mxu0
      %v884 = vadd.f32 %v311, %v883
      %v885 = vpop.f32.mrf.mxu0
      %v886 = vadd.f32 %v311, %v885
      %887 = vmatmul.bf16.gmra.mxu0 %v674
      %v888 = vpop.f32.mrf.mxu0
      %v889 = vadd.f32 %v311, %v888
      %v890 = vpop.f32.mrf.mxu0
      %v891 = vadd.f32 %v311, %v890
      %892 = vmatmul.bf16.gmra.mxu0 %v677
      %v893 = vpop.f32.mrf.mxu0
      %v894 = vadd.f32 %v311, %v893
      %v895 = vpop.f32.mrf.mxu0
      %v896 = vadd.f32 %v311, %v895
      %897 = vmatmul.bf16.gmra.mxu0 %v680
      %v898 = vpop.f32.mrf.mxu0
      %v899 = vadd.f32 %v311, %v898
      %v900 = vpop.f32.mrf.mxu0
      %v901 = vadd.f32 %v311, %v900
      %902 = vmatmul.bf16.gmra.mxu0 %v683
      %v903 = vpop.f32.mrf.mxu0
      %v904 = vadd.f32 %v311, %v903
      %v905 = vpop.f32.mrf.mxu0
      %v906 = vadd.f32 %v311, %v905
      %907 = vmatmul.bf16.gmra.mxu0 %v686
      %v908 = vpop.f32.mrf.mxu0
      %v909 = vadd.f32 %v311, %v908
      %v910 = vpop.f32.mrf.mxu0
      %v911 = vadd.f32 %v311, %v910
      %912 = vmatmul.bf16.gmra.mxu0 %v689
      %v913 = vpop.f32.mrf.mxu0
      %v914 = vadd.f32 %v311, %v913
      %v915 = vpop.f32.mrf.mxu0
      %v916 = vadd.f32 %v311, %v915
      %917 = vmatmul.bf16.gmra.mxu0 %v692
      %v918 = vpop.f32.mrf.mxu0
      %v919 = vadd.f32 %v311, %v918
      %v920 = vpop.f32.mrf.mxu0
      %v921 = vadd.f32 %v311, %v920
      %922 = vmatmul.bf16.gmra.mxu0 %v695
      %v923 = vpop.f32.mrf.mxu0
      %v924 = vadd.f32 %v311, %v923
      %v925 = vpop.f32.mrf.mxu0
      %v926 = vadd.f32 %v311, %v925
      %927 = vmatmul.bf16.gmra.mxu0 %v698
      %v928 = vpop.f32.mrf.mxu0
      %v929 = vadd.f32 %v311, %v928
      %v930 = vpop.f32.mrf.mxu0
      %v931 = vadd.f32 %v311, %v930
      %932 = vmatmul.bf16.gmra.mxu0 %v701
      %v933 = vpop.f32.mrf.mxu0
      %v934 = vadd.f32 %v311, %v933
      %v935 = vpop.f32.mrf.mxu0
      %v936 = vadd.f32 %v311, %v935
      %937 = vmatmul.bf16.gmra.mxu0 %v704
      %v938 = vpop.f32.mrf.mxu0
      %v939 = vadd.f32 %v311, %v938
      %v940 = vpop.f32.mrf.mxu0
      %v941 = vadd.f32 %v311, %v940
      %942 = vmatmul.bf16.gmra.mxu0 %v707
      %v943 = vpop.f32.mrf.mxu0
      %v944 = vadd.f32 %v311, %v943
      %v945 = vpop.f32.mrf.mxu0
      %v946 = vadd.f32 %v311, %v945
      %947 = vmatmul.bf16.gmra.mxu0 %v710
      %v948 = vpop.f32.mrf.mxu0
      %v949 = vadd.f32 %v311, %v948
      %v950 = vpop.f32.mrf.mxu0
      %v951 = vadd.f32 %v311, %v950
      %952 = vmatmul.bf16.gmra.mxu0 %v713
      %v953 = vpop.f32.mrf.mxu0
      %v954 = vadd.f32 %v311, %v953
      %v955 = vpop.f32.mrf.mxu0
      %v956 = vadd.f32 %v311, %v955
      %957 = vmatmul.bf16.gmra.mxu0 %v716
      %v958 = vpop.f32.mrf.mxu0
      %v959 = vadd.f32 %v311, %v958
      %v960 = vpop.f32.mrf.mxu0
      %v961 = vadd.f32 %v311, %v960
      %962 = vmatmul.bf16.gmra.mxu0 %v719
      %v963 = vpop.f32.mrf.mxu0
      %v964 = vadd.f32 %v311, %v963
      %v965 = vpop.f32.mrf.mxu0
      %v966 = vadd.f32 %v311, %v965
      %967 = vmatmul.bf16.gmra.mxu0 %v722
      %v968 = vpop.f32.mrf.mxu0
      %v969 = vadd.f32 %v311, %v968
      %v970 = vpop.f32.mrf.mxu0
      %v971 = vadd.f32 %v311, %v970
      %972 = vmatmul.bf16.gmra.mxu0 %v725
      %v973 = vpop.f32.mrf.mxu0
      %v974 = vadd.f32 %v311, %v973
      %v975 = vpop.f32.mrf.mxu0
      %v976 = vadd.f32 %v311, %v975
      %977 = vmatmul.bf16.gmra.mxu0 %v728
      %v978 = vpop.f32.mrf.mxu0
      %v979 = vadd.f32 %v311, %v978
      %v980 = vpop.f32.mrf.mxu0
      %v981 = vadd.f32 %v311, %v980
      %982 = vmatmul.bf16.gmra.mxu0 %v731
      %v983 = vpop.f32.mrf.mxu0
      %v984 = vadd.f32 %v311, %v983
      %v985 = vpop.f32.mrf.mxu0
      %v986 = vadd.f32 %v311, %v985
      %987 = vmatmul.bf16.gmra.mxu0 %v734
      %v988 = vpop.f32.mrf.mxu0
      %v989 = vadd.f32 %v311, %v988
      %v990 = vpop.f32.mrf.mxu0
      %v991 = vadd.f32 %v311, %v990
      %992 = vmatmul.bf16.gmra.mxu0 %v737
      %v993 = vpop.f32.mrf.mxu0
      %v994 = vadd.f32 %v311, %v993
      %v995 = vpop.f32.mrf.mxu0
      %v996 = vadd.f32 %v311, %v995
      %997 = vmatmul.bf16.gmra.mxu0 %v740
      %v998 = vpop.f32.mrf.mxu0
      %v999 = vadd.f32 %v311, %v998
      %v1000 = vpop.f32.mrf.mxu0
      %v1001 = vadd.f32 %v311, %v1000
      %1002 = vmatmul.bf16.gmra.mxu0 %v743
      %v1003 = vpop.f32.mrf.mxu0
      %v1004 = vadd.f32 %v311, %v1003
      %v1005 = vpop.f32.mrf.mxu0
      %v1006 = vadd.f32 %v311, %v1005
      %1007 = vmatmul.bf16.gmra.mxu0 %v746
      %v1008 = vpop.f32.mrf.mxu0
      %v1009 = vadd.f32 %v311, %v1008
      %v1010 = vpop.f32.mrf.mxu0
      %v1011 = vadd.f32 %v311, %v1010
      %1012 = vmatmul.bf16.gmra.mxu0 %v749
      %v1013 = vpop.f32.mrf.mxu0
      %v1014 = vadd.f32 %v311, %v1013
      %v1015 = vpop.f32.mrf.mxu0
      %v1016 = vadd.f32 %v311, %v1015
      %1017 = vmatmul.bf16.gmra.mxu0 %v752
      %v1018 = vpop.f32.mrf.mxu0
      %v1019 = vadd.f32 %v311, %v1018
      %v1020 = vpop.f32.mrf.mxu0
      %v1021 = vadd.f32 %v311, %v1020
      %1022 = vmatmul.bf16.gmra.mxu0 %v755
      %v1023 = vpop.f32.mrf.mxu0
      %v1024 = vadd.f32 %v311, %v1023
      %v1025 = vpop.f32.mrf.mxu0
      %v1026 = vadd.f32 %v311, %v1025
      %1027 = vmatmul.bf16.gmra.mxu0 %v758
      %v1028 = vpop.f32.mrf.mxu0
      %v1029 = vadd.f32 %v311, %v1028
      %v1030 = vpop.f32.mrf.mxu0
      %v1031 = vadd.f32 %v311, %v1030
      %1032 = vmatmul.bf16.gmra.mxu0 %v761
      %v1033 = vpop.f32.mrf.mxu0
      %v1034 = vadd.f32 %v311, %v1033
      %v1035 = vpop.f32.mrf.mxu0
      %v1036 = vadd.f32 %v311, %v1035
      %1037 = vmatmul.bf16.gmra.mxu0 %v764
      %v1038 = vpop.f32.mrf.mxu0
      %v1039 = vadd.f32 %v311, %v1038
      %v1040 = vpop.f32.mrf.mxu0
      %v1041 = vadd.f32 %v311, %v1040
      %1042 = vmatmul.bf16.gmra.mxu0 %v767
      %v1043 = vpop.f32.mrf.mxu0
      %v1044 = vadd.f32 %v311, %v1043
      %v1045 = vpop.f32.mrf.mxu0
      %v1046 = vadd.f32 %v311, %v1045
      %1047 = vmatmul.bf16.gmra.mxu0 %v770
      %v1048 = vpop.f32.mrf.mxu0
      %v1049 = vadd.f32 %v311, %v1048
      %v1050 = vpop.f32.mrf.mxu0
      %v1051 = vadd.f32 %v311, %v1050
      %1052 = vmatmul.bf16.gmra.mxu0 %v773
      %v1053 = vpop.f32.mrf.mxu0
      %v1054 = vadd.f32 %v311, %v1053
      %v1055 = vpop.f32.mrf.mxu0
      %v1056 = vadd.f32 %v311, %v1055
      %1057 = vmatmul.bf16.gmra.mxu0 %v776
      %v1058 = vpop.f32.mrf.mxu0
      %v1059 = vadd.f32 %v311, %v1058
      %v1060 = vpop.f32.mrf.mxu0
      %v1061 = vadd.f32 %v311, %v1060
      %1062 = vmatmul.bf16.gmra.mxu0 %v779
      %v1063 = vpop.f32.mrf.mxu0
      %v1064 = vadd.f32 %v311, %v1063
      %v1065 = vpop.f32.mrf.mxu0
      %v1066 = vadd.f32 %v311, %v1065
      %1067 = vmatmul.bf16.gmra.mxu0 %v782
      %v1068 = vpop.f32.mrf.mxu0
      %v1069 = vadd.f32 %v311, %v1068
      %v1070 = vpop.f32.mrf.mxu0
      %v1071 = vadd.f32 %v311, %v1070
      %1072 = vmatmul.bf16.gmra.mxu0 %v785
      %v1073 = vpop.f32.mrf.mxu0
      %v1074 = vadd.f32 %v311, %v1073
      %v1075 = vpop.f32.mrf.mxu0
      %v1076 = vadd.f32 %v311, %v1075
      %1077 = vmatmul.bf16.gmra.mxu0 %v788
      %v1078 = vpop.f32.mrf.mxu0
      %v1079 = vadd.f32 %v311, %v1078
      %v1080 = vpop.f32.mrf.mxu0
      %v1081 = vadd.f32 %v311, %v1080
      %1082 = vmatmul.bf16.gmra.mxu0 %v791
      %v1083 = vpop.f32.mrf.mxu0
      %v1084 = vadd.f32 %v311, %v1083
      %v1085 = vpop.f32.mrf.mxu0
      %v1086 = vadd.f32 %v311, %v1085
      %1087 = vmatmul.bf16.gmra.mxu0 %v794
      %v1088 = vpop.f32.mrf.mxu0
      %v1089 = vadd.f32 %v311, %v1088
      %v1090 = vpop.f32.mrf.mxu0
      %v1091 = vadd.f32 %v311, %v1090
      %1092 = vmatmul.bf16.gmra.mxu0 %v797
      %v1093 = vpop.f32.mrf.mxu0
      %v1094 = vadd.f32 %v311, %v1093
      %v1095 = vpop.f32.mrf.mxu0
      %v1096 = vadd.f32 %v311, %v1095
      %1097 = vmatmul.bf16.gmra.mxu0 %v800
      %v1098 = vpop.f32.mrf.mxu0
      %v1099 = vadd.f32 %v311, %v1098
      %v1100 = vpop.f32.mrf.mxu0
      %v1101 = vadd.f32 %v311, %v1100
      %1102 = vmatmul.bf16.gmra.mxu0 %v803
      %v1103 = vpop.f32.mrf.mxu0
      %v1104 = vadd.f32 %v311, %v1103
      %v1105 = vpop.f32.mrf.mxu0
      %v1106 = vadd.f32 %v311, %v1105
      %1107 = vmatmul.bf16.gmra.mxu0 %v806
      %v1108 = vpop.f32.mrf.mxu0
      %v1109 = vadd.f32 %v311, %v1108
      %v1110 = vpop.f32.mrf.mxu0
      %v1111 = vadd.f32 %v311, %v1110
      %1112 = vmatmul.bf16.gmra.mxu0 %v809
      %v1113 = vpop.f32.mrf.mxu0
      %v1114 = vadd.f32 %v311, %v1113
      %v1115 = vpop.f32.mrf.mxu0
      %v1116 = vadd.f32 %v311, %v1115
      %1117 = vmatmul.bf16.gmra.mxu0 %v812
      %v1118 = vpop.f32.mrf.mxu0
      %v1119 = vadd.f32 %v311, %v1118
      %v1120 = vpop.f32.mrf.mxu0
      %v1121 = vadd.f32 %v311, %v1120
      %1122 = vmatmul.bf16.gmra.mxu0 %v815
      %v1123 = vpop.f32.mrf.mxu0
      %v1124 = vadd.f32 %v311, %v1123
      %v1125 = vpop.f32.mrf.mxu0
      %v1126 = vadd.f32 %v311, %v1125
      %1127 = vmatmul.bf16.gmra.mxu0 %v818
      %v1128 = vpop.f32.mrf.mxu0
      %v1129 = vadd.f32 %v311, %v1128
      %v1130 = vpop.f32.mrf.mxu0
      %v1131 = vadd.f32 %v311, %v1130
      %1132 = vmatmul.bf16.gmra.mxu0 %v821
      %v1133 = vpop.f32.mrf.mxu0
      %v1134 = vadd.f32 %v311, %v1133
      %v1135 = vpop.f32.mrf.mxu0
      %v1136 = vadd.f32 %v311, %v1135
      %1137 = vmatmul.bf16.gmra.mxu0 %v824
      %v1138 = vpop.f32.mrf.mxu0
      %v1139 = vadd.f32 %v311, %v1138
      %v1140 = vpop.f32.mrf.mxu0
      %v1141 = vadd.f32 %v311, %v1140
      %1142 = vmatmul.bf16.gmra.mxu0 %v827
      %v1143 = vpop.f32.mrf.mxu0
      %v1144 = vadd.f32 %v311, %v1143
      %v1145 = vpop.f32.mrf.mxu0
      %v1146 = vadd.f32 %v311, %v1145
      %1147 = vmatmul.bf16.gmra.mxu0 %v830
      %v1148 = vpop.f32.mrf.mxu0
      %v1149 = vadd.f32 %v311, %v1148
      %v1150 = vpop.f32.mrf.mxu0
      %v1151 = vadd.f32 %v311, %v1150
      %1152 = vmatmul.bf16.gmra.mxu0 %v833
      %v1153 = vpop.f32.mrf.mxu0
      %v1154 = vadd.f32 %v311, %v1153
      %v1155 = vpop.f32.mrf.mxu0
      %v1156 = vadd.f32 %v311, %v1155
      %1157 = vmatmul.bf16.gmra.mxu0 %v836
      %v1158 = vpop.f32.mrf.mxu0
      %v1159 = vadd.f32 %v311, %v1158
      %v1160 = vpop.f32.mrf.mxu0
      %v1161 = vadd.f32 %v311, %v1160
      %1162 = vmatmul.bf16.gmra.mxu0 %v839
      %v1163 = vpop.f32.mrf.mxu0
      %v1164 = vadd.f32 %v311, %v1163
      %v1165 = vpop.f32.mrf.mxu0
      %v1166 = vadd.f32 %v311, %v1165
      %1167 = vmatmul.bf16.gmra.mxu0 %v842
      %v1168 = vpop.f32.mrf.mxu0
      %v1169 = vadd.f32 %v311, %v1168
      %v1170 = vpop.f32.mrf.mxu0
      %v1171 = vadd.f32 %v311, %v1170
      %1172 = vdwg.mxu0
      %vm1173 = vcmp.gt.f32.partialorder %v854, 0.0
      %vm1174 = vcmp.gt.f32.partialorder %v856, 0.0
      %vm1175 = vcmp.gt.f32.partialorder %v859, 0.0
      %vm1176 = vcmp.gt.f32.partialorder %v861, 0.0
      %vm1177 = vcmp.gt.f32.partialorder %v864, 0.0
      %vm1178 = vcmp.gt.f32.partialorder %v866, 0.0
      %vm1179 = vcmp.gt.f32.partialorder %v869, 0.0
      %vm1180 = vcmp.gt.f32.partialorder %v871, 0.0
      %vm1181 = vcmp.gt.f32.partialorder %v874, 0.0
      %vm1182 = vcmp.gt.f32.partialorder %v876, 0.0
      %vm1183 = vcmp.gt.f32.partialorder %v879, 0.0
      %vm1184 = vcmp.gt.f32.partialorder %v881, 0.0
      %vm1185 = vcmp.gt.f32.partialorder %v884, 0.0
      %vm1186 = vcmp.gt.f32.partialorder %v886, 0.0
      %vm1187 = vcmp.gt.f32.partialorder %v889, 0.0
      %vm1188 = vcmp.gt.f32.partialorder %v891, 0.0
      %vm1189 = vcmp.gt.f32.partialorder %v894, 0.0
      %vm1190 = vcmp.gt.f32.partialorder %v896, 0.0
      %vm1191 = vcmp.gt.f32.partialorder %v899, 0.0
      %vm1192 = vcmp.gt.f32.partialorder %v901, 0.0
      %vm1193 = vcmp.gt.f32.partialorder %v904, 0.0
      %vm1194 = vcmp.gt.f32.partialorder %v906, 0.0
      %vm1195 = vcmp.gt.f32.partialorder %v909, 0.0
      %vm1196 = vcmp.gt.f32.partialorder %v911, 0.0
      %vm1197 = vcmp.gt.f32.partialorder %v914, 0.0
      %vm1198 = vcmp.gt.f32.partialorder %v916, 0.0
      %vm1199 = vcmp.gt.f32.partialorder %v919, 0.0
      %vm1200 = vcmp.gt.f32.partialorder %v921, 0.0
      %vm1201 = vcmp.gt.f32.partialorder %v924, 0.0
      %vm1202 = vcmp.gt.f32.partialorder %v926, 0.0
      %vm1203 = vcmp.gt.f32.partialorder %v929, 0.0
      %vm1204 = vcmp.gt.f32.partialorder %v931, 0.0
      %vm1205 = vcmp.gt.f32.partialorder %v934, 0.0
      %vm1206 = vcmp.gt.f32.partialorder %v936, 0.0
      %vm1207 = vcmp.gt.f32.partialorder %v939, 0.0
      %vm1208 = vcmp.gt.f32.partialorder %v941, 0.0
      %vm1209 = vcmp.gt.f32.partialorder %v944, 0.0
      %vm1210 = vcmp.gt.f32.partialorder %v946, 0.0
      %vm1211 = vcmp.gt.f32.partialorder %v949, 0.0
      %vm1212 = vcmp.gt.f32.partialorder %v951, 0.0
      %vm1213 = vcmp.gt.f32.partialorder %v954, 0.0
      %vm1214 = vcmp.gt.f32.partialorder %v956, 0.0
      %vm1215 = vcmp.gt.f32.partialorder %v959, 0.0
      %vm1216 = vcmp.gt.f32.partialorder %v961, 0.0
      %vm1217 = vcmp.gt.f32.partialorder %v964, 0.0
      %vm1218 = vcmp.gt.f32.partialorder %v966, 0.0
      %vm1219 = vcmp.gt.f32.partialorder %v969, 0.0
      %vm1220 = vcmp.gt.f32.partialorder %v971, 0.0
      %vm1221 = vcmp.gt.f32.partialorder %v974, 0.0
      %vm1222 = vcmp.gt.f32.partialorder %v976, 0.0
      %vm1223 = vcmp.gt.f32.partialorder %v979, 0.0
      %vm1224 = vcmp.gt.f32.partialorder %v981, 0.0
      %vm1225 = vcmp.gt.f32.partialorder %v984, 0.0
      %vm1226 = vcmp.gt.f32.partialorder %v986, 0.0
      %vm1227 = vcmp.gt.f32.partialorder %v989, 0.0
      %vm1228 = vcmp.gt.f32.partialorder %v991, 0.0
      %vm1229 = vcmp.gt.f32.partialorder %v994, 0.0
      %vm1230 = vcmp.gt.f32.partialorder %v996, 0.0
      %vm1231 = vcmp.gt.f32.partialorder %v999, 0.0
      %vm1232 = vcmp.gt.f32.partialorder %v1001, 0.0
      %vm1233 = vcmp.gt.f32.partialorder %v1004, 0.0
      %vm1234 = vcmp.gt.f32.partialorder %v1006, 0.0
      %vm1235 = vcmp.gt.f32.partialorder %v1009, 0.0
      %vm1236 = vcmp.gt.f32.partialorder %v1011, 0.0
      %vm1237 = vcmp.gt.f32.partialorder %v1014, 0.0
      %vm1238 = vcmp.gt.f32.partialorder %v1016, 0.0
      %vm1239 = vcmp.gt.f32.partialorder %v1019, 0.0
      %vm1240 = vcmp.gt.f32.partialorder %v1021, 0.0
      %vm1241 = vcmp.gt.f32.partialorder %v1024, 0.0
      %vm1242 = vcmp.gt.f32.partialorder %v1026, 0.0
      %vm1243 = vcmp.gt.f32.partialorder %v1029, 0.0
      %vm1244 = vcmp.gt.f32.partialorder %v1031, 0.0
      %vm1245 = vcmp.gt.f32.partialorder %v1034, 0.0
      %vm1246 = vcmp.gt.f32.partialorder %v1036, 0.0
      %vm1247 = vcmp.gt.f32.partialorder %v1039, 0.0
      %vm1248 = vcmp.gt.f32.partialorder %v1041, 0.0
      %vm1249 = vcmp.gt.f32.partialorder %v1044, 0.0
      %vm1250 = vcmp.gt.f32.partialorder %v1046, 0.0
      %vm1251 = vcmp.gt.f32.partialorder %v1049, 0.0
      %vm1252 = vcmp.gt.f32.partialorder %v1051, 0.0
      %vm1253 = vcmp.gt.f32.partialorder %v1054, 0.0
      %vm1254 = vcmp.gt.f32.partialorder %v1056, 0.0
      %vm1255 = vcmp.gt.f32.partialorder %v1059, 0.0
      %vm1256 = vcmp.gt.f32.partialorder %v1061, 0.0
      %vm1257 = vcmp.gt.f32.partialorder %v1064, 0.0
      %vm1258 = vcmp.gt.f32.partialorder %v1066, 0.0
      %vm1259 = vcmp.gt.f32.partialorder %v1069, 0.0
      %vm1260 = vcmp.gt.f32.partialorder %v1071, 0.0
      %vm1261 = vcmp.gt.f32.partialorder %v1074, 0.0
      %vm1262 = vcmp.gt.f32.partialorder %v1076, 0.0
      %vm1263 = vcmp.gt.f32.partialorder %v1079, 0.0
      %vm1264 = vcmp.gt.f32.partialorder %v1081, 0.0
      %vm1265 = vcmp.gt.f32.partialorder %v1084, 0.0
      %vm1266 = vcmp.gt.f32.partialorder %v1086, 0.0
      %vm1267 = vcmp.gt.f32.partialorder %v1089, 0.0
      %vm1268 = vcmp.gt.f32.partialorder %v1091, 0.0
      %vm1269 = vcmp.gt.f32.partialorder %v1094, 0.0
      %vm1270 = vcmp.gt.f32.partialorder %v1096, 0.0
      %vm1271 = vcmp.gt.f32.partialorder %v1099, 0.0
      %vm1272 = vcmp.gt.f32.partialorder %v1101, 0.0
      %vm1273 = vcmp.gt.f32.partialorder %v1104, 0.0
      %vm1274 = vcmp.gt.f32.partialorder %v1106, 0.0
      %vm1275 = vcmp.gt.f32.partialorder %v1109, 0.0
      %vm1276 = vcmp.gt.f32.partialorder %v1111, 0.0
      %vm1277 = vcmp.gt.f32.partialorder %v1114, 0.0
      %vm1278 = vcmp.gt.f32.partialorder %v1116, 0.0
      %vm1279 = vcmp.gt.f32.partialorder %v1119, 0.0
      %vm1280 = vcmp.gt.f32.partialorder %v1121, 0.0
      %vm1281 = vcmp.gt.f32.partialorder %v1124, 0.0
      %vm1282 = vcmp.gt.f32.partialorder %v1126, 0.0
      %vm1283 = vcmp.gt.f32.partialorder %v1129, 0.0
      %vm1284 = vcmp.gt.f32.partialorder %v1131, 0.0
      %vm1285 = vcmp.gt.f32.partialorder %v1134, 0.0
      %vm1286 = vcmp.gt.f32.partialorder %v1136, 0.0
      %vm1287 = vcmp.gt.f32.partialorder %v1139, 0.0
      %vm1288 = vcmp.gt.f32.partialorder %v1141, 0.0
      %vm1289 = vcmp.gt.f32.partialorder %v1144, 0.0
      %vm1290 = vcmp.gt.f32.partialorder %v1146, 0.0
      %vm1291 = vcmp.gt.f32.partialorder %v1149, 0.0
      %vm1292 = vcmp.gt.f32.partialorder %v1151, 0.0
      %vm1293 = vcmp.gt.f32.partialorder %v1154, 0.0
      %vm1294 = vcmp.gt.f32.partialorder %v1156, 0.0
      %vm1295 = vcmp.gt.f32.partialorder %v1159, 0.0
      %vm1296 = vcmp.gt.f32.partialorder %v1161, 0.0
      %vm1297 = vcmp.gt.f32.partialorder %v1164, 0.0
      %vm1298 = vcmp.gt.f32.partialorder %v1166, 0.0
      %vm1299 = vcmp.gt.f32.partialorder %v1169, 0.0
      %vm1300 = vcmp.gt.f32.partialorder %v1171, 0.0
      %v1301 = vmul.f32 %v854, 0.2
      %v1302 = vmul.f32 %v856, 0.2
      %v1303 = vmul.f32 %v859, 0.2
      %v1304 = vmul.f32 %v861, 0.2
      %v1305 = vmul.f32 %v864, 0.2
      %v1306 = vmul.f32 %v866, 0.2
      %v1307 = vmul.f32 %v869, 0.2
      %v1308 = vmul.f32 %v871, 0.2
      %v1309 = vmul.f32 %v874, 0.2
      %v1310 = vmul.f32 %v876, 0.2
      %v1311 = vmul.f32 %v879, 0.2
      %v1312 = vmul.f32 %v881, 0.2
      %v1313 = vmul.f32 %v884, 0.2
      %v1314 = vmul.f32 %v886, 0.2
      %v1315 = vmul.f32 %v889, 0.2
      %v1316 = vmul.f32 %v891, 0.2
      %v1317 = vmul.f32 %v894, 0.2
      %v1318 = vmul.f32 %v896, 0.2
      %v1319 = vmul.f32 %v899, 0.2
      %v1320 = vmul.f32 %v901, 0.2
      %v1321 = vmul.f32 %v904, 0.2
      %v1322 = vmul.f32 %v906, 0.2
      %v1323 = vmul.f32 %v909, 0.2
      %v1324 = vmul.f32 %v911, 0.2
      %v1325 = vmul.f32 %v914, 0.2
      %v1326 = vmul.f32 %v916, 0.2
      %v1327 = vmul.f32 %v919, 0.2
      %v1328 = vmul.f32 %v921, 0.2
      %v1329 = vmul.f32 %v924, 0.2
      %v1330 = vmul.f32 %v926, 0.2
      %v1331 = vmul.f32 %v929, 0.2
      %v1332 = vmul.f32 %v931, 0.2
      %v1333 = vmul.f32 %v934, 0.2
      %v1334 = vmul.f32 %v936, 0.2
      %v1335 = vmul.f32 %v939, 0.2
      %v1336 = vmul.f32 %v941, 0.2
      %v1337 = vmul.f32 %v944, 0.2
      %v1338 = vmul.f32 %v946, 0.2
      %v1339 = vmul.f32 %v949, 0.2
      %v1340 = vmul.f32 %v951, 0.2
      %v1341 = vmul.f32 %v954, 0.2
      %v1342 = vmul.f32 %v956, 0.2
      %v1343 = vmul.f32 %v959, 0.2
      %v1344 = vmul.f32 %v961, 0.2
      %v1345 = vmul.f32 %v964, 0.2
      %v1346 = vmul.f32 %v966, 0.2
      %v1347 = vmul.f32 %v969, 0.2
      %v1348 = vmul.f32 %v971, 0.2
      %v1349 = vmul.f32 %v974, 0.2
      %v1350 = vmul.f32 %v976, 0.2
      %v1351 = vmul.f32 %v979, 0.2
      %v1352 = vmul.f32 %v981, 0.2
      %v1353 = vmul.f32 %v984, 0.2
      %v1354 = vmul.f32 %v986, 0.2
      %v1355 = vmul.f32 %v989, 0.2
      %v1356 = vmul.f32 %v991, 0.2
      %v1357 = vmul.f32 %v994, 0.2
      %v1358 = vmul.f32 %v996, 0.2
      %v1359 = vmul.f32 %v999, 0.2
      %v1360 = vmul.f32 %v1001, 0.2
      %v1361 = vmul.f32 %v1004, 0.2
      %v1362 = vmul.f32 %v1006, 0.2
      %v1363 = vmul.f32 %v1009, 0.2
      %v1364 = vmul.f32 %v1011, 0.2
      %v1365 = vmul.f32 %v1014, 0.2
      %v1366 = vmul.f32 %v1016, 0.2
      %v1367 = vmul.f32 %v1019, 0.2
      %v1368 = vmul.f32 %v1021, 0.2
      %v1369 = vmul.f32 %v1024, 0.2
      %v1370 = vmul.f32 %v1026, 0.2
      %v1371 = vmul.f32 %v1029, 0.2
      %v1372 = vmul.f32 %v1031, 0.2
      %v1373 = vmul.f32 %v1034, 0.2
      %v1374 = vmul.f32 %v1036, 0.2
      %v1375 = vmul.f32 %v1039, 0.2
      %v1376 = vmul.f32 %v1041, 0.2
      %v1377 = vmul.f32 %v1044, 0.2
      %v1378 = vmul.f32 %v1046, 0.2
      %v1379 = vmul.f32 %v1049, 0.2
      %v1380 = vmul.f32 %v1051, 0.2
      %v1381 = vmul.f32 %v1054, 0.2
      %v1382 = vmul.f32 %v1056, 0.2
      %v1383 = vmul.f32 %v1059, 0.2
      %v1384 = vmul.f32 %v1061, 0.2
      %v1385 = vmul.f32 %v1064, 0.2
      %v1386 = vmul.f32 %v1066, 0.2
      %v1387 = vmul.f32 %v1069, 0.2
      %v1388 = vmul.f32 %v1071, 0.2
      %v1389 = vmul.f32 %v1074, 0.2
      %v1390 = vmul.f32 %v1076, 0.2
      %v1391 = vmul.f32 %v1079, 0.2
      %v1392 = vmul.f32 %v1081, 0.2
      %v1393 = vmul.f32 %v1084, 0.2
      %v1394 = vmul.f32 %v1086, 0.2
      %v1395 = vmul.f32 %v1089, 0.2
      %v1396 = vmul.f32 %v1091, 0.2
      %v1397 = vmul.f32 %v1094, 0.2
      %v1398 = vmul.f32 %v1096, 0.2
      %v1399 = vmul.f32 %v1099, 0.2
      %v1400 = vmul.f32 %v1101, 0.2
      %v1401 = vmul.f32 %v1104, 0.2
      %v1402 = vmul.f32 %v1106, 0.2
      %v1403 = vmul.f32 %v1109, 0.2
      %v1404 = vmul.f32 %v1111, 0.2
      %v1405 = vmul.f32 %v1114, 0.2
      %v1406 = vmul.f32 %v1116, 0.2
      %v1407 = vmul.f32 %v1119, 0.2
      %v1408 = vmul.f32 %v1121, 0.2
      %v1409 = vmul.f32 %v1124, 0.2
      %v1410 = vmul.f32 %v1126, 0.2
      %v1411 = vmul.f32 %v1129, 0.2
      %v1412 = vmul.f32 %v1131, 0.2
      %v1413 = vmul.f32 %v1134, 0.2
      %v1414 = vmul.f32 %v1136, 0.2
      %v1415 = vmul.f32 %v1139, 0.2
      %v1416 = vmul.f32 %v1141, 0.2
      %v1417 = vmul.f32 %v1144, 0.2
      %v1418 = vmul.f32 %v1146, 0.2
      %v1419 = vmul.f32 %v1149, 0.2
      %v1420 = vmul.f32 %v1151, 0.2
      %v1421 = vmul.f32 %v1154, 0.2
      %v1422 = vmul.f32 %v1156, 0.2
      %v1423 = vmul.f32 %v1159, 0.2
      %v1424 = vmul.f32 %v1161, 0.2
      %v1425 = vmul.f32 %v1164, 0.2
      %v1426 = vmul.f32 %v1166, 0.2
      %v1427 = vmul.f32 %v1169, 0.2
      %v1428 = vmul.f32 %v1171, 0.2
      %v1429 = vsel %vm1173, %v854, %v1301
      %v1430 = vsel %vm1174, %v856, %v1302
      %v1431 = vsel %vm1175, %v859, %v1303
      %v1432 = vsel %vm1176, %v861, %v1304
      %v1433 = vsel %vm1177, %v864, %v1305
      %v1434 = vsel %vm1178, %v866, %v1306
      %v1435 = vsel %vm1179, %v869, %v1307
      %v1436 = vsel %vm1180, %v871, %v1308
      %v1437 = vsel %vm1181, %v874, %v1309
      %v1438 = vsel %vm1182, %v876, %v1310
      %v1439 = vsel %vm1183, %v879, %v1311
      %v1440 = vsel %vm1184, %v881, %v1312
      %v1441 = vsel %vm1185, %v884, %v1313
      %v1442 = vsel %vm1186, %v886, %v1314
      %v1443 = vsel %vm1187, %v889, %v1315
      %v1444 = vsel %vm1188, %v891, %v1316
      %v1445 = vsel %vm1189, %v894, %v1317
      %v1446 = vsel %vm1190, %v896, %v1318
      %v1447 = vsel %vm1191, %v899, %v1319
      %v1448 = vsel %vm1192, %v901, %v1320
      %v1449 = vsel %vm1193, %v904, %v1321
      %v1450 = vsel %vm1194, %v906, %v1322
      %v1451 = vsel %vm1195, %v909, %v1323
      %v1452 = vsel %vm1196, %v911, %v1324
      %v1453 = vsel %vm1197, %v914, %v1325
      %v1454 = vsel %vm1198, %v916, %v1326
      %v1455 = vsel %vm1199, %v919, %v1327
      %v1456 = vsel %vm1200, %v921, %v1328
      %v1457 = vsel %vm1201, %v924, %v1329
      %v1458 = vsel %vm1202, %v926, %v1330
      %v1459 = vsel %vm1203, %v929, %v1331
      %v1460 = vsel %vm1204, %v931, %v1332
      %v1461 = vsel %vm1205, %v934, %v1333
      %v1462 = vsel %vm1206, %v936, %v1334
      %v1463 = vsel %vm1207, %v939, %v1335
      %v1464 = vsel %vm1208, %v941, %v1336
      %v1465 = vsel %vm1209, %v944, %v1337
      %v1466 = vsel %vm1210, %v946, %v1338
      %v1467 = vsel %vm1211, %v949, %v1339
      %v1468 = vsel %vm1212, %v951, %v1340
      %v1469 = vsel %vm1213, %v954, %v1341
      %v1470 = vsel %vm1214, %v956, %v1342
      %v1471 = vsel %vm1215, %v959, %v1343
      %v1472 = vsel %vm1216, %v961, %v1344
      %v1473 = vsel %vm1217, %v964, %v1345
      %v1474 = vsel %vm1218, %v966, %v1346
      %v1475 = vsel %vm1219, %v969, %v1347
      %v1476 = vsel %vm1220, %v971, %v1348
      %v1477 = vsel %vm1221, %v974, %v1349
      %v1478 = vsel %vm1222, %v976, %v1350
      %v1479 = vsel %vm1223, %v979, %v1351
      %v1480 = vsel %vm1224, %v981, %v1352
      %v1481 = vsel %vm1225, %v984, %v1353
      %v1482 = vsel %vm1226, %v986, %v1354
      %v1483 = vsel %vm1227, %v989, %v1355
      %v1484 = vsel %vm1228, %v991, %v1356
      %v1485 = vsel %vm1229, %v994, %v1357
      %v1486 = vsel %vm1230, %v996, %v1358
      %v1487 = vsel %vm1231, %v999, %v1359
      %v1488 = vsel %vm1232, %v1001, %v1360
      %v1489 = vsel %vm1233, %v1004, %v1361
      %v1490 = vsel %vm1234, %v1006, %v1362
      %v1491 = vsel %vm1235, %v1009, %v1363
      %v1492 = vsel %vm1236, %v1011, %v1364
      %v1493 = vsel %vm1237, %v1014, %v1365
      %v1494 = vsel %vm1238, %v1016, %v1366
      %v1495 = vsel %vm1239, %v1019, %v1367
      %v1496 = vsel %vm1240, %v1021, %v1368
      %v1497 = vsel %vm1241, %v1024, %v1369
      %v1498 = vsel %vm1242, %v1026, %v1370
      %v1499 = vsel %vm1243, %v1029, %v1371
      %v1500 = vsel %vm1244, %v1031, %v1372
      %v1501 = vsel %vm1245, %v1034, %v1373
      %v1502 = vsel %vm1246, %v1036, %v1374
      %v1503 = vsel %vm1247, %v1039, %v1375
      %v1504 = vsel %vm1248, %v1041, %v1376
      %v1505 = vsel %vm1249, %v1044, %v1377
      %v1506 = vsel %vm1250, %v1046, %v1378
      %v1507 = vsel %vm1251, %v1049, %v1379
      %v1508 = vsel %vm1252, %v1051, %v1380
      %v1509 = vsel %vm1253, %v1054, %v1381
      %v1510 = vsel %vm1254, %v1056, %v1382
      %v1511 = vsel %vm1255, %v1059, %v1383
      %v1512 = vsel %vm1256, %v1061, %v1384
      %v1513 = vsel %vm1257, %v1064, %v1385
      %v1514 = vsel %vm1258, %v1066, %v1386
      %v1515 = vsel %vm1259, %v1069, %v1387
      %v1516 = vsel %vm1260, %v1071, %v1388
      %v1517 = vsel %vm1261, %v1074, %v1389
      %v1518 = vsel %vm1262, %v1076, %v1390
      %v1519 = vsel %vm1263, %v1079, %v1391
      %v1520 = vsel %vm1264, %v1081, %v1392
      %v1521 = vsel %vm1265, %v1084, %v1393
      %v1522 = vsel %vm1266, %v1086, %v1394
      %v1523 = vsel %vm1267, %v1089, %v1395
      %v1524 = vsel %vm1268, %v1091, %v1396
      %v1525 = vsel %vm1269, %v1094, %v1397
      %v1526 = vsel %vm1270, %v1096, %v1398
      %v1527 = vsel %vm1271, %v1099, %v1399
      %v1528 = vsel %vm1272, %v1101, %v1400
      %v1529 = vsel %vm1273, %v1104, %v1401
      %v1530 = vsel %vm1274, %v1106, %v1402
      %v1531 = vsel %vm1275, %v1109, %v1403
      %v1532 = vsel %vm1276, %v1111, %v1404
      %v1533 = vsel %vm1277, %v1114, %v1405
      %v1534 = vsel %vm1278, %v1116, %v1406
      %v1535 = vsel %vm1279, %v1119, %v1407
      %v1536 = vsel %vm1280, %v1121, %v1408
      %v1537 = vsel %vm1281, %v1124, %v1409
      %v1538 = vsel %vm1282, %v1126, %v1410
      %v1539 = vsel %vm1283, %v1129, %v1411
      %v1540 = vsel %vm1284, %v1131, %v1412
      %v1541 = vsel %vm1285, %v1134, %v1413
      %v1542 = vsel %vm1286, %v1136, %v1414
      %v1543 = vsel %vm1287, %v1139, %v1415
      %v1544 = vsel %vm1288, %v1141, %v1416
      %v1545 = vsel %vm1289, %v1144, %v1417
      %v1546 = vsel %vm1290, %v1146, %v1418
      %v1547 = vsel %vm1291, %v1149, %v1419
      %v1548 = vsel %vm1292, %v1151, %v1420
      %v1549 = vsel %vm1293, %v1154, %v1421
      %v1550 = vsel %vm1294, %v1156, %v1422
      %v1551 = vsel %vm1295, %v1159, %v1423
      %v1552 = vsel %vm1296, %v1161, %v1424
      %v1553 = vsel %vm1297, %v1164, %v1425
      %v1554 = vsel %vm1298, %v1166, %v1426
      %v1555 = vsel %vm1299, %v1169, %v1427
      %v1556 = vsel %vm1300, %v1171, %v1428
      %v1557 = vpack.c.bf16 %v1429, %v1429
      %v1558 = vpack.c.bf16 %v1430, %v1430
      %v1559 = vpack.c.bf16 %v1431, %v1431
      %v1560 = vpack.c.bf16 %v1432, %v1432
      %v1561 = vpack.c.bf16 %v1433, %v1433
      %v1562 = vpack.c.bf16 %v1434, %v1434
      %v1563 = vpack.c.bf16 %v1435, %v1435
      %v1564 = vpack.c.bf16 %v1436, %v1436
      %v1565 = vpack.c.bf16 %v1437, %v1437
      %v1566 = vpack.c.bf16 %v1438, %v1438
      %v1567 = vpack.c.bf16 %v1439, %v1439
      %v1568 = vpack.c.bf16 %v1440, %v1440
      %v1569 = vpack.c.bf16 %v1441, %v1441
      %v1570 = vpack.c.bf16 %v1442, %v1442
      %v1571 = vpack.c.bf16 %v1443, %v1443
      %v1572 = vpack.c.bf16 %v1444, %v1444
      %v1573 = vpack.c.bf16 %v1445, %v1445
      %v1574 = vpack.c.bf16 %v1446, %v1446
      %v1575 = vpack.c.bf16 %v1447, %v1447
      %v1576 = vpack.c.bf16 %v1448, %v1448
      %v1577 = vpack.c.bf16 %v1449, %v1449
      %v1578 = vpack.c.bf16 %v1450, %v1450
      %v1579 = vpack.c.bf16 %v1451, %v1451
      %v1580 = vpack.c.bf16 %v1452, %v1452
      %v1581 = vpack.c.bf16 %v1453, %v1453
      %v1582 = vpack.c.bf16 %v1454, %v1454
      %v1583 = vpack.c.bf16 %v1455, %v1455
      %v1584 = vpack.c.bf16 %v1456, %v1456
      %v1585 = vpack.c.bf16 %v1457, %v1457
      %v1586 = vpack.c.bf16 %v1458, %v1458
      %v1587 = vpack.c.bf16 %v1459, %v1459
      %v1588 = vpack.c.bf16 %v1460, %v1460
      %v1589 = vpack.c.bf16 %v1461, %v1461
      %v1590 = vpack.c.bf16 %v1462, %v1462
      %v1591 = vpack.c.bf16 %v1463, %v1463
      %v1592 = vpack.c.bf16 %v1464, %v1464
      %v1593 = vpack.c.bf16 %v1465, %v1465
      %v1594 = vpack.c.bf16 %v1466, %v1466
      %v1595 = vpack.c.bf16 %v1467, %v1467
      %v1596 = vpack.c.bf16 %v1468, %v1468
      %v1597 = vpack.c.bf16 %v1469, %v1469
      %v1598 = vpack.c.bf16 %v1470, %v1470
      %v1599 = vpack.c.bf16 %v1471, %v1471
      %v1600 = vpack.c.bf16 %v1472, %v1472
      %v1601 = vpack.c.bf16 %v1473, %v1473
      %v1602 = vpack.c.bf16 %v1474, %v1474
      %v1603 = vpack.c.bf16 %v1475, %v1475
      %v1604 = vpack.c.bf16 %v1476, %v1476
      %v1605 = vpack.c.bf16 %v1477, %v1477
      %v1606 = vpack.c.bf16 %v1478, %v1478
      %v1607 = vpack.c.bf16 %v1479, %v1479
      %v1608 = vpack.c.bf16 %v1480, %v1480
      %v1609 = vpack.c.bf16 %v1481, %v1481
      %v1610 = vpack.c.bf16 %v1482, %v1482
      %v1611 = vpack.c.bf16 %v1483, %v1483
      %v1612 = vpack.c.bf16 %v1484, %v1484
      %v1613 = vpack.c.bf16 %v1485, %v1485
      %v1614 = vpack.c.bf16 %v1486, %v1486
      %v1615 = vpack.c.bf16 %v1487, %v1487
      %v1616 = vpack.c.bf16 %v1488, %v1488
      %v1617 = vpack.c.bf16 %v1489, %v1489
      %v1618 = vpack.c.bf16 %v1490, %v1490
      %v1619 = vpack.c.bf16 %v1491, %v1491
      %v1620 = vpack.c.bf16 %v1492, %v1492
      %v1621 = vpack.c.bf16 %v1493, %v1493
      %v1622 = vpack.c.bf16 %v1494, %v1494
      %v1623 = vpack.c.bf16 %v1495, %v1495
      %v1624 = vpack.c.bf16 %v1496, %v1496
      %v1625 = vpack.c.bf16 %v1497, %v1497
      %v1626 = vpack.c.bf16 %v1498, %v1498
      %v1627 = vpack.c.bf16 %v1499, %v1499
      %v1628 = vpack.c.bf16 %v1500, %v1500
      %v1629 = vpack.c.bf16 %v1501, %v1501
      %v1630 = vpack.c.bf16 %v1502, %v1502
      %v1631 = vpack.c.bf16 %v1503, %v1503
      %v1632 = vpack.c.bf16 %v1504, %v1504
      %v1633 = vpack.c.bf16 %v1505, %v1505
      %v1634 = vpack.c.bf16 %v1506, %v1506
      %v1635 = vpack.c.bf16 %v1507, %v1507
      %v1636 = vpack.c.bf16 %v1508, %v1508
      %v1637 = vpack.c.bf16 %v1509, %v1509
      %v1638 = vpack.c.bf16 %v1510, %v1510
      %v1639 = vpack.c.bf16 %v1511, %v1511
      %v1640 = vpack.c.bf16 %v1512, %v1512
      %v1641 = vpack.c.bf16 %v1513, %v1513
      %v1642 = vpack.c.bf16 %v1514, %v1514
      %v1643 = vpack.c.bf16 %v1515, %v1515
      %v1644 = vpack.c.bf16 %v1516, %v1516
      %v1645 = vpack.c.bf16 %v1517, %v1517
      %v1646 = vpack.c.bf16 %v1518, %v1518
      %v1647 = vpack.c.bf16 %v1519, %v1519
      %v1648 = vpack.c.bf16 %v1520, %v1520
      %v1649 = vpack.c.bf16 %v1521, %v1521
      %v1650 = vpack.c.bf16 %v1522, %v1522
      %v1651 = vpack.c.bf16 %v1523, %v1523
      %v1652 = vpack.c.bf16 %v1524, %v1524
      %v1653 = vpack.c.bf16 %v1525, %v1525
      %v1654 = vpack.c.bf16 %v1526, %v1526
      %v1655 = vpack.c.bf16 %v1527, %v1527
      %v1656 = vpack.c.bf16 %v1528, %v1528
      %v1657 = vpack.c.bf16 %v1529, %v1529
      %v1658 = vpack.c.bf16 %v1530, %v1530
      %v1659 = vpack.c.bf16 %v1531, %v1531
      %v1660 = vpack.c.bf16 %v1532, %v1532
      %v1661 = vpack.c.bf16 %v1533, %v1533
      %v1662 = vpack.c.bf16 %v1534, %v1534
      %v1663 = vpack.c.bf16 %v1535, %v1535
      %v1664 = vpack.c.bf16 %v1536, %v1536
      %v1665 = vpack.c.bf16 %v1537, %v1537
      %v1666 = vpack.c.bf16 %v1538, %v1538
      %v1667 = vpack.c.bf16 %v1539, %v1539
      %v1668 = vpack.c.bf16 %v1540, %v1540
      %v1669 = vpack.c.bf16 %v1541, %v1541
      %v1670 = vpack.c.bf16 %v1542, %v1542
      %v1671 = vpack.c.bf16 %v1543, %v1543
      %v1672 = vpack.c.bf16 %v1544, %v1544
      %v1673 = vpack.c.bf16 %v1545, %v1545
      %v1674 = vpack.c.bf16 %v1546, %v1546
      %v1675 = vpack.c.bf16 %v1547, %v1547
      %v1676 = vpack.c.bf16 %v1548, %v1548
      %v1677 = vpack.c.bf16 %v1549, %v1549
      %v1678 = vpack.c.bf16 %v1550, %v1550
      %v1679 = vpack.c.bf16 %v1551, %v1551
      %v1680 = vpack.c.bf16 %v1552, %v1552
      %v1681 = vpack.c.bf16 %v1553, %v1553
      %v1682 = vpack.c.bf16 %v1554, %v1554
      %v1683 = vpack.c.bf16 %v1555, %v1555
      %v1684 = vpack.c.bf16 %v1556, %v1556
      %1685 = vst [vmem:[%s172] sm:$0xf] %v1557
      %1686 = vst [vmem:[%s172 + $0x4] sm:$0xf] %v1558
      %1687 = vst [vmem:[%s172 + $0x8] sm:$0xf] %v1559
      %1688 = vst [vmem:[%s172 + $0xc] sm:$0xf] %v1560
      %1689 = vst [vmem:[%s172 + $0x10] sm:$0xf] %v1561
      %1690 = vst [vmem:[%s172 + $0x14] sm:$0xf] %v1562
      %1691 = vst [vmem:[%s172 + $0x18] sm:$0xf] %v1563
      %1692 = vst [vmem:[%s172 + $0x1c] sm:$0xf] %v1564
      %1693 = vst [vmem:[%s172 + $0x20] sm:$0xf] %v1565
      %1694 = vst [vmem:[%s172 + $0x24] sm:$0xf] %v1566
      %1695 = vst [vmem:[%s172 + $0x28] sm:$0xf] %v1567
      %1696 = vst [vmem:[%s172 + $0x2c] sm:$0xf] %v1568
      %1697 = vst [vmem:[%s172 + $0x30] sm:$0xf] %v1569
      %1698 = vst [vmem:[%s172 + $0x34] sm:$0xf] %v1570
      %1699 = vst [vmem:[%s172 + $0x38] sm:$0xf] %v1571
      %1700 = vst [vmem:[%s172 + $0x3c] sm:$0xf] %v1572
      %1701 = vst [vmem:[%s172 + $0x40] sm:$0xf] %v1573
      %1702 = vst [vmem:[%s172 + $0x44] sm:$0xf] %v1574
      %1703 = vst [vmem:[%s172 + $0x48] sm:$0xf] %v1575
      %1704 = vst [vmem:[%s172 + $0x4c] sm:$0xf] %v1576
      %1705 = vst [vmem:[%s172 + $0x50] sm:$0xf] %v1577
      %1706 = vst [vmem:[%s172 + $0x54] sm:$0xf] %v1578
      %1707 = vst [vmem:[%s172 + $0x58] sm:$0xf] %v1579
      %1708 = vst [vmem:[%s172 + $0x5c] sm:$0xf] %v1580
      %1709 = vst [vmem:[%s172 + $0x60] sm:$0xf] %v1581
      %1710 = vst [vmem:[%s172 + $0x64] sm:$0xf] %v1582
      %1711 = vst [vmem:[%s172 + $0x68] sm:$0xf] %v1583
      %1712 = vst [vmem:[%s172 + $0x6c] sm:$0xf] %v1584
      %1713 = vst [vmem:[%s172 + $0x70] sm:$0xf] %v1585
      %1714 = vst [vmem:[%s172 + $0x74] sm:$0xf] %v1586
      %1715 = vst [vmem:[%s172 + $0x78] sm:$0xf] %v1587
      %1716 = vst [vmem:[%s172 + $0x7c] sm:$0xf] %v1588
      %1717 = vst [vmem:[%s172 + $0x80] sm:$0xf] %v1589
      %1718 = vst [vmem:[%s172 + $0x84] sm:$0xf] %v1590
      %1719 = vst [vmem:[%s172 + $0x88] sm:$0xf] %v1591
      %1720 = vst [vmem:[%s172 + $0x8c] sm:$0xf] %v1592
      %1721 = vst [vmem:[%s172 + $0x90] sm:$0xf] %v1593
      %1722 = vst [vmem:[%s172 + $0x94] sm:$0xf] %v1594
      %1723 = vst [vmem:[%s172 + $0x98] sm:$0xf] %v1595
      %1724 = vst [vmem:[%s172 + $0x9c] sm:$0xf] %v1596
      %1725 = vst [vmem:[%s172 + $0xa0] sm:$0xf] %v1597
      %1726 = vst [vmem:[%s172 + $0xa4] sm:$0xf] %v1598
      %1727 = vst [vmem:[%s172 + $0xa8] sm:$0xf] %v1599
      %1728 = vst [vmem:[%s172 + $0xac] sm:$0xf] %v1600
      %1729 = vst [vmem:[%s172 + $0xb0] sm:$0xf] %v1601
      %1730 = vst [vmem:[%s172 + $0xb4] sm:$0xf] %v1602
      %1731 = vst [vmem:[%s172 + $0xb8] sm:$0xf] %v1603
      %1732 = vst [vmem:[%s172 + $0xbc] sm:$0xf] %v1604
      %1733 = vst [vmem:[%s172 + $0xc0] sm:$0xf] %v1605
      %1734 = vst [vmem:[%s172 + $0xc4] sm:$0xf] %v1606
      %1735 = vst [vmem:[%s172 + $0xc8] sm:$0xf] %v1607
      %1736 = vst [vmem:[%s172 + $0xcc] sm:$0xf] %v1608
      %1737 = vst [vmem:[%s172 + $0xd0] sm:$0xf] %v1609
      %1738 = vst [vmem:[%s172 + $0xd4] sm:$0xf] %v1610
      %1739 = vst [vmem:[%s172 + $0xd8] sm:$0xf] %v1611
      %1740 = vst [vmem:[%s172 + $0xdc] sm:$0xf] %v1612
      %1741 = vst [vmem:[%s172 + $0xe0] sm:$0xf] %v1613
      %1742 = vst [vmem:[%s172 + $0xe4] sm:$0xf] %v1614
      %1743 = vst [vmem:[%s172 + $0xe8] sm:$0xf] %v1615
      %1744 = vst [vmem:[%s172 + $0xec] sm:$0xf] %v1616
      %1745 = vst [vmem:[%s172 + $0xf0] sm:$0xf] %v1617
      %1746 = vst [vmem:[%s172 + $0xf4] sm:$0xf] %v1618
      %1747 = vst [vmem:[%s172 + $0xf8] sm:$0xf] %v1619
      %1748 = vst [vmem:[%s172 + $0xfc] sm:$0xf] %v1620
      %1749 = vst [vmem:[%s172 + $0x100] sm:$0xf] %v1621
      %1750 = vst [vmem:[%s172 + $0x104] sm:$0xf] %v1622
      %1751 = vst [vmem:[%s172 + $0x108] sm:$0xf] %v1623
      %1752 = vst [vmem:[%s172 + $0x10c] sm:$0xf] %v1624
      %1753 = vst [vmem:[%s172 + $0x110] sm:$0xf] %v1625
      %1754 = vst [vmem:[%s172 + $0x114] sm:$0xf] %v1626
      %1755 = vst [vmem:[%s172 + $0x118] sm:$0xf] %v1627
      %1756 = vst [vmem:[%s172 + $0x11c] sm:$0xf] %v1628
      %1757 = vst [vmem:[%s172 + $0x120] sm:$0xf] %v1629
      %1758 = vst [vmem:[%s172 + $0x124] sm:$0xf] %v1630
      %1759 = vst [vmem:[%s172 + $0x128] sm:$0xf] %v1631
      %1760 = vst [vmem:[%s172 + $0x12c] sm:$0xf] %v1632
      %1761 = vst [vmem:[%s172 + $0x130] sm:$0xf] %v1633
      %1762 = vst [vmem:[%s172 + $0x134] sm:$0xf] %v1634
      %1763 = vst [vmem:[%s172 + $0x138] sm:$0xf] %v1635
      %1764 = vst [vmem:[%s172 + $0x13c] sm:$0xf] %v1636
      %1765 = vst [vmem:[%s172 + $0x140] sm:$0xf] %v1637
      %1766 = vst [vmem:[%s172 + $0x144] sm:$0xf] %v1638
      %1767 = vst [vmem:[%s172 + $0x148] sm:$0xf] %v1639
      %1768 = vst [vmem:[%s172 + $0x14c] sm:$0xf] %v1640
      %1769 = vst [vmem:[%s172 + $0x150] sm:$0xf] %v1641
      %1770 = vst [vmem:[%s172 + $0x154] sm:$0xf] %v1642
      %1771 = vst [vmem:[%s172 + $0x158] sm:$0xf] %v1643
      %1772 = vst [vmem:[%s172 + $0x15c] sm:$0xf] %v1644
      %1773 = vst [vmem:[%s172 + $0x160] sm:$0xf] %v1645
      %1774 = vst [vmem:[%s172 + $0x164] sm:$0xf] %v1646
      %1775 = vst [vmem:[%s172 + $0x168] sm:$0xf] %v1647
      %1776 = vst [vmem:[%s172 + $0x16c] sm:$0xf] %v1648
      %1777 = vst [vmem:[%s172 + $0x170] sm:$0xf] %v1649
      %1778 = vst [vmem:[%s172 + $0x174] sm:$0xf] %v1650
      %1779 = vst [vmem:[%s172 + $0x178] sm:$0xf] %v1651
      %1780 = vst [vmem:[%s172 + $0x17c] sm:$0xf] %v1652
      %1781 = vst [vmem:[%s172 + $0x180] sm:$0xf] %v1653
      %1782 = vst [vmem:[%s172 + $0x184] sm:$0xf] %v1654
      %1783 = vst [vmem:[%s172 + $0x188] sm:$0xf] %v1655
      %1784 = vst [vmem:[%s172 + $0x18c] sm:$0xf] %v1656
      %1785 = vst [vmem:[%s172 + $0x190] sm:$0xf] %v1657
      %1786 = vst [vmem:[%s172 + $0x194] sm:$0xf] %v1658
      %1787 = vst [vmem:[%s172 + $0x198] sm:$0xf] %v1659
      %1788 = vst [vmem:[%s172 + $0x19c] sm:$0xf] %v1660
      %1789 = vst [vmem:[%s172 + $0x1a0] sm:$0xf] %v1661
      %1790 = vst [vmem:[%s172 + $0x1a4] sm:$0xf] %v1662
      %1791 = vst [vmem:[%s172 + $0x1a8] sm:$0xf] %v1663
      %1792 = vst [vmem:[%s172 + $0x1ac] sm:$0xf] %v1664
      %1793 = vst [vmem:[%s172 + $0x1b0] sm:$0xf] %v1665
      %1794 = vst [vmem:[%s172 + $0x1b4] sm:$0xf] %v1666
      %1795 = vst [vmem:[%s172 + $0x1b8] sm:$0xf] %v1667
      %1796 = vst [vmem:[%s172 + $0x1bc] sm:$0xf] %v1668
      %1797 = vst [vmem:[%s172 + $0x1c0] sm:$0xf] %v1669
      %1798 = vst [vmem:[%s172 + $0x1c4] sm:$0xf] %v1670
      %1799 = vst [vmem:[%s172 + $0x1c8] sm:$0xf] %v1671
      %1800 = vst [vmem:[%s172 + $0x1cc] sm:$0xf] %v1672
      %1801 = vst [vmem:[%s172 + $0x1d0] sm:$0xf] %v1673
      %1802 = vst [vmem:[%s172 + $0x1d4] sm:$0xf] %v1674
      %1803 = vst [vmem:[%s172 + $0x1d8] sm:$0xf] %v1675
      %1804 = vst [vmem:[%s172 + $0x1dc] sm:$0xf] %v1676
      %1805 = vst [vmem:[%s172 + $0x1e0] sm:$0xf] %v1677
      %1806 = vst [vmem:[%s172 + $0x1e4] sm:$0xf] %v1678
      %1807 = vst [vmem:[%s172 + $0x1e8] sm:$0xf] %v1679
      %1808 = vst [vmem:[%s172 + $0x1ec] sm:$0xf] %v1680
      %1809 = vst [vmem:[%s172 + $0x1f0] sm:$0xf] %v1681
      %1810 = vst [vmem:[%s172 + $0x1f4] sm:$0xf] %v1682
      %1811 = vst [vmem:[%s172 + $0x1f8] sm:$0xf] %v1683
      %1812 = vst [vmem:[%s172 + $0x1fc] sm:$0xf] %v1684
      %s1813 = smul.u32 128, %s14
      %p1814 = scmp.lt.s32.totalorder %s1813, 255
      %s1815 = scalar_select %p1814, %s1813, 255
      %s1816 = smul.addr %s1815, 4
      %s1817 = scalar_lea.vmem %s3, %s1816
      // Predicated region
      $region33: #{discriminator_forward.8} parent=31 // pred_check
        %p1818 = pneg %p100
      $region34: #{discriminator_forward.8} parent=31 // pred_check_branch
        %1820 = sbr.rel (%p1818) target = $region36
      $region35: #{discriminator_forward.8} parent=31 // pred_region
        %s1821 = smul.u32 128, %s14
      $region36: #{discriminator_forward.8} parent=31 // pred_fallthru
        _
    $region32: #{discriminator_forward.8} parent=5 // pred_fallthru
      _
    %p1822 = scmp.le.s32.totalorder 2, %s9
    // Predicated region
    $region37: #{discriminator_forward.8} parent=5 // pred_check
      %p1823 = pneg %p1822
    $region38: #{discriminator_forward.8} parent=5 // pred_check_branch
      %1825 = sbr.rel (%p1823) target = $region40
    $region39: #{discriminator_forward.8} parent=5 // pred_region
      %s1826 = ssub.s32 %s9, 2
      // Predicated region
      $region41: #{discriminator_forward.8} parent=39 // pred_check
        %p1827 = pneg %p106
      $region42: #{discriminator_forward.8} parent=39 // pred_check_branch
        %1829 = sbr.rel (%p1827) target = $region44
      $region43: #{discriminator_forward.8} parent=39 // pred_region
        %s1830 = smul.u32 128, %s15
        %p1831 = scmp.lt.s32.totalorder %s1830, 255
        %s1832 = scalar_select %p1831, %s1830, 255
        %s1833 = smul.addr %s1832, 4
        %s1834 = scalar_lea.vmem %s3, %s1833
      $region44: #{discriminator_forward.8} parent=39 // pred_fallthru
        _
    $region40: #{discriminator_forward.8} parent=5 // pred_fallthru
      _
  $region6: #{discriminator_forward.8} parent=0 // loop_footer
    %s13 = sadd.s32 1, %s9
  $region7: #{discriminator_forward.8} parent=0 // loop_footer_branch
    %8 = sbr.rel target = $region3
  $region8: #{discriminator_forward.8} parent=0 // loop_exit
    _

// kernel: discriminator_forward.10
$region0: #{discriminator_forward.10}
  #allocation0 [shape = 'u32[]', space=smem, size = 0x4, offset = 0x4, fixed_abs, tag = 'smem constant byte address 0x4 - core index']
  #allocation1 [shape = 'u32[72,128]{1,0:T(1,128)}', space=vmem, size = 0x9000, scoped, tag = 'internal scratch']
  %s0 = inlined_call_operand.vmem [shape: bf16[512,128], index: 0, kind: input, shape index: {}]
  %s1 = inlined_call_operand.vmem [shape: f32[1,128], index: 1, kind: input, shape index: {}]
  %s2 = inlined_call_operand.vmem [shape: f32[1,128], index: 2, kind: input, shape index: {}]
  %s3 = inlined_call_operand.vmem [shape: bf16[512,128], index: 3, kind: output, shape index: {}]
  %s4 = sld [smem:[#allocation0]]
  $region22: #{discriminator_forward.10} parent=0
    _
  %s6 = ssub.s32 1, %s4
  %s7 = scalar_select 0, %s6, %s4
  // Predicated region
  $region2: #{discriminator_forward.10} parent=0 // pred_check
    _
  $region3: #{discriminator_forward.10} parent=0 // pred_check_branch
    %9 = sbr.rel (0) target = $region5
  $region4: #{discriminator_forward.10} parent=0 // pred_region
    _
  $region5: #{discriminator_forward.10} parent=0 // pred_fallthru
    _
  // Predicated region
  $region6: #{discriminator_forward.10} parent=0 // pred_check
    _
  $region7: #{discriminator_forward.10} parent=0 // pred_check_branch
    %11 = sbr.rel (0) target = $region9
  $region8: #{discriminator_forward.10} parent=0 // pred_region
    _
  $region9: #{discriminator_forward.10} parent=0 // pred_fallthru
    _
  // Predicated region
  $region10: #{discriminator_forward.10} parent=0 // pred_check
    _
  $region11: #{discriminator_forward.10} parent=0 // pred_check_branch
    %13 = sbr.rel (0) target = $region13
  $region12: #{discriminator_forward.10} parent=0 // pred_region
    _
  $region13: #{discriminator_forward.10} parent=0 // pred_fallthru
    _
  %v14 = vld [vmem:[%s0] sm:$0xf]
  %v15 = vld [vmem:[%s0 + $0x4] sm:$0xf]
  %v16 = vld [vmem:[%s0 + $0x8] sm:$0xf]
  %v17 = vld [vmem:[%s0 + $0xc] sm:$0xf]
  %v18 = vld [vmem:[%s0 + $0x10] sm:$0xf]
  %v19 = vld [vmem:[%s0 + $0x14] sm:$0xf]
  %v20 = vld [vmem:[%s0 + $0x18] sm:$0xf]
  %v21 = vld [vmem:[%s0 + $0x1c] sm:$0xf]
  %v22 = vld [vmem:[%s0 + $0x20] sm:$0xf]
  %v23 = vld [vmem:[%s0 + $0x24] sm:$0xf]
  %v24 = vld [vmem:[%s0 + $0x28] sm:$0xf]
  %v25 = vld [vmem:[%s0 + $0x2c] sm:$0xf]
  %v26 = vld [vmem:[%s0 + $0x30] sm:$0xf]
  %v27 = vld [vmem:[%s0 + $0x34] sm:$0xf]
  %v28 = vld [vmem:[%s0 + $0x38] sm:$0xf]
  %v29 = vld [vmem:[%s0 + $0x3c] sm:$0xf]
  %v30 = vld [vmem:[%s0 + $0x40] sm:$0xf]
  %v31 = vld [vmem:[%s0 + $0x44] sm:$0xf]
  %v32 = vld [vmem:[%s0 + $0x48] sm:$0xf]
  %v33 = vld [vmem:[%s0 + $0x4c] sm:$0xf]
  %v34 = vld [vmem:[%s0 + $0x50] sm:$0xf]
  %v35 = vld [vmem:[%s0 + $0x54] sm:$0xf]
  %v36 = vld [vmem:[%s0 + $0x58] sm:$0xf]
  %v37 = vld [vmem:[%s0 + $0x5c] sm:$0xf]
  %v38 = vld [vmem:[%s0 + $0x60] sm:$0xf]
  %v39 = vld [vmem:[%s0 + $0x64] sm:$0xf]
  %v40 = vld [vmem:[%s0 + $0x68] sm:$0xf]
  %v41 = vld [vmem:[%s0 + $0x6c] sm:$0xf]
  %v42 = vld [vmem:[%s0 + $0x70] sm:$0xf]
  %v43 = vld [vmem:[%s0 + $0x74] sm:$0xf]
  %v44 = vld [vmem:[%s0 + $0x78] sm:$0xf]
  %v45 = vld [vmem:[%s0 + $0x7c] sm:$0xf]
  %v46 = vld [vmem:[%s0 + $0x80] sm:$0xf]
  %v47 = vld [vmem:[%s0 + $0x84] sm:$0xf]
  %v48 = vld [vmem:[%s0 + $0x88] sm:$0xf]
  %v49 = vld [vmem:[%s0 + $0x8c] sm:$0xf]
  %v50 = vld [vmem:[%s0 + $0x90] sm:$0xf]
  %v51 = vld [vmem:[%s0 + $0x94] sm:$0xf]
  %v52 = vld [vmem:[%s0 + $0x98] sm:$0xf]
  %v53 = vld [vmem:[%s0 + $0x9c] sm:$0xf]
  %v54 = vld [vmem:[%s0 + $0xa0] sm:$0xf]
  %v55 = vld [vmem:[%s0 + $0xa4] sm:$0xf]
  %v56 = vld [vmem:[%s0 + $0xa8] sm:$0xf]
  %v57 = vld [vmem:[%s0 + $0xac] sm:$0xf]
  %v58 = vld [vmem:[%s0 + $0xb0] sm:$0xf]
  %v59 = vld [vmem:[%s0 + $0xb4] sm:$0xf]
  %v60 = vld [vmem:[%s0 + $0xb8] sm:$0xf]
  %v61 = vld [vmem:[%s0 + $0xbc] sm:$0xf]
  %v62 = vld [vmem:[%s0 + $0xc0] sm:$0xf]
  %v63 = vld [vmem:[%s0 + $0xc4] sm:$0xf]
  %v64 = vld [vmem:[%s0 + $0xc8] sm:$0xf]
  %v65 = vld [vmem:[%s0 + $0xcc] sm:$0xf]
  %v66 = vld [vmem:[%s0 + $0xd0] sm:$0xf]
  %v67 = vld [vmem:[%s0 + $0xd4] sm:$0xf]
  %v68 = vld [vmem:[%s0 + $0xd8] sm:$0xf]
  %v69 = vld [vmem:[%s0 + $0xdc] sm:$0xf]
  %v70 = vld [vmem:[%s0 + $0xe0] sm:$0xf]
  %v71 = vld [vmem:[%s0 + $0xe4] sm:$0xf]
  %v72 = vld [vmem:[%s0 + $0xe8] sm:$0xf]
  %v73 = vld [vmem:[%s0 + $0xec] sm:$0xf]
  %v74 = vld [vmem:[%s0 + $0xf0] sm:$0xf]
  %v75 = vld [vmem:[%s0 + $0xf4] sm:$0xf]
  %v76 = vld [vmem:[%s0 + $0xf8] sm:$0xf]
  %v77 = vld [vmem:[%s0 + $0xfc] sm:$0xf]
  %v78 = vunpack.c.l.bf16 %v14
  %v79 = vunpack.c.l.bf16 %v15
  %v80 = vunpack.c.l.bf16 %v16
  %v81 = vunpack.c.l.bf16 %v17
  %v82 = vunpack.c.l.bf16 %v18
  %v83 = vunpack.c.l.bf16 %v19
  %v84 = vunpack.c.l.bf16 %v20
  %v85 = vunpack.c.l.bf16 %v21
  %v86 = vunpack.c.l.bf16 %v22
  %v87 = vunpack.c.l.bf16 %v23
  %v88 = vunpack.c.l.bf16 %v24
  %v89 = vunpack.c.l.bf16 %v25
  %v90 = vunpack.c.l.bf16 %v26
  %v91 = vunpack.c.l.bf16 %v27
  %v92 = vunpack.c.l.bf16 %v28
  %v93 = vunpack.c.l.bf16 %v29
  %v94 = vunpack.c.l.bf16 %v30
  %v95 = vunpack.c.l.bf16 %v31
  %v96 = vunpack.c.l.bf16 %v32
  %v97 = vunpack.c.l.bf16 %v33
  %v98 = vunpack.c.l.bf16 %v34
  %v99 = vunpack.c.l.bf16 %v35
  %v100 = vunpack.c.l.bf16 %v36
  %v101 = vunpack.c.l.bf16 %v37
  %v102 = vunpack.c.l.bf16 %v38
  %v103 = vunpack.c.l.bf16 %v39
  %v104 = vunpack.c.l.bf16 %v40
  %v105 = vunpack.c.l.bf16 %v41
  %v106 = vunpack.c.l.bf16 %v42
  %v107 = vunpack.c.l.bf16 %v43
  %v108 = vunpack.c.l.bf16 %v44
  %v109 = vunpack.c.l.bf16 %v45
  %v110 = vunpack.c.l.bf16 %v46
  %v111 = vunpack.c.l.bf16 %v47
  %v112 = vunpack.c.l.bf16 %v48
  %v113 = vunpack.c.l.bf16 %v49
  %v114 = vunpack.c.l.bf16 %v50
  %v115 = vunpack.c.l.bf16 %v51
  %v116 = vunpack.c.l.bf16 %v52
  %v117 = vunpack.c.l.bf16 %v53
  %v118 = vunpack.c.l.bf16 %v54
  %v119 = vunpack.c.l.bf16 %v55
  %v120 = vunpack.c.l.bf16 %v56
  %v121 = vunpack.c.l.bf16 %v57
  %v122 = vunpack.c.l.bf16 %v58
  %v123 = vunpack.c.l.bf16 %v59
  %v124 = vunpack.c.l.bf16 %v60
  %v125 = vunpack.c.l.bf16 %v61
  %v126 = vunpack.c.l.bf16 %v62
  %v127 = vunpack.c.l.bf16 %v63
  %v128 = vunpack.c.l.bf16 %v64
  %v129 = vunpack.c.l.bf16 %v65
  %v130 = vunpack.c.l.bf16 %v66
  %v131 = vunpack.c.l.bf16 %v67
  %v132 = vunpack.c.l.bf16 %v68
  %v133 = vunpack.c.l.bf16 %v69
  %v134 = vunpack.c.l.bf16 %v70
  %v135 = vunpack.c.l.bf16 %v71
  %v136 = vunpack.c.l.bf16 %v72
  %v137 = vunpack.c.l.bf16 %v73
  %v138 = vunpack.c.l.bf16 %v74
  %v139 = vunpack.c.l.bf16 %v75
  %v140 = vunpack.c.l.bf16 %v76
  %v141 = vunpack.c.l.bf16 %v77
  %v142 = vld [vmem:[%s1] sm:$0x1]
  %v144 = vperm.slane %v142, 0
  %v146 = vmul.f32 %v78, %v144
  %v147 = vmul.f32 %v79, %v144
  %v148 = vmul.f32 %v80, %v144
  %v149 = vmul.f32 %v81, %v144
  %v150 = vmul.f32 %v82, %v144
  %v151 = vmul.f32 %v83, %v144
  %v152 = vmul.f32 %v84, %v144
  %v153 = vmul.f32 %v85, %v144
  %v154 = vmul.f32 %v86, %v144
  %v155 = vmul.f32 %v87, %v144
  %v156 = vmul.f32 %v88, %v144
  %v157 = vmul.f32 %v89, %v144
  %v158 = vmul.f32 %v90, %v144
  %v159 = vmul.f32 %v91, %v144
  %v160 = vmul.f32 %v92, %v144
  %v161 = vmul.f32 %v93, %v144
  %v162 = vmul.f32 %v94, %v144
  %v163 = vmul.f32 %v95, %v144
  %v164 = vmul.f32 %v96, %v144
  %v165 = vmul.f32 %v97, %v144
  %v166 = vmul.f32 %v98, %v144
  %v167 = vmul.f32 %v99, %v144
  %v168 = vmul.f32 %v100, %v144
  %v169 = vmul.f32 %v101, %v144
  %v170 = vmul.f32 %v102, %v144
  %v171 = vmul.f32 %v103, %v144
  %v172 = vmul.f32 %v104, %v144
  %v173 = vmul.f32 %v105, %v144
  %v174 = vmul.f32 %v106, %v144
  %v175 = vmul.f32 %v107, %v144
  %v176 = vmul.f32 %v108, %v144
  %v177 = vmul.f32 %v109, %v144
  %v178 = vmul.f32 %v110, %v144
  %v179 = vmul.f32 %v111, %v144
  %v180 = vmul.f32 %v112, %v144
  %v181 = vmul.f32 %v113, %v144
  %v182 = vmul.f32 %v114, %v144
  %v183 = vmul.f32 %v115, %v144
  %v184 = vmul.f32 %v116, %v144
  %v185 = vmul.f32 %v117, %v144
  %v186 = vmul.f32 %v118, %v144
  %v187 = vmul.f32 %v119, %v144
  %v188 = vmul.f32 %v120, %v144
  %v189 = vmul.f32 %v121, %v144
  %v190 = vmul.f32 %v122, %v144
  %v191 = vmul.f32 %v123, %v144
  %v192 = vmul.f32 %v124, %v144
  %v193 = vmul.f32 %v125, %v144
  %v194 = vmul.f32 %v126, %v144
  %v195 = vmul.f32 %v127, %v144
  %v196 = vmul.f32 %v128, %v144
  %v197 = vmul.f32 %v129, %v144
  %v198 = vmul.f32 %v130, %v144
  %v199 = vmul.f32 %v131, %v144
  %v200 = vmul.f32 %v132, %v144
  %v201 = vmul.f32 %v133, %v144
  %v202 = vmul.f32 %v134, %v144
  %v203 = vmul.f32 %v135, %v144
  %v204 = vmul.f32 %v136, %v144
  %v205 = vmul.f32 %v137, %v144
  %v206 = vmul.f32 %v138, %v144
  %v207 = vmul.f32 %v139, %v144
  %v208 = vmul.f32 %v140, %v144
  %v209 = vmul.f32 %v141, %v144
  %v210 = vld [vmem:[%s2] sm:$0x1]
  %v212 = vperm.slane %v210, 0
  %v214 = vadd.f32 %v146, %v212
  %v215 = vadd.f32 %v147, %v212
  %v216 = vadd.f32 %v148, %v212
  %v217 = vadd.f32 %v149, %v212
  %v218 = vadd.f32 %v150, %v212
  %v219 = vadd.f32 %v151, %v212
  %v220 = vadd.f32 %v152, %v212
  %v221 = vadd.f32 %v153, %v212
  %v222 = vadd.f32 %v154, %v212
  %v223 = vadd.f32 %v155, %v212
  %v224 = vadd.f32 %v156, %v212
  %v225 = vadd.f32 %v157, %v212
  %v226 = vadd.f32 %v158, %v212
  %v227 = vadd.f32 %v159, %v212
  %v228 = vadd.f32 %v160, %v212
  %v229 = vadd.f32 %v161, %v212
  %v230 = vadd.f32 %v162, %v212
  %v231 = vadd.f32 %v163, %v212
  %v232 = vadd.f32 %v164, %v212
  %v233 = vadd.f32 %v165, %v212
  %v234 = vadd.f32 %v166, %v212
  %v235 = vadd.f32 %v167, %v212
  %v236 = vadd.f32 %v168, %v212
  %v237 = vadd.f32 %v169, %v212
  %v238 = vadd.f32 %v170, %v212
  %v239 = vadd.f32 %v171, %v212
  %v240 = vadd.f32 %v172, %v212
  %v241 = vadd.f32 %v173, %v212
  %v242 = vadd.f32 %v174, %v212
  %v243 = vadd.f32 %v175, %v212
  %v244 = vadd.f32 %v176, %v212
  %v245 = vadd.f32 %v177, %v212
  %v246 = vadd.f32 %v178, %v212
  %v247 = vadd.f32 %v179, %v212
  %v248 = vadd.f32 %v180, %v212
  %v249 = vadd.f32 %v181, %v212
  %v250 = vadd.f32 %v182, %v212
  %v251 = vadd.f32 %v183, %v212
  %v252 = vadd.f32 %v184, %v212
  %v253 = vadd.f32 %v185, %v212
  %v254 = vadd.f32 %v186, %v212
  %v255 = vadd.f32 %v187, %v212
  %v256 = vadd.f32 %v188, %v212
  %v257 = vadd.f32 %v189, %v212
  %v258 = vadd.f32 %v190, %v212
  %v259 = vadd.f32 %v191, %v212
  %v260 = vadd.f32 %v192, %v212
  %v261 = vadd.f32 %v193, %v212
  %v262 = vadd.f32 %v194, %v212
  %v263 = vadd.f32 %v195, %v212
  %v264 = vadd.f32 %v196, %v212
  %v265 = vadd.f32 %v197, %v212
  %v266 = vadd.f32 %v198, %v212
  %v267 = vadd.f32 %v199, %v212
  %v268 = vadd.f32 %v200, %v212
  %v269 = vadd.f32 %v201, %v212
  %v270 = vadd.f32 %v202, %v212
  %v271 = vadd.f32 %v203, %v212
  %v272 = vadd.f32 %v204, %v212
  %v273 = vadd.f32 %v205, %v212
  %v274 = vadd.f32 %v206, %v212
  %v275 = vadd.f32 %v207, %v212
  %v276 = vadd.f32 %v208, %v212
  %v277 = vadd.f32 %v209, %v212
  %vm278 = vcmp.gt.f32.partialorder %v214, 0.0
  %vm279 = vcmp.gt.f32.partialorder %v215, 0.0
  %vm280 = vcmp.gt.f32.partialorder %v216, 0.0
  %vm281 = vcmp.gt.f32.partialorder %v217, 0.0
  %vm282 = vcmp.gt.f32.partialorder %v218, 0.0
  %vm283 = vcmp.gt.f32.partialorder %v219, 0.0
  %vm284 = vcmp.gt.f32.partialorder %v220, 0.0
  %vm285 = vcmp.gt.f32.partialorder %v221, 0.0
  %vm286 = vcmp.gt.f32.partialorder %v222, 0.0
  %vm287 = vcmp.gt.f32.partialorder %v223, 0.0
  %vm288 = vcmp.gt.f32.partialorder %v224, 0.0
  %vm289 = vcmp.gt.f32.partialorder %v225, 0.0
  %vm290 = vcmp.gt.f32.partialorder %v226, 0.0
  %vm291 = vcmp.gt.f32.partialorder %v227, 0.0
  %vm292 = vcmp.gt.f32.partialorder %v228, 0.0
  %vm293 = vcmp.gt.f32.partialorder %v229, 0.0
  %vm294 = vcmp.gt.f32.partialorder %v230, 0.0
  %vm295 = vcmp.gt.f32.partialorder %v231, 0.0
  %vm296 = vcmp.gt.f32.partialorder %v232, 0.0
  %vm297 = vcmp.gt.f32.partialorder %v233, 0.0
  %vm298 = vcmp.gt.f32.partialorder %v234, 0.0
  %vm299 = vcmp.gt.f32.partialorder %v235, 0.0
  %vm300 = vcmp.gt.f32.partialorder %v236, 0.0
  %vm301 = vcmp.gt.f32.partialorder %v237, 0.0
  %vm302 = vcmp.gt.f32.partialorder %v238, 0.0
  %vm303 = vcmp.gt.f32.partialorder %v239, 0.0
  %vm304 = vcmp.gt.f32.partialorder %v240, 0.0
  %vm305 = vcmp.gt.f32.partialorder %v241, 0.0
  %vm306 = vcmp.gt.f32.partialorder %v242, 0.0
  %vm307 = vcmp.gt.f32.partialorder %v243, 0.0
  %vm308 = vcmp.gt.f32.partialorder %v244, 0.0
  %vm309 = vcmp.gt.f32.partialorder %v245, 0.0
  %vm310 = vcmp.gt.f32.partialorder %v246, 0.0
  %vm311 = vcmp.gt.f32.partialorder %v247, 0.0
  %vm312 = vcmp.gt.f32.partialorder %v248, 0.0
  %vm313 = vcmp.gt.f32.partialorder %v249, 0.0
  %vm314 = vcmp.gt.f32.partialorder %v250, 0.0
  %vm315 = vcmp.gt.f32.partialorder %v251, 0.0
  %vm316 = vcmp.gt.f32.partialorder %v252, 0.0
  %vm317 = vcmp.gt.f32.partialorder %v253, 0.0
  %vm318 = vcmp.gt.f32.partialorder %v254, 0.0
  %vm319 = vcmp.gt.f32.partialorder %v255, 0.0
  %vm320 = vcmp.gt.f32.partialorder %v256, 0.0
  %vm321 = vcmp.gt.f32.partialorder %v257, 0.0
  %vm322 = vcmp.gt.f32.partialorder %v258, 0.0
  %vm323 = vcmp.gt.f32.partialorder %v259, 0.0
  %vm324 = vcmp.gt.f32.partialorder %v260, 0.0
  %vm325 = vcmp.gt.f32.partialorder %v261, 0.0
  %vm326 = vcmp.gt.f32.partialorder %v262, 0.0
  %vm327 = vcmp.gt.f32.partialorder %v263, 0.0
  %vm328 = vcmp.gt.f32.partialorder %v264, 0.0
  %vm329 = vcmp.gt.f32.partialorder %v265, 0.0
  %vm330 = vcmp.gt.f32.partialorder %v266, 0.0
  %vm331 = vcmp.gt.f32.partialorder %v267, 0.0
  %vm332 = vcmp.gt.f32.partialorder %v268, 0.0
  %vm333 = vcmp.gt.f32.partialorder %v269, 0.0
  %vm334 = vcmp.gt.f32.partialorder %v270, 0.0
  %vm335 = vcmp.gt.f32.partialorder %v271, 0.0
  %vm336 = vcmp.gt.f32.partialorder %v272, 0.0
  %vm337 = vcmp.gt.f32.partialorder %v273, 0.0
  %vm338 = vcmp.gt.f32.partialorder %v274, 0.0
  %vm339 = vcmp.gt.f32.partialorder %v275, 0.0
  %vm340 = vcmp.gt.f32.partialorder %v276, 0.0
  %vm341 = vcmp.gt.f32.partialorder %v277, 0.0
  %v342 = vmul.f32 %v214, 0.2
  %v343 = vmul.f32 %v215, 0.2
  %v344 = vmul.f32 %v216, 0.2
  %v345 = vmul.f32 %v217, 0.2
  %v346 = vmul.f32 %v218, 0.2
  %v347 = vmul.f32 %v219, 0.2
  %v348 = vmul.f32 %v220, 0.2
  %v349 = vmul.f32 %v221, 0.2
  %v350 = vmul.f32 %v222, 0.2
  %v351 = vmul.f32 %v223, 0.2
  %v352 = vmul.f32 %v224, 0.2
  %v353 = vmul.f32 %v225, 0.2
  %v354 = vmul.f32 %v226, 0.2
  %v355 = vmul.f32 %v227, 0.2
  %v356 = vmul.f32 %v228, 0.2
  %v357 = vmul.f32 %v229, 0.2
  %v358 = vmul.f32 %v230, 0.2
  %v359 = vmul.f32 %v231, 0.2
  %v360 = vmul.f32 %v232, 0.2
  %v361 = vmul.f32 %v233, 0.2
  %v362 = vmul.f32 %v234, 0.2
  %v363 = vmul.f32 %v235, 0.2
  %v364 = vmul.f32 %v236, 0.2
  %v365 = vmul.f32 %v237, 0.2
  %v366 = vmul.f32 %v238, 0.2
  %v367 = vmul.f32 %v239, 0.2
  %v368 = vmul.f32 %v240, 0.2
  %v369 = vmul.f32 %v241, 0.2
  %v370 = vmul.f32 %v242, 0.2
  %v371 = vmul.f32 %v243, 0.2
  %v372 = vmul.f32 %v244, 0.2
  %v373 = vmul.f32 %v245, 0.2
  %v374 = vmul.f32 %v246, 0.2
  %v375 = vmul.f32 %v247, 0.2
  %v376 = vmul.f32 %v248, 0.2
  %v377 = vmul.f32 %v249, 0.2
  %v378 = vmul.f32 %v250, 0.2
  %v379 = vmul.f32 %v251, 0.2
  %v380 = vmul.f32 %v252, 0.2
  %v381 = vmul.f32 %v253, 0.2
  %v382 = vmul.f32 %v254, 0.2
  %v383 = vmul.f32 %v255, 0.2
  %v384 = vmul.f32 %v256, 0.2
  %v385 = vmul.f32 %v257, 0.2
  %v386 = vmul.f32 %v258, 0.2
  %v387 = vmul.f32 %v259, 0.2
  %v388 = vmul.f32 %v260, 0.2
  %v389 = vmul.f32 %v261, 0.2
  %v390 = vmul.f32 %v262, 0.2
  %v391 = vmul.f32 %v263, 0.2
  %v392 = vmul.f32 %v264, 0.2
  %v393 = vmul.f32 %v265, 0.2
  %v394 = vmul.f32 %v266, 0.2
  %v395 = vmul.f32 %v267, 0.2
  %v396 = vmul.f32 %v268, 0.2
  %v397 = vmul.f32 %v269, 0.2
  %v398 = vmul.f32 %v270, 0.2
  %v399 = vmul.f32 %v271, 0.2
  %v400 = vmul.f32 %v272, 0.2
  %v401 = vmul.f32 %v273, 0.2
  %v402 = vmul.f32 %v274, 0.2
  %v403 = vmul.f32 %v275, 0.2
  %v404 = vmul.f32 %v276, 0.2
  %v405 = vmul.f32 %v277, 0.2
  %v406 = vsel %vm278, %v214, %v342
  %v407 = vsel %vm279, %v215, %v343
  %v408 = vsel %vm280, %v216, %v344
  %v409 = vsel %vm281, %v217, %v345
  %v410 = vsel %vm282, %v218, %v346
  %v411 = vsel %vm283, %v219, %v347
  %v412 = vsel %vm284, %v220, %v348
  %v413 = vsel %vm285, %v221, %v349
  %v414 = vsel %vm286, %v222, %v350
  %v415 = vsel %vm287, %v223, %v351
  %v416 = vsel %vm288, %v224, %v352
  %v417 = vsel %vm289, %v225, %v353
  %v418 = vsel %vm290, %v226, %v354
  %v419 = vsel %vm291, %v227, %v355
  %v420 = vsel %vm292, %v228, %v356
  %v421 = vsel %vm293, %v229, %v357
  %v422 = vsel %vm294, %v230, %v358
  %v423 = vsel %vm295, %v231, %v359
  %v424 = vsel %vm296, %v232, %v360
  %v425 = vsel %vm297, %v233, %v361
  %v426 = vsel %vm298, %v234, %v362
  %v427 = vsel %vm299, %v235, %v363
  %v428 = vsel %vm300, %v236, %v364
  %v429 = vsel %vm301, %v237, %v365
  %v430 = vsel %vm302, %v238, %v366
  %v431 = vsel %vm303, %v239, %v367
  %v432 = vsel %vm304, %v240, %v368
  %v433 = vsel %vm305, %v241, %v369
  %v434 = vsel %vm306, %v242, %v370
  %v435 = vsel %vm307, %v243, %v371
  %v436 = vsel %vm308, %v244, %v372
  %v437 = vsel %vm309, %v245, %v373
  %v438 = vsel %vm310, %v246, %v374
  %v439 = vsel %vm311, %v247, %v375
  %v440 = vsel %vm312, %v248, %v376
  %v441 = vsel %vm313, %v249, %v377
  %v442 = vsel %vm314, %v250, %v378
  %v443 = vsel %vm315, %v251, %v379
  %v444 = vsel %vm316, %v252, %v380
  %v445 = vsel %vm317, %v253, %v381
  %v446 = vsel %vm318, %v254, %v382
  %v447 = vsel %vm319, %v255, %v383
  %v448 = vsel %vm320, %v256, %v384
  %v449 = vsel %vm321, %v257, %v385
  %v450 = vsel %vm322, %v258, %v386
  %v451 = vsel %vm323, %v259, %v387
  %v452 = vsel %vm324, %v260, %v388
  %v453 = vsel %vm325, %v261, %v389
  %v454 = vsel %vm326, %v262, %v390
  %v455 = vsel %vm327, %v263, %v391
  %v456 = vsel %vm328, %v264, %v392
  %v457 = vsel %vm329, %v265, %v393
  %v458 = vsel %vm330, %v266, %v394
  %v459 = vsel %vm331, %v267, %v395
  %v460 = vsel %vm332, %v268, %v396
  %v461 = vsel %vm333, %v269, %v397
  %v462 = vsel %vm334, %v270, %v398
  %v463 = vsel %vm335, %v271, %v399
  %v464 = vsel %vm336, %v272, %v400
  %v465 = vsel %vm337, %v273, %v401
  %v466 = vsel %vm338, %v274, %v402
  %v467 = vsel %vm339, %v275, %v403
  %v468 = vsel %vm340, %v276, %v404
  %v469 = vsel %vm341, %v277, %v405
  %v470 = vpack.c.bf16 %v406, %v406
  %v471 = vpack.c.bf16 %v407, %v407
  %v472 = vpack.c.bf16 %v408, %v408
  %v473 = vpack.c.bf16 %v409, %v409
  %v474 = vpack.c.bf16 %v410, %v410
  %v475 = vpack.c.bf16 %v411, %v411
  %v476 = vpack.c.bf16 %v412, %v412
  %v477 = vpack.c.bf16 %v413, %v413
  %v478 = vpack.c.bf16 %v414, %v414
  %v479 = vpack.c.bf16 %v415, %v415
  %v480 = vpack.c.bf16 %v416, %v416
  %v481 = vpack.c.bf16 %v417, %v417
  %v482 = vpack.c.bf16 %v418, %v418
  %v483 = vpack.c.bf16 %v419, %v419
  %v484 = vpack.c.bf16 %v420, %v420
  %v485 = vpack.c.bf16 %v421, %v421
  %v486 = vpack.c.bf16 %v422, %v422
  %v487 = vpack.c.bf16 %v423, %v423
  %v488 = vpack.c.bf16 %v424, %v424
  %v489 = vpack.c.bf16 %v425, %v425
  %v490 = vpack.c.bf16 %v426, %v426
  %v491 = vpack.c.bf16 %v427, %v427
  %v492 = vpack.c.bf16 %v428, %v428
  %v493 = vpack.c.bf16 %v429, %v429
  %v494 = vpack.c.bf16 %v430, %v430
  %v495 = vpack.c.bf16 %v431, %v431
  %v496 = vpack.c.bf16 %v432, %v432
  %v497 = vpack.c.bf16 %v433, %v433
  %v498 = vpack.c.bf16 %v434, %v434
  %v499 = vpack.c.bf16 %v435, %v435
  %v500 = vpack.c.bf16 %v436, %v436
  %v501 = vpack.c.bf16 %v437, %v437
  %v502 = vpack.c.bf16 %v438, %v438
  %v503 = vpack.c.bf16 %v439, %v439
  %v504 = vpack.c.bf16 %v440, %v440
  %v505 = vpack.c.bf16 %v441, %v441
  %v506 = vpack.c.bf16 %v442, %v442
  %v507 = vpack.c.bf16 %v443, %v443
  %v508 = vpack.c.bf16 %v444, %v444
  %v509 = vpack.c.bf16 %v445, %v445
  %v510 = vpack.c.bf16 %v446, %v446
  %v511 = vpack.c.bf16 %v447, %v447
  %v512 = vpack.c.bf16 %v448, %v448
  %v513 = vpack.c.bf16 %v449, %v449
  %v514 = vpack.c.bf16 %v450, %v450
  %v515 = vpack.c.bf16 %v451, %v451
  %v516 = vpack.c.bf16 %v452, %v452
  %v517 = vpack.c.bf16 %v453, %v453
  %v518 = vpack.c.bf16 %v454, %v454
  %v519 = vpack.c.bf16 %v455, %v455
  %v520 = vpack.c.bf16 %v456, %v456
  %v521 = vpack.c.bf16 %v457, %v457
  %v522 = vpack.c.bf16 %v458, %v458
  %v523 = vpack.c.bf16 %v459, %v459
  %v524 = vpack.c.bf16 %v460, %v460
  %v525 = vpack.c.bf16 %v461, %v461
  %v526 = vpack.c.bf16 %v462, %v462
  %v527 = vpack.c.bf16 %v463, %v463
  %v528 = vpack.c.bf16 %v464, %v464
  %v529 = vpack.c.bf16 %v465, %v465
  %v530 = vpack.c.bf16 %v466, %v466
  %v531 = vpack.c.bf16 %v467, %v467
  %v532 = vpack.c.bf16 %v468, %v468
  %v533 = vpack.c.bf16 %v469, %v469
  %534 = vst [vmem:[%s3] sm:$0xf] %v470
  %535 = vst [vmem:[%s3 + $0x4] sm:$0xf] %v471
  %536 = vst [vmem:[%s3 + $0x8] sm:$0xf] %v472
  %537 = vst [vmem:[%s3 + $0xc] sm:$0xf] %v473
  %538 = vst [vmem:[%s3 + $0x10] sm:$0xf] %v474
  %539 = vst [vmem:[%s3 + $0x14] sm:$0xf] %v475
  %540 = vst [vmem:[%s3 + $0x18] sm:$0xf] %v476
  %541 = vst [vmem:[%s3 + $0x1c] sm:$0xf] %v477
  %542 = vst [vmem:[%s3 + $0x20] sm:$0xf] %v478
  %543 = vst [vmem:[%s3 + $0x24] sm:$0xf] %v479
  %544 = vst [vmem:[%s3 + $0x28] sm:$0xf] %v480
  %545 = vst [vmem:[%s3 + $0x2c] sm:$0xf] %v481
  %546 = vst [vmem:[%s3 + $0x30] sm:$0xf] %v482
  %547 = vst [vmem:[%s3 + $0x34] sm:$0xf] %v483
  %548 = vst [vmem:[%s3 + $0x38] sm:$0xf] %v484
  %549 = vst [vmem:[%s3 + $0x3c] sm:$0xf] %v485
  %550 = vst [vmem:[%s3 + $0x40] sm:$0xf] %v486
  %551 = vst [vmem:[%s3 + $0x44] sm:$0xf] %v487
  %552 = vst [vmem:[%s3 + $0x48] sm:$0xf] %v488
  %553 = vst [vmem:[%s3 + $0x4c] sm:$0xf] %v489
  %554 = vst [vmem:[%s3 + $0x50] sm:$0xf] %v490
  %555 = vst [vmem:[%s3 + $0x54] sm:$0xf] %v491
  %556 = vst [vmem:[%s3 + $0x58] sm:$0xf] %v492
  %557 = vst [vmem:[%s3 + $0x5c] sm:$0xf] %v493
  %558 = vst [vmem:[%s3 + $0x60] sm:$0xf] %v494
  %559 = vst [vmem:[%s3 + $0x64] sm:$0xf] %v495
  %560 = vst [vmem:[%s3 + $0x68] sm:$0xf] %v496
  %561 = vst [vmem:[%s3 + $0x6c] sm:$0xf] %v497
  %562 = vst [vmem:[%s3 + $0x70] sm:$0xf] %v498
  %563 = vst [vmem:[%s3 + $0x74] sm:$0xf] %v499
  %564 = vst [vmem:[%s3 + $0x78] sm:$0xf] %v500
  %565 = vst [vmem:[%s3 + $0x7c] sm:$0xf] %v501
  %566 = vst [vmem:[%s3 + $0x80] sm:$0xf] %v502
  %567 = vst [vmem:[%s3 + $0x84] sm:$0xf] %v503
  %568 = vst [vmem:[%s3 + $0x88] sm:$0xf] %v504
  %569 = vst [vmem:[%s3 + $0x8c] sm:$0xf] %v505
  %570 = vst [vmem:[%s3 + $0x90] sm:$0xf] %v506
  %571 = vst [vmem:[%s3 + $0x94] sm:$0xf] %v507
  %572 = vst [vmem:[%s3 + $0x98] sm:$0xf] %v508
  %573 = vst [vmem:[%s3 + $0x9c] sm:$0xf] %v509
  %574 = vst [vmem:[%s3 + $0xa0] sm:$0xf] %v510
  %575 = vst [vmem:[%s3 + $0xa4] sm:$0xf] %v511
  %576 = vst [vmem:[%s3 + $0xa8] sm:$0xf] %v512
  %577 = vst [vmem:[%s3 + $0xac] sm:$0xf] %v513
  %578 = vst [vmem:[%s3 + $0xb0] sm:$0xf] %v514
  %579 = vst [vmem:[%s3 + $0xb4] sm:$0xf] %v515
  %580 = vst [vmem:[%s3 + $0xb8] sm:$0xf] %v516
  %581 = vst [vmem:[%s3 + $0xbc] sm:$0xf] %v517
  %582 = vst [vmem:[%s3 + $0xc0] sm:$0xf] %v518
  %583 = vst [vmem:[%s3 + $0xc4] sm:$0xf] %v519
  %584 = vst [vmem:[%s3 + $0xc8] sm:$0xf] %v520
  %585 = vst [vmem:[%s3 + $0xcc] sm:$0xf] %v521
  %586 = vst [vmem:[%s3 + $0xd0] sm:$0xf] %v522
  %587 = vst [vmem:[%s3 + $0xd4] sm:$0xf] %v523
  %588 = vst [vmem:[%s3 + $0xd8] sm:$0xf] %v524
  %589 = vst [vmem:[%s3 + $0xdc] sm:$0xf] %v525
  %590 = vst [vmem:[%s3 + $0xe0] sm:$0xf] %v526
  %591 = vst [vmem:[%s3 + $0xe4] sm:$0xf] %v527
  %592 = vst [vmem:[%s3 + $0xe8] sm:$0xf] %v528
  %593 = vst [vmem:[%s3 + $0xec] sm:$0xf] %v529
  %594 = vst [vmem:[%s3 + $0xf0] sm:$0xf] %v530
  %595 = vst [vmem:[%s3 + $0xf4] sm:$0xf] %v531
  %596 = vst [vmem:[%s3 + $0xf8] sm:$0xf] %v532
  %597 = vst [vmem:[%s3 + $0xfc] sm:$0xf] %v533
  // Predicated region
  $region14: #{discriminator_forward.10} parent=0 // pred_check
    _
  $region15: #{discriminator_forward.10} parent=0 // pred_check_branch
    %599 = sbr.rel (0) target = $region17
  $region16: #{discriminator_forward.10} parent=0 // pred_region
    _
  $region17: #{discriminator_forward.10} parent=0 // pred_fallthru
    _
  // Predicated region
  $region18: #{discriminator_forward.10} parent=0 // pred_check
    _
  $region19: #{discriminator_forward.10} parent=0 // pred_check_branch
    %601 = sbr.rel (0) target = $region21
  $region20: #{discriminator_forward.10} parent=0 // pred_region
    _
  $region21: #{discriminator_forward.10} parent=0 // pred_fallthru
    _

// kernel: discriminator_forward.9
$region0: #{discriminator_forward.9}
  #allocation0 [shape = 'u32[]', space=smem, size = 0x4, offset = 0x4, fixed_abs, tag = 'smem constant byte address 0x4 - core index']
  #allocation1 [shape = 'u32[72,128]{1,0:T(1,128)}', space=vmem, size = 0x9000, scoped, tag = 'internal scratch']
  %s0 = inlined_call_operand.vmem [shape: bf16[512,128], index: 0, kind: input, shape index: {}]
  %s1 = inlined_call_operand.vmem [shape: bf16[128,128], index: 1, kind: input, shape index: {}]
  %s2 = inlined_call_operand.vmem [shape: f32[1,128], index: 2, kind: input, shape index: {}]
  %s3 = inlined_call_operand.vmem [shape: bf16[512,128], index: 3, kind: output, shape index: {0}]
  %s4 = inlined_call_operand.vmem [shape: f32[1,128], index: 4, kind: output, shape index: {1}]
  %s5 = inlined_call_operand.vmem [shape: f32[1,128], index: 5, kind: output, shape index: {2}]
  %6 = xla_tuple %s3, %s4, %s5
  %s7 = sld [smem:[#allocation0]]
  $region38: #{discriminator_forward.9} parent=0
    _
  %s9 = ssub.s32 1, %s7
  %s10 = scalar_select 0, %s9, %s7
  // Predicated region
  $region2: #{discriminator_forward.9} parent=0 // pred_check
    _
  $region3: #{discriminator_forward.9} parent=0 // pred_check_branch
    %12 = sbr.rel (0) target = $region5
  $region4: #{discriminator_forward.9} parent=0 // pred_region
    _
  $region5: #{discriminator_forward.9} parent=0 // pred_fallthru
    _
  // Predicated region
  $region6: #{discriminator_forward.9} parent=0 // pred_check
    _
  $region7: #{discriminator_forward.9} parent=0 // pred_check_branch
    %14 = sbr.rel (0) target = $region9
  $region8: #{discriminator_forward.9} parent=0 // pred_region
    _
  $region9: #{discriminator_forward.9} parent=0 // pred_fallthru
    _
  // Predicated region
  $region10: #{discriminator_forward.9} parent=0 // pred_check
    _
  $region11: #{discriminator_forward.9} parent=0 // pred_check_branch
    %16 = sbr.rel (0) target = $region13
  $region12: #{discriminator_forward.9} parent=0 // pred_region
    _
  $region13: #{discriminator_forward.9} parent=0 // pred_fallthru
    _
  %v17 = vld [vmem:[%s0] sm:$0xf]
  %v18 = vld [vmem:[%s0 + $0x4] sm:$0xf]
  %v19 = vld [vmem:[%s0 + $0x8] sm:$0xf]
  %v20 = vld [vmem:[%s0 + $0xc] sm:$0xf]
  %v21 = vld [vmem:[%s0 + $0x10] sm:$0xf]
  %v22 = vld [vmem:[%s0 + $0x14] sm:$0xf]
  %v23 = vld [vmem:[%s0 + $0x18] sm:$0xf]
  %v24 = vld [vmem:[%s0 + $0x1c] sm:$0xf]
  %v25 = vld [vmem:[%s0 + $0x20] sm:$0xf]
  %v26 = vld [vmem:[%s0 + $0x24] sm:$0xf]
  %v27 = vld [vmem:[%s0 + $0x28] sm:$0xf]
  %v28 = vld [vmem:[%s0 + $0x2c] sm:$0xf]
  %v29 = vld [vmem:[%s0 + $0x30] sm:$0xf]
  %v30 = vld [vmem:[%s0 + $0x34] sm:$0xf]
  %v31 = vld [vmem:[%s0 + $0x38] sm:$0xf]
  %v32 = vld [vmem:[%s0 + $0x3c] sm:$0xf]
  %v33 = vld [vmem:[%s0 + $0x40] sm:$0xf]
  %v34 = vld [vmem:[%s0 + $0x44] sm:$0xf]
  %v35 = vld [vmem:[%s0 + $0x48] sm:$0xf]
  %v36 = vld [vmem:[%s0 + $0x4c] sm:$0xf]
  %v37 = vld [vmem:[%s0 + $0x50] sm:$0xf]
  %v38 = vld [vmem:[%s0 + $0x54] sm:$0xf]
  %v39 = vld [vmem:[%s0 + $0x58] sm:$0xf]
  %v40 = vld [vmem:[%s0 + $0x5c] sm:$0xf]
  %v41 = vld [vmem:[%s0 + $0x60] sm:$0xf]
  %v42 = vld [vmem:[%s0 + $0x64] sm:$0xf]
  %v43 = vld [vmem:[%s0 + $0x68] sm:$0xf]
  %v44 = vld [vmem:[%s0 + $0x6c] sm:$0xf]
  %v45 = vld [vmem:[%s0 + $0x70] sm:$0xf]
  %v46 = vld [vmem:[%s0 + $0x74] sm:$0xf]
  %v47 = vld [vmem:[%s0 + $0x78] sm:$0xf]
  %v48 = vld [vmem:[%s0 + $0x7c] sm:$0xf]
  %v49 = vld [vmem:[%s0 + $0x80] sm:$0xf]
  %v50 = vld [vmem:[%s0 + $0x84] sm:$0xf]
  %v51 = vld [vmem:[%s0 + $0x88] sm:$0xf]
  %v52 = vld [vmem:[%s0 + $0x8c] sm:$0xf]
  %v53 = vld [vmem:[%s0 + $0x90] sm:$0xf]
  %v54 = vld [vmem:[%s0 + $0x94] sm:$0xf]
  %v55 = vld [vmem:[%s0 + $0x98] sm:$0xf]
  %v56 = vld [vmem:[%s0 + $0x9c] sm:$0xf]
  %v57 = vld [vmem:[%s0 + $0xa0] sm:$0xf]
  %v58 = vld [vmem:[%s0 + $0xa4] sm:$0xf]
  %v59 = vld [vmem:[%s0 + $0xa8] sm:$0xf]
  %v60 = vld [vmem:[%s0 + $0xac] sm:$0xf]
  %v61 = vld [vmem:[%s0 + $0xb0] sm:$0xf]
  %v62 = vld [vmem:[%s0 + $0xb4] sm:$0xf]
  %v63 = vld [vmem:[%s0 + $0xb8] sm:$0xf]
  %v64 = vld [vmem:[%s0 + $0xbc] sm:$0xf]
  %v65 = vld [vmem:[%s0 + $0xc0] sm:$0xf]
  %v66 = vld [vmem:[%s0 + $0xc4] sm:$0xf]
  %v67 = vld [vmem:[%s0 + $0xc8] sm:$0xf]
  %v68 = vld [vmem:[%s0 + $0xcc] sm:$0xf]
  %v69 = vld [vmem:[%s0 + $0xd0] sm:$0xf]
  %v70 = vld [vmem:[%s0 + $0xd4] sm:$0xf]
  %v71 = vld [vmem:[%s0 + $0xd8] sm:$0xf]
  %v72 = vld [vmem:[%s0 + $0xdc] sm:$0xf]
  %v73 = vld [vmem:[%s0 + $0xe0] sm:$0xf]
  %v74 = vld [vmem:[%s0 + $0xe4] sm:$0xf]
  %v75 = vld [vmem:[%s0 + $0xe8] sm:$0xf]
  %v76 = vld [vmem:[%s0 + $0xec] sm:$0xf]
  %v77 = vld [vmem:[%s0 + $0xf0] sm:$0xf]
  %v78 = vld [vmem:[%s0 + $0xf4] sm:$0xf]
  %v79 = vld [vmem:[%s0 + $0xf8] sm:$0xf]
  %v80 = vld [vmem:[%s0 + $0xfc] sm:$0xf]
  %v81 = vld [vmem:[%s1] sm:$0xf]
  %v82 = vld [vmem:[%s1 + $0x4] sm:$0xf]
  %v83 = vld [vmem:[%s1 + $0x8] sm:$0xf]
  %v84 = vld [vmem:[%s1 + $0xc] sm:$0xf]
  %v85 = vld [vmem:[%s1 + $0x10] sm:$0xf]
  %v86 = vld [vmem:[%s1 + $0x14] sm:$0xf]
  %v87 = vld [vmem:[%s1 + $0x18] sm:$0xf]
  %v88 = vld [vmem:[%s1 + $0x1c] sm:$0xf]
  %v89 = vld [vmem:[%s1 + $0x20] sm:$0xf]
  %v90 = vld [vmem:[%s1 + $0x24] sm:$0xf]
  %v91 = vld [vmem:[%s1 + $0x28] sm:$0xf]
  %v92 = vld [vmem:[%s1 + $0x2c] sm:$0xf]
  %v93 = vld [vmem:[%s1 + $0x30] sm:$0xf]
  %v94 = vld [vmem:[%s1 + $0x34] sm:$0xf]
  %v95 = vld [vmem:[%s1 + $0x38] sm:$0xf]
  %v96 = vld [vmem:[%s1 + $0x3c] sm:$0xf]
  %v161 = vunpack.c.l.b16 %v17
  %v162 = vunpack.c.l.b16 %v18
  %v163 = vunpack.c.l.b16 %v19
  %v164 = vunpack.c.l.b16 %v20
  %v165 = vunpack.c.l.b16 %v21
  %v166 = vunpack.c.l.b16 %v22
  %v167 = vunpack.c.l.b16 %v23
  %v168 = vunpack.c.l.b16 %v24
  %v169 = vunpack.c.l.b16 %v25
  %v170 = vunpack.c.l.b16 %v26
  %v171 = vunpack.c.l.b16 %v27
  %v172 = vunpack.c.l.b16 %v28
  %v173 = vunpack.c.l.b16 %v29
  %v174 = vunpack.c.l.b16 %v30
  %v175 = vunpack.c.l.b16 %v31
  %v176 = vunpack.c.l.b16 %v32
  %v177 = vunpack.c.l.b16 %v33
  %v178 = vunpack.c.l.b16 %v34
  %v179 = vunpack.c.l.b16 %v35
  %v180 = vunpack.c.l.b16 %v36
  %v181 = vunpack.c.l.b16 %v37
  %v182 = vunpack.c.l.b16 %v38
  %v183 = vunpack.c.l.b16 %v39
  %v184 = vunpack.c.l.b16 %v40
  %v185 = vunpack.c.l.b16 %v41
  %v186 = vunpack.c.l.b16 %v42
  %v187 = vunpack.c.l.b16 %v43
  %v188 = vunpack.c.l.b16 %v44
  %v189 = vunpack.c.l.b16 %v45
  %v190 = vunpack.c.l.b16 %v46
  %v191 = vunpack.c.l.b16 %v47
  %v192 = vunpack.c.l.b16 %v48
  %v193 = vunpack.c.l.b16 %v49
  %v194 = vunpack.c.l.b16 %v50
  %v195 = vunpack.c.l.b16 %v51
  %v196 = vunpack.c.l.b16 %v52
  %v197 = vunpack.c.l.b16 %v53
  %v198 = vunpack.c.l.b16 %v54
  %v199 = vunpack.c.l.b16 %v55
  %v200 = vunpack.c.l.b16 %v56
  %v201 = vunpack.c.l.b16 %v57
  %v202 = vunpack.c.l.b16 %v58
  %v203 = vunpack.c.l.b16 %v59
  %v204 = vunpack.c.l.b16 %v60
  %v205 = vunpack.c.l.b16 %v61
  %v206 = vunpack.c.l.b16 %v62
  %v207 = vunpack.c.l.b16 %v63
  %v208 = vunpack.c.l.b16 %v64
  %v209 = vunpack.c.l.b16 %v65
  %v210 = vunpack.c.l.b16 %v66
  %v211 = vunpack.c.l.b16 %v67
  %v212 = vunpack.c.l.b16 %v68
  %v213 = vunpack.c.l.b16 %v69
  %v214 = vunpack.c.l.b16 %v70
  %v215 = vunpack.c.l.b16 %v71
  %v216 = vunpack.c.l.b16 %v72
  %v217 = vunpack.c.l.b16 %v73
  %v218 = vunpack.c.l.b16 %v74
  %v219 = vunpack.c.l.b16 %v75
  %v220 = vunpack.c.l.b16 %v76
  %v221 = vunpack.c.l.b16 %v77
  %v222 = vunpack.c.l.b16 %v78
  %v223 = vunpack.c.l.b16 %v79
  %v224 = vunpack.c.l.b16 %v80
  %v225 = vpack.c.b16 %v162, %v161
  %v226 = vpack.c.b16 %v164, %v163
  %v227 = vpack.c.b16 %v166, %v165
  %v228 = vpack.c.b16 %v168, %v167
  %v229 = vpack.c.b16 %v170, %v169
  %v230 = vpack.c.b16 %v172, %v171
  %v231 = vpack.c.b16 %v174, %v173
  %v232 = vpack.c.b16 %v176, %v175
  %v233 = vpack.c.b16 %v178, %v177
  %v234 = vpack.c.b16 %v180, %v179
  %v235 = vpack.c.b16 %v182, %v181
  %v236 = vpack.c.b16 %v184, %v183
  %v237 = vpack.c.b16 %v186, %v185
  %v238 = vpack.c.b16 %v188, %v187
  %v239 = vpack.c.b16 %v190, %v189
  %v240 = vpack.c.b16 %v192, %v191
  %v241 = vpack.c.b16 %v194, %v193
  %v242 = vpack.c.b16 %v196, %v195
  %v243 = vpack.c.b16 %v198, %v197
  %v244 = vpack.c.b16 %v200, %v199
  %v245 = vpack.c.b16 %v202, %v201
  %v246 = vpack.c.b16 %v204, %v203
  %v247 = vpack.c.b16 %v206, %v205
  %v248 = vpack.c.b16 %v208, %v207
  %v249 = vpack.c.b16 %v210, %v209
  %v250 = vpack.c.b16 %v212, %v211
  %v251 = vpack.c.b16 %v214, %v213
  %v252 = vpack.c.b16 %v216, %v215
  %v253 = vpack.c.b16 %v218, %v217
  %v254 = vpack.c.b16 %v220, %v219
  %v255 = vpack.c.b16 %v222, %v221
  %v256 = vpack.c.b16 %v224, %v223
  %v305 = vunpack.c.l.b16 %v81
  %v306 = vunpack.c.l.b16 %v82
  %v307 = vunpack.c.l.b16 %v83
  %v308 = vunpack.c.l.b16 %v84
  %v309 = vunpack.c.l.b16 %v85
  %v310 = vunpack.c.l.b16 %v86
  %v311 = vunpack.c.l.b16 %v87
  %v312 = vunpack.c.l.b16 %v88
  %v313 = vunpack.c.l.b16 %v89
  %v314 = vunpack.c.l.b16 %v90
  %v315 = vunpack.c.l.b16 %v91
  %v316 = vunpack.c.l.b16 %v92
  %v317 = vunpack.c.l.b16 %v93
  %v318 = vunpack.c.l.b16 %v94
  %v319 = vunpack.c.l.b16 %v95
  %v320 = vunpack.c.l.b16 %v96
  %v321 = vpack.c.b16 %v306, %v305
  %v322 = vpack.c.b16 %v308, %v307
  %v323 = vpack.c.b16 %v310, %v309
  %v324 = vpack.c.b16 %v312, %v311
  %v325 = vpack.c.b16 %v314, %v313
  %v326 = vpack.c.b16 %v316, %v315
  %v327 = vpack.c.b16 %v318, %v317
  %v328 = vpack.c.b16 %v320, %v319
  %337 = vmatpush.bf16.msra.mxu0 %v328
  %338 = vmatpush.bf16.msra.mxu0 %v327
  %339 = vmatpush.bf16.msra.mxu0 %v326
  %340 = vmatpush.bf16.msra.mxu0 %v325
  %341 = vmatpush.bf16.msra.mxu0 %v324
  %342 = vmatpush.bf16.msra.mxu0 %v323
  %343 = vmatpush.bf16.msra.mxu0 %v322
  %344 = vmatpush.bf16.msra.mxu0 %v321
  %345 = vmatmul.bf16.gmra.mxu0 %v225
  %v346 = vpop.f32.mrf.mxu0
  %v347 = vadd.f32 0.0, %v346
  %v348 = vpop.f32.mrf.mxu0
  %v349 = vadd.f32 0.0, %v348
  %350 = vmatmul.bf16.gmra.mxu0 %v226
  %v351 = vpop.f32.mrf.mxu0
  %v352 = vadd.f32 0.0, %v351
  %v353 = vpop.f32.mrf.mxu0
  %v354 = vadd.f32 0.0, %v353
  %355 = vmatmul.bf16.gmra.mxu0 %v227
  %v356 = vpop.f32.mrf.mxu0
  %v357 = vadd.f32 0.0, %v356
  %v358 = vpop.f32.mrf.mxu0
  %v359 = vadd.f32 0.0, %v358
  %360 = vmatmul.bf16.gmra.mxu0 %v228
  %v361 = vpop.f32.mrf.mxu0
  %v362 = vadd.f32 0.0, %v361
  %v363 = vpop.f32.mrf.mxu0
  %v364 = vadd.f32 0.0, %v363
  %365 = vmatmul.bf16.gmra.mxu0 %v229
  %v366 = vpop.f32.mrf.mxu0
  %v367 = vadd.f32 0.0, %v366
  %v368 = vpop.f32.mrf.mxu0
  %v369 = vadd.f32 0.0, %v368
  %370 = vmatmul.bf16.gmra.mxu0 %v230
  %v371 = vpop.f32.mrf.mxu0
  %v372 = vadd.f32 0.0, %v371
  %v373 = vpop.f32.mrf.mxu0
  %v374 = vadd.f32 0.0, %v373
  %375 = vmatmul.bf16.gmra.mxu0 %v231
  %v376 = vpop.f32.mrf.mxu0
  %v377 = vadd.f32 0.0, %v376
  %v378 = vpop.f32.mrf.mxu0
  %v379 = vadd.f32 0.0, %v378
  %380 = vmatmul.bf16.gmra.mxu0 %v232
  %v381 = vpop.f32.mrf.mxu0
  %v382 = vadd.f32 0.0, %v381
  %v383 = vpop.f32.mrf.mxu0
  %v384 = vadd.f32 0.0, %v383
  %385 = vmatmul.bf16.gmra.mxu0 %v233
  %v386 = vpop.f32.mrf.mxu0
  %v387 = vadd.f32 0.0, %v386
  %v388 = vpop.f32.mrf.mxu0
  %v389 = vadd.f32 0.0, %v388
  %390 = vmatmul.bf16.gmra.mxu0 %v234
  %v391 = vpop.f32.mrf.mxu0
  %v392 = vadd.f32 0.0, %v391
  %v393 = vpop.f32.mrf.mxu0
  %v394 = vadd.f32 0.0, %v393
  %395 = vmatmul.bf16.gmra.mxu0 %v235
  %v396 = vpop.f32.mrf.mxu0
  %v397 = vadd.f32 0.0, %v396
  %v398 = vpop.f32.mrf.mxu0
  %v399 = vadd.f32 0.0, %v398
  %400 = vmatmul.bf16.gmra.mxu0 %v236
  %v401 = vpop.f32.mrf.mxu0
  %v402 = vadd.f32 0.0, %v401
  %v403 = vpop.f32.mrf.mxu0
  %v404 = vadd.f32 0.0, %v403
  %405 = vmatmul.bf16.gmra.mxu0 %v237
  %v406 = vpop.f32.mrf.mxu0
  %v407 = vadd.f32 0.0, %v406
  %v408 = vpop.f32.mrf.mxu0
  %v409 = vadd.f32 0.0, %v408
  %410 = vmatmul.bf16.gmra.mxu0 %v238
  %v411 = vpop.f32.mrf.mxu0
  %v412 = vadd.f32 0.0, %v411
  %v413 = vpop.f32.mrf.mxu0
  %v414 = vadd.f32 0.0, %v413
  %415 = vmatmul.bf16.gmra.mxu0 %v239
  %v416 = vpop.f32.mrf.mxu0
  %v417 = vadd.f32 0.0, %v416
  %v418 = vpop.f32.mrf.mxu0
  %v419 = vadd.f32 0.0, %v418
  %420 = vmatmul.bf16.gmra.mxu0 %v240
  %v421 = vpop.f32.mrf.mxu0
  %v422 = vadd.f32 0.0, %v421
  %v423 = vpop.f32.mrf.mxu0
  %v424 = vadd.f32 0.0, %v423
  %425 = vmatmul.bf16.gmra.mxu0 %v241
  %v426 = vpop.f32.mrf.mxu0
  %v427 = vadd.f32 0.0, %v426
  %v428 = vpop.f32.mrf.mxu0
  %v429 = vadd.f32 0.0, %v428
  %430 = vmatmul.bf16.gmra.mxu0 %v242
  %v431 = vpop.f32.mrf.mxu0
  %v432 = vadd.f32 0.0, %v431
  %v433 = vpop.f32.mrf.mxu0
  %v434 = vadd.f32 0.0, %v433
  %435 = vmatmul.bf16.gmra.mxu0 %v243
  %v436 = vpop.f32.mrf.mxu0
  %v437 = vadd.f32 0.0, %v436
  %v438 = vpop.f32.mrf.mxu0
  %v439 = vadd.f32 0.0, %v438
  %440 = vmatmul.bf16.gmra.mxu0 %v244
  %v441 = vpop.f32.mrf.mxu0
  %v442 = vadd.f32 0.0, %v441
  %v443 = vpop.f32.mrf.mxu0
  %v444 = vadd.f32 0.0, %v443
  %445 = vmatmul.bf16.gmra.mxu0 %v245
  %v446 = vpop.f32.mrf.mxu0
  %v447 = vadd.f32 0.0, %v446
  %v448 = vpop.f32.mrf.mxu0
  %v449 = vadd.f32 0.0, %v448
  %450 = vmatmul.bf16.gmra.mxu0 %v246
  %v451 = vpop.f32.mrf.mxu0
  %v452 = vadd.f32 0.0, %v451
  %v453 = vpop.f32.mrf.mxu0
  %v454 = vadd.f32 0.0, %v453
  %455 = vmatmul.bf16.gmra.mxu0 %v247
  %v456 = vpop.f32.mrf.mxu0
  %v457 = vadd.f32 0.0, %v456
  %v458 = vpop.f32.mrf.mxu0
  %v459 = vadd.f32 0.0, %v458
  %460 = vmatmul.bf16.gmra.mxu0 %v248
  %v461 = vpop.f32.mrf.mxu0
  %v462 = vadd.f32 0.0, %v461
  %v463 = vpop.f32.mrf.mxu0
  %v464 = vadd.f32 0.0, %v463
  %465 = vmatmul.bf16.gmra.mxu0 %v249
  %v466 = vpop.f32.mrf.mxu0
  %v467 = vadd.f32 0.0, %v466
  %v468 = vpop.f32.mrf.mxu0
  %v469 = vadd.f32 0.0, %v468
  %470 = vmatmul.bf16.gmra.mxu0 %v250
  %v471 = vpop.f32.mrf.mxu0
  %v472 = vadd.f32 0.0, %v471
  %v473 = vpop.f32.mrf.mxu0
  %v474 = vadd.f32 0.0, %v473
  %475 = vmatmul.bf16.gmra.mxu0 %v251
  %v476 = vpop.f32.mrf.mxu0
  %v477 = vadd.f32 0.0, %v476
  %v478 = vpop.f32.mrf.mxu0
  %v479 = vadd.f32 0.0, %v478
  %480 = vmatmul.bf16.gmra.mxu0 %v252
  %v481 = vpop.f32.mrf.mxu0
  %v482 = vadd.f32 0.0, %v481
  %v483 = vpop.f32.mrf.mxu0
  %v484 = vadd.f32 0.0, %v483
  %485 = vmatmul.bf16.gmra.mxu0 %v253
  %v486 = vpop.f32.mrf.mxu0
  %v487 = vadd.f32 0.0, %v486
  %v488 = vpop.f32.mrf.mxu0
  %v489 = vadd.f32 0.0, %v488
  %490 = vmatmul.bf16.gmra.mxu0 %v254
  %v491 = vpop.f32.mrf.mxu0
  %v492 = vadd.f32 0.0, %v491
  %v493 = vpop.f32.mrf.mxu0
  %v494 = vadd.f32 0.0, %v493
  %495 = vmatmul.bf16.gmra.mxu0 %v255
  %v496 = vpop.f32.mrf.mxu0
  %v497 = vadd.f32 0.0, %v496
  %v498 = vpop.f32.mrf.mxu0
  %v499 = vadd.f32 0.0, %v498
  %500 = vmatmul.bf16.gmra.mxu0 %v256
  %v501 = vpop.f32.mrf.mxu0
  %v502 = vadd.f32 0.0, %v501
  %v503 = vpop.f32.mrf.mxu0
  %v504 = vadd.f32 0.0, %v503
  %505 = vdwg.mxu0
  %v506 = vld [vmem:[%s2] sm:$0x1]
  %v508 = vperm.slane %v506, 0
  %v510 = vadd.f32 %v347, %v508
  %v511 = vadd.f32 %v349, %v508
  %v512 = vadd.f32 %v352, %v508
  %v513 = vadd.f32 %v354, %v508
  %v514 = vadd.f32 %v357, %v508
  %v515 = vadd.f32 %v359, %v508
  %v516 = vadd.f32 %v362, %v508
  %v517 = vadd.f32 %v364, %v508
  %v518 = vadd.f32 %v367, %v508
  %v519 = vadd.f32 %v369, %v508
  %v520 = vadd.f32 %v372, %v508
  %v521 = vadd.f32 %v374, %v508
  %v522 = vadd.f32 %v377, %v508
  %v523 = vadd.f32 %v379, %v508
  %v524 = vadd.f32 %v382, %v508
  %v525 = vadd.f32 %v384, %v508
  %v526 = vadd.f32 %v387, %v508
  %v527 = vadd.f32 %v389, %v508
  %v528 = vadd.f32 %v392, %v508
  %v529 = vadd.f32 %v394, %v508
  %v530 = vadd.f32 %v397, %v508
  %v531 = vadd.f32 %v399, %v508
  %v532 = vadd.f32 %v402, %v508
  %v533 = vadd.f32 %v404, %v508
  %v534 = vadd.f32 %v407, %v508
  %v535 = vadd.f32 %v409, %v508
  %v536 = vadd.f32 %v412, %v508
  %v537 = vadd.f32 %v414, %v508
  %v538 = vadd.f32 %v417, %v508
  %v539 = vadd.f32 %v419, %v508
  %v540 = vadd.f32 %v422, %v508
  %v541 = vadd.f32 %v424, %v508
  %v542 = vadd.f32 %v427, %v508
  %v543 = vadd.f32 %v429, %v508
  %v544 = vadd.f32 %v432, %v508
  %v545 = vadd.f32 %v434, %v508
  %v546 = vadd.f32 %v437, %v508
  %v547 = vadd.f32 %v439, %v508
  %v548 = vadd.f32 %v442, %v508
  %v549 = vadd.f32 %v444, %v508
  %v550 = vadd.f32 %v447, %v508
  %v551 = vadd.f32 %v449, %v508
  %v552 = vadd.f32 %v452, %v508
  %v553 = vadd.f32 %v454, %v508
  %v554 = vadd.f32 %v457, %v508
  %v555 = vadd.f32 %v459, %v508
  %v556 = vadd.f32 %v462, %v508
  %v557 = vadd.f32 %v464, %v508
  %v558 = vadd.f32 %v467, %v508
  %v559 = vadd.f32 %v469, %v508
  %v560 = vadd.f32 %v472, %v508
  %v561 = vadd.f32 %v474, %v508
  %v562 = vadd.f32 %v477, %v508
  %v563 = vadd.f32 %v479, %v508
  %v564 = vadd.f32 %v482, %v508
  %v565 = vadd.f32 %v484, %v508
  %v566 = vadd.f32 %v487, %v508
  %v567 = vadd.f32 %v489, %v508
  %v568 = vadd.f32 %v492, %v508
  %v569 = vadd.f32 %v494, %v508
  %v570 = vadd.f32 %v497, %v508
  %v571 = vadd.f32 %v499, %v508
  %v572 = vadd.f32 %v502, %v508
  %v573 = vadd.f32 %v504, %v508
  %v574 = vpack.c.bf16 %v510, %v510
  %v575 = vpack.c.bf16 %v511, %v511
  %v576 = vpack.c.bf16 %v512, %v512
  %v577 = vpack.c.bf16 %v513, %v513
  %v578 = vpack.c.bf16 %v514, %v514
  %v579 = vpack.c.bf16 %v515, %v515
  %v580 = vpack.c.bf16 %v516, %v516
  %v581 = vpack.c.bf16 %v517, %v517
  %v582 = vpack.c.bf16 %v518, %v518
  %v583 = vpack.c.bf16 %v519, %v519
  %v584 = vpack.c.bf16 %v520, %v520
  %v585 = vpack.c.bf16 %v521, %v521
  %v586 = vpack.c.bf16 %v522, %v522
  %v587 = vpack.c.bf16 %v523, %v523
  %v588 = vpack.c.bf16 %v524, %v524
  %v589 = vpack.c.bf16 %v525, %v525
  %v590 = vpack.c.bf16 %v526, %v526
  %v591 = vpack.c.bf16 %v527, %v527
  %v592 = vpack.c.bf16 %v528, %v528
  %v593 = vpack.c.bf16 %v529, %v529
  %v594 = vpack.c.bf16 %v530, %v530
  %v595 = vpack.c.bf16 %v531, %v531
  %v596 = vpack.c.bf16 %v532, %v532
  %v597 = vpack.c.bf16 %v533, %v533
  %v598 = vpack.c.bf16 %v534, %v534
  %v599 = vpack.c.bf16 %v535, %v535
  %v600 = vpack.c.bf16 %v536, %v536
  %v601 = vpack.c.bf16 %v537, %v537
  %v602 = vpack.c.bf16 %v538, %v538
  %v603 = vpack.c.bf16 %v539, %v539
  %v604 = vpack.c.bf16 %v540, %v540
  %v605 = vpack.c.bf16 %v541, %v541
  %v606 = vpack.c.bf16 %v542, %v542
  %v607 = vpack.c.bf16 %v543, %v543
  %v608 = vpack.c.bf16 %v544, %v544
  %v609 = vpack.c.bf16 %v545, %v545
  %v610 = vpack.c.bf16 %v546, %v546
  %v611 = vpack.c.bf16 %v547, %v547
  %v612 = vpack.c.bf16 %v548, %v548
  %v613 = vpack.c.bf16 %v549, %v549
  %v614 = vpack.c.bf16 %v550, %v550
  %v615 = vpack.c.bf16 %v551, %v551
  %v616 = vpack.c.bf16 %v552, %v552
  %v617 = vpack.c.bf16 %v553, %v553
  %v618 = vpack.c.bf16 %v554, %v554
  %v619 = vpack.c.bf16 %v555, %v555
  %v620 = vpack.c.bf16 %v556, %v556
  %v621 = vpack.c.bf16 %v557, %v557
  %v622 = vpack.c.bf16 %v558, %v558
  %v623 = vpack.c.bf16 %v559, %v559
  %v624 = vpack.c.bf16 %v560, %v560
  %v625 = vpack.c.bf16 %v561, %v561
  %v626 = vpack.c.bf16 %v562, %v562
  %v627 = vpack.c.bf16 %v563, %v563
  %v628 = vpack.c.bf16 %v564, %v564
  %v629 = vpack.c.bf16 %v565, %v565
  %v630 = vpack.c.bf16 %v566, %v566
  %v631 = vpack.c.bf16 %v567, %v567
  %v632 = vpack.c.bf16 %v568, %v568
  %v633 = vpack.c.bf16 %v569, %v569
  %v634 = vpack.c.bf16 %v570, %v570
  %v635 = vpack.c.bf16 %v571, %v571
  %v636 = vpack.c.bf16 %v572, %v572
  %v637 = vpack.c.bf16 %v573, %v573
  %638 = vst [vmem:[%s3] sm:$0xf] %v574
  %639 = vst [vmem:[%s3 + $0x4] sm:$0xf] %v575
  %640 = vst [vmem:[%s3 + $0x8] sm:$0xf] %v576
  %641 = vst [vmem:[%s3 + $0xc] sm:$0xf] %v577
  %642 = vst [vmem:[%s3 + $0x10] sm:$0xf] %v578
  %643 = vst [vmem:[%s3 + $0x14] sm:$0xf] %v579
  %644 = vst [vmem:[%s3 + $0x18] sm:$0xf] %v580
  %645 = vst [vmem:[%s3 + $0x1c] sm:$0xf] %v581
  %646 = vst [vmem:[%s3 + $0x20] sm:$0xf] %v582
  %647 = vst [vmem:[%s3 + $0x24] sm:$0xf] %v583
  %648 = vst [vmem:[%s3 + $0x28] sm:$0xf] %v584
  %649 = vst [vmem:[%s3 + $0x2c] sm:$0xf] %v585
  %650 = vst [vmem:[%s3 + $0x30] sm:$0xf] %v586
  %651 = vst [vmem:[%s3 + $0x34] sm:$0xf] %v587
  %652 = vst [vmem:[%s3 + $0x38] sm:$0xf] %v588
  %653 = vst [vmem:[%s3 + $0x3c] sm:$0xf] %v589
  %654 = vst [vmem:[%s3 + $0x40] sm:$0xf] %v590
  %655 = vst [vmem:[%s3 + $0x44] sm:$0xf] %v591
  %656 = vst [vmem:[%s3 + $0x48] sm:$0xf] %v592
  %657 = vst [vmem:[%s3 + $0x4c] sm:$0xf] %v593
  %658 = vst [vmem:[%s3 + $0x50] sm:$0xf] %v594
  %659 = vst [vmem:[%s3 + $0x54] sm:$0xf] %v595
  %660 = vst [vmem:[%s3 + $0x58] sm:$0xf] %v596
  %661 = vst [vmem:[%s3 + $0x5c] sm:$0xf] %v597
  %662 = vst [vmem:[%s3 + $0x60] sm:$0xf] %v598
  %663 = vst [vmem:[%s3 + $0x64] sm:$0xf] %v599
  %664 = vst [vmem:[%s3 + $0x68] sm:$0xf] %v600
  %665 = vst [vmem:[%s3 + $0x6c] sm:$0xf] %v601
  %666 = vst [vmem:[%s3 + $0x70] sm:$0xf] %v602
  %667 = vst [vmem:[%s3 + $0x74] sm:$0xf] %v603
  %668 = vst [vmem:[%s3 + $0x78] sm:$0xf] %v604
  %669 = vst [vmem:[%s3 + $0x7c] sm:$0xf] %v605
  %670 = vst [vmem:[%s3 + $0x80] sm:$0xf] %v606
  %671 = vst [vmem:[%s3 + $0x84] sm:$0xf] %v607
  %672 = vst [vmem:[%s3 + $0x88] sm:$0xf] %v608
  %673 = vst [vmem:[%s3 + $0x8c] sm:$0xf] %v609
  %674 = vst [vmem:[%s3 + $0x90] sm:$0xf] %v610
  %675 = vst [vmem:[%s3 + $0x94] sm:$0xf] %v611
  %676 = vst [vmem:[%s3 + $0x98] sm:$0xf] %v612
  %677 = vst [vmem:[%s3 + $0x9c] sm:$0xf] %v613
  %678 = vst [vmem:[%s3 + $0xa0] sm:$0xf] %v614
  %679 = vst [vmem:[%s3 + $0xa4] sm:$0xf] %v615
  %680 = vst [vmem:[%s3 + $0xa8] sm:$0xf] %v616
  %681 = vst [vmem:[%s3 + $0xac] sm:$0xf] %v617
  %682 = vst [vmem:[%s3 + $0xb0] sm:$0xf] %v618
  %683 = vst [vmem:[%s3 + $0xb4] sm:$0xf] %v619
  %684 = vst [vmem:[%s3 + $0xb8] sm:$0xf] %v620
  %685 = vst [vmem:[%s3 + $0xbc] sm:$0xf] %v621
  %686 = vst [vmem:[%s3 + $0xc0] sm:$0xf] %v622
  %687 = vst [vmem:[%s3 + $0xc4] sm:$0xf] %v623
  %688 = vst [vmem:[%s3 + $0xc8] sm:$0xf] %v624
  %689 = vst [vmem:[%s3 + $0xcc] sm:$0xf] %v625
  %690 = vst [vmem:[%s3 + $0xd0] sm:$0xf] %v626
  %691 = vst [vmem:[%s3 + $0xd4] sm:$0xf] %v627
  %692 = vst [vmem:[%s3 + $0xd8] sm:$0xf] %v628
  %693 = vst [vmem:[%s3 + $0xdc] sm:$0xf] %v629
  %694 = vst [vmem:[%s3 + $0xe0] sm:$0xf] %v630
  %695 = vst [vmem:[%s3 + $0xe4] sm:$0xf] %v631
  %696 = vst [vmem:[%s3 + $0xe8] sm:$0xf] %v632
  %697 = vst [vmem:[%s3 + $0xec] sm:$0xf] %v633
  %698 = vst [vmem:[%s3 + $0xf0] sm:$0xf] %v634
  %699 = vst [vmem:[%s3 + $0xf4] sm:$0xf] %v635
  %700 = vst [vmem:[%s3 + $0xf8] sm:$0xf] %v636
  %701 = vst [vmem:[%s3 + $0xfc] sm:$0xf] %v637
  %v702 = vadd.f32 %v347, %v349
  %v703 = vadd.f32 %v702, %v352
  %v704 = vadd.f32 %v703, %v354
  %v705 = vadd.f32 %v704, %v357
  %v706 = vadd.f32 %v705, %v359
  %v707 = vadd.f32 %v706, %v362
  %v708 = vadd.f32 %v707, %v364
  %v709 = vadd.f32 %v708, %v367
  %v710 = vadd.f32 %v709, %v369
  %v711 = vadd.f32 %v710, %v372
  %v712 = vadd.f32 %v711, %v374
  %v713 = vadd.f32 %v712, %v377
  %v714 = vadd.f32 %v713, %v379
  %v715 = vadd.f32 %v714, %v382
  %v716 = vadd.f32 %v715, %v384
  %v717 = vadd.f32 %v716, %v387
  %v718 = vadd.f32 %v717, %v389
  %v719 = vadd.f32 %v718, %v392
  %v720 = vadd.f32 %v719, %v394
  %v721 = vadd.f32 %v720, %v397
  %v722 = vadd.f32 %v721, %v399
  %v723 = vadd.f32 %v722, %v402
  %v724 = vadd.f32 %v723, %v404
  %v725 = vadd.f32 %v724, %v407
  %v726 = vadd.f32 %v725, %v409
  %v727 = vadd.f32 %v726, %v412
  %v728 = vadd.f32 %v727, %v414
  %v729 = vadd.f32 %v728, %v417
  %v730 = vadd.f32 %v729, %v419
  %v731 = vadd.f32 %v730, %v422
  %v732 = vadd.f32 %v731, %v424
  %v733 = vadd.f32 %v732, %v427
  %v734 = vadd.f32 %v733, %v429
  %v735 = vadd.f32 %v734, %v432
  %v736 = vadd.f32 %v735, %v434
  %v737 = vadd.f32 %v736, %v437
  %v738 = vadd.f32 %v737, %v439
  %v739 = vadd.f32 %v738, %v442
  %v740 = vadd.f32 %v739, %v444
  %v741 = vadd.f32 %v740, %v447
  %v742 = vadd.f32 %v741, %v449
  %v743 = vadd.f32 %v742, %v452
  %v744 = vadd.f32 %v743, %v454
  %v745 = vadd.f32 %v744, %v457
  %v746 = vadd.f32 %v745, %v459
  %v747 = vadd.f32 %v746, %v462
  %v748 = vadd.f32 %v747, %v464
  %v749 = vadd.f32 %v748, %v467
  %v750 = vadd.f32 %v749, %v469
  %v751 = vadd.f32 %v750, %v472
  %v752 = vadd.f32 %v751, %v474
  %v753 = vadd.f32 %v752, %v477
  %v754 = vadd.f32 %v753, %v479
  %v755 = vadd.f32 %v754, %v482
  %v756 = vadd.f32 %v755, %v484
  %v757 = vadd.f32 %v756, %v487
  %v758 = vadd.f32 %v757, %v489
  %v759 = vadd.f32 %v758, %v492
  %v760 = vadd.f32 %v759, %v494
  %v761 = vadd.f32 %v760, %v497
  %v762 = vadd.f32 %v761, %v499
  %v763 = vadd.f32 %v762, %v502
  %v764 = vadd.f32 %v763, %v504
  %v765 = vrot.slane %v764, 4
  %v766 = vadd.f32 %v764, %v765
  %v767 = vrot.slane %v766, 2
  %v768 = vadd.f32 %v766, %v767
  %v769 = vrot.slane %v768, 1
  %v770 = vadd.f32 %v768, %v769
  %771 = vst [vmem:[%s4] sm:$0x1] %v770
  %v772 = vmul.f32 %v347, %v347
  %v773 = vmul.f32 %v349, %v349
  %v774 = vmul.f32 %v352, %v352
  %v775 = vmul.f32 %v354, %v354
  %v776 = vmul.f32 %v357, %v357
  %v777 = vmul.f32 %v359, %v359
  %v778 = vmul.f32 %v362, %v362
  %v779 = vmul.f32 %v364, %v364
  %v780 = vmul.f32 %v367, %v367
  %v781 = vmul.f32 %v369, %v369
  %v782 = vmul.f32 %v372, %v372
  %v783 = vmul.f32 %v374, %v374
  %v784 = vmul.f32 %v377, %v377
  %v785 = vmul.f32 %v379, %v379
  %v786 = vmul.f32 %v382, %v382
  %v787 = vmul.f32 %v384, %v384
  %v788 = vmul.f32 %v387, %v387
  %v789 = vmul.f32 %v389, %v389
  %v790 = vmul.f32 %v392, %v392
  %v791 = vmul.f32 %v394, %v394
  %v792 = vmul.f32 %v397, %v397
  %v793 = vmul.f32 %v399, %v399
  %v794 = vmul.f32 %v402, %v402
  %v795 = vmul.f32 %v404, %v404
  %v796 = vmul.f32 %v407, %v407
  %v797 = vmul.f32 %v409, %v409
  %v798 = vmul.f32 %v412, %v412
  %v799 = vmul.f32 %v414, %v414
  %v800 = vmul.f32 %v417, %v417
  %v801 = vmul.f32 %v419, %v419
  %v802 = vmul.f32 %v422, %v422
  %v803 = vmul.f32 %v424, %v424
  %v804 = vmul.f32 %v427, %v427
  %v805 = vmul.f32 %v429, %v429
  %v806 = vmul.f32 %v432, %v432
  %v807 = vmul.f32 %v434, %v434
  %v808 = vmul.f32 %v437, %v437
  %v809 = vmul.f32 %v439, %v439
  %v810 = vmul.f32 %v442, %v442
  %v811 = vmul.f32 %v444, %v444
  %v812 = vmul.f32 %v447, %v447
  %v813 = vmul.f32 %v449, %v449
  %v814 = vmul.f32 %v452, %v452
  %v815 = vmul.f32 %v454, %v454
  %v816 = vmul.f32 %v457, %v457
  %v817 = vmul.f32 %v459, %v459
  %v818 = vmul.f32 %v462, %v462
  %v819 = vmul.f32 %v464, %v464
  %v820 = vmul.f32 %v467, %v467
  %v821 = vmul.f32 %v469, %v469
  %v822 = vmul.f32 %v472, %v472
  %v823 = vmul.f32 %v474, %v474
  %v824 = vmul.f32 %v477, %v477
  %v825 = vmul.f32 %v479, %v479
  %v826 = vmul.f32 %v482, %v482
  %v827 = vmul.f32 %v484, %v484
  %v828 = vmul.f32 %v487, %v487
  %v829 = vmul.f32 %v489, %v489
  %v830 = vmul.f32 %v492, %v492
  %v831 = vmul.f32 %v494, %v494
  %v832 = vmul.f32 %v497, %v497
  %v833 = vmul.f32 %v499, %v499
  %v834 = vmul.f32 %v502, %v502
  %v835 = vmul.f32 %v504, %v504
  %v836 = vadd.f32 %v772, %v773
  %v837 = vadd.f32 %v836, %v774
  %v838 = vadd.f32 %v837, %v775
  %v839 = vadd.f32 %v838, %v776
  %v840 = vadd.f32 %v839, %v777
  %v841 = vadd.f32 %v840, %v778
  %v842 = vadd.f32 %v841, %v779
  %v843 = vadd.f32 %v842, %v780
  %v844 = vadd.f32 %v843, %v781
  %v845 = vadd.f32 %v844, %v782
  %v846 = vadd.f32 %v845, %v783
  %v847 = vadd.f32 %v846, %v784
  %v848 = vadd.f32 %v847, %v785
  %v849 = vadd.f32 %v848, %v786
  %v850 = vadd.f32 %v849, %v787
  %v851 = vadd.f32 %v850, %v788
  %v852 = vadd.f32 %v851, %v789
  %v853 = vadd.f32 %v852, %v790
  %v854 = vadd.f32 %v853, %v791
  %v855 = vadd.f32 %v854, %v792
  %v856 = vadd.f32 %v855, %v793
  %v857 = vadd.f32 %v856, %v794
  %v858 = vadd.f32 %v857, %v795
  %v859 = vadd.f32 %v858, %v796
  %v860 = vadd.f32 %v859, %v797
  %v861 = vadd.f32 %v860, %v798
  %v862 = vadd.f32 %v861, %v799
  %v863 = vadd.f32 %v862, %v800
  %v864 = vadd.f32 %v863, %v801
  %v865 = vadd.f32 %v864, %v802
  %v866 = vadd.f32 %v865, %v803
  %v867 = vadd.f32 %v866, %v804
  %v868 = vadd.f32 %v867, %v805
  %v869 = vadd.f32 %v868, %v806
  %v870 = vadd.f32 %v869, %v807
  %v871 = vadd.f32 %v870, %v808
  %v872 = vadd.f32 %v871, %v809
  %v873 = vadd.f32 %v872, %v810
  %v874 = vadd.f32 %v873, %v811
  %v875 = vadd.f32 %v874, %v812
  %v876 = vadd.f32 %v875, %v813
  %v877 = vadd.f32 %v876, %v814
  %v878 = vadd.f32 %v877, %v815
  %v879 = vadd.f32 %v878, %v816
  %v880 = vadd.f32 %v879, %v817
  %v881 = vadd.f32 %v880, %v818
  %v882 = vadd.f32 %v881, %v819
  %v883 = vadd.f32 %v882, %v820
  %v884 = vadd.f32 %v883, %v821
  %v885 = vadd.f32 %v884, %v822
  %v886 = vadd.f32 %v885, %v823
  %v887 = vadd.f32 %v886, %v824
  %v888 = vadd.f32 %v887, %v825
  %v889 = vadd.f32 %v888, %v826
  %v890 = vadd.f32 %v889, %v827
  %v891 = vadd.f32 %v890, %v828
  %v892 = vadd.f32 %v891, %v829
  %v893 = vadd.f32 %v892, %v830
  %v894 = vadd.f32 %v893, %v831
  %v895 = vadd.f32 %v894, %v832
  %v896 = vadd.f32 %v895, %v833
  %v897 = vadd.f32 %v896, %v834
  %v898 = vadd.f32 %v897, %v835
  %v899 = vrot.slane %v898, 4
  %v900 = vadd.f32 %v898, %v899
  %v901 = vrot.slane %v900, 2
  %v902 = vadd.f32 %v900, %v901
  %v903 = vrot.slane %v902, 1
  %v904 = vadd.f32 %v902, %v903
  %905 = vst [vmem:[%s5] sm:$0x1] %v904
  // Predicated region
  $region14: #{discriminator_forward.9} parent=0 // pred_check
    _
  $region15: #{discriminator_forward.9} parent=0 // pred_check_branch
    %907 = sbr.rel (0) target = $region17
  $region16: #{discriminator_forward.9} parent=0 // pred_region
    _
  $region17: #{discriminator_forward.9} parent=0 // pred_fallthru
    _
  // Predicated region
  $region18: #{discriminator_forward.9} parent=0 // pred_check
    _
  $region19: #{discriminator_forward.9} parent=0 // pred_check_branch
    %909 = sbr.rel (0) target = $region21
  $region20: #{discriminator_forward.9} parent=0 // pred_region
    _
  $region21: #{discriminator_forward.9} parent=0 // pred_fallthru
    _
  // Predicated region
  $region22: #{discriminator_forward.9} parent=0 // pred_check
    _
  $region23: #{discriminator_forward.9} parent=0 // pred_check_branch
    %911 = sbr.rel (0) target = $region25
  $region24: #{discriminator_forward.9} parent=0 // pred_region
    _
  $region25: #{discriminator_forward.9} parent=0 // pred_fallthru
    _
  // Predicated region
  $region26: #{discriminator_forward.9} parent=0 // pred_check
    _
  $region27: #{discriminator_forward.9} parent=0 // pred_check_branch
    %913 = sbr.rel (0) target = $region29
  $region28: #{discriminator_forward.9} parent=0 // pred_region
    _
  $region29: #{discriminator_forward.9} parent=0 // pred_fallthru
    _
  // Predicated region
  $region30: #{discriminator_forward.9} parent=0 // pred_check
    _
  $region31: #{discriminator_forward.9} parent=0 // pred_check_branch
    %915 = sbr.rel (0) target = $region33
  $region32: #{discriminator_forward.9} parent=0 // pred_region
    _
  $region33: #{discriminator_forward.9} parent=0 // pred_fallthru
    _
  // Predicated region
  $region34: #{discriminator_forward.9} parent=0 // pred_check
    _
  $region35: #{discriminator_forward.9} parent=0 // pred_check_branch
    %917 = sbr.rel (0) target = $region37
  $region36: #{discriminator_forward.9} parent=0 // pred_region
    _
  $region37: #{discriminator_forward.9} parent=0 // pred_fallthru
    _

// kernel: discriminator_forward.11
$region0: #{discriminator_forward.11}
  #allocation0 [shape = 'u32[]', space=smem, size = 0x4, offset = 0x4, fixed_abs, tag = 'smem constant byte address 0x4 - core index']
  #allocation1 [shape = 'u32[72,128]{1,0:T(1,128)}', space=vmem, size = 0x9000, scoped, tag = 'internal scratch']
  %s0 = inlined_call_operand.vmem [shape: bf16[128,256], index: 0, kind: input, shape index: {}]
  %s1 = inlined_call_operand.vmem [shape: bf16[256,128], index: 1, kind: input, shape index: {}]
  %s2 = inlined_call_operand.vmem [shape: f32[1,128], index: 2, kind: input, shape index: {}]
  %s3 = inlined_call_operand.vmem [shape: bf16[128,128], index: 3, kind: output, shape index: {0}]
  %s4 = inlined_call_operand.vmem [shape: f32[1,128], index: 4, kind: output, shape index: {1}]
  %s5 = inlined_call_operand.vmem [shape: f32[1,128], index: 5, kind: output, shape index: {2}]
  %6 = xla_tuple %s3, %s4, %s5
  %s7 = sld [smem:[#allocation0]]
  $region38: #{discriminator_forward.11} parent=0
    _
  %s9 = ssub.s32 1, %s7
  %s10 = scalar_select 0, %s9, %s7
  // Predicated region
  $region2: #{discriminator_forward.11} parent=0 // pred_check
    _
  $region3: #{discriminator_forward.11} parent=0 // pred_check_branch
    %12 = sbr.rel (0) target = $region5
  $region4: #{discriminator_forward.11} parent=0 // pred_region
    _
  $region5: #{discriminator_forward.11} parent=0 // pred_fallthru
    _
  // Predicated region
  $region6: #{discriminator_forward.11} parent=0 // pred_check
    _
  $region7: #{discriminator_forward.11} parent=0 // pred_check_branch
    %14 = sbr.rel (0) target = $region9
  $region8: #{discriminator_forward.11} parent=0 // pred_region
    _
  $region9: #{discriminator_forward.11} parent=0 // pred_fallthru
    _
  // Predicated region
  $region10: #{discriminator_forward.11} parent=0 // pred_check
    _
  $region11: #{discriminator_forward.11} parent=0 // pred_check_branch
    %16 = sbr.rel (0) target = $region13
  $region12: #{discriminator_forward.11} parent=0 // pred_region
    _
  $region13: #{discriminator_forward.11} parent=0 // pred_fallthru
    _
  %v17 = vld [vmem:[%s0] sm:$0xff]
  %v18 = vld [vmem:[%s0 + $0x8] sm:$0xff]
  %v19 = vld [vmem:[%s0 + $0x10] sm:$0xff]
  %v20 = vld [vmem:[%s0 + $0x18] sm:$0xff]
  %v21 = vld [vmem:[%s0 + $0x20] sm:$0xff]
  %v22 = vld [vmem:[%s0 + $0x28] sm:$0xff]
  %v23 = vld [vmem:[%s0 + $0x30] sm:$0xff]
  %v24 = vld [vmem:[%s0 + $0x38] sm:$0xff]
  %v25 = vld [vmem:[%s0 + $0x40] sm:$0xff]
  %v26 = vld [vmem:[%s0 + $0x48] sm:$0xff]
  %v27 = vld [vmem:[%s0 + $0x50] sm:$0xff]
  %v28 = vld [vmem:[%s0 + $0x58] sm:$0xff]
  %v29 = vld [vmem:[%s0 + $0x60] sm:$0xff]
  %v30 = vld [vmem:[%s0 + $0x68] sm:$0xff]
  %v31 = vld [vmem:[%s0 + $0x70] sm:$0xff]
  %v32 = vld [vmem:[%s0 + $0x78] sm:$0xff]
  %v33 = vld [vmem:[%s1] sm:$0xf]
  %v34 = vld [vmem:[%s1 + $0x4] sm:$0xf]
  %v35 = vld [vmem:[%s1 + $0x8] sm:$0xf]
  %v36 = vld [vmem:[%s1 + $0xc] sm:$0xf]
  %v37 = vld [vmem:[%s1 + $0x10] sm:$0xf]
  %v38 = vld [vmem:[%s1 + $0x14] sm:$0xf]
  %v39 = vld [vmem:[%s1 + $0x18] sm:$0xf]
  %v40 = vld [vmem:[%s1 + $0x1c] sm:$0xf]
  %v41 = vld [vmem:[%s1 + $0x20] sm:$0xf]
  %v42 = vld [vmem:[%s1 + $0x24] sm:$0xf]
  %v43 = vld [vmem:[%s1 + $0x28] sm:$0xf]
  %v44 = vld [vmem:[%s1 + $0x2c] sm:$0xf]
  %v45 = vld [vmem:[%s1 + $0x30] sm:$0xf]
  %v46 = vld [vmem:[%s1 + $0x34] sm:$0xf]
  %v47 = vld [vmem:[%s1 + $0x38] sm:$0xf]
  %v48 = vld [vmem:[%s1 + $0x3c] sm:$0xf]
  %v49 = vld [vmem:[%s1 + $0x40] sm:$0xf]
  %v50 = vld [vmem:[%s1 + $0x44] sm:$0xf]
  %v51 = vld [vmem:[%s1 + $0x48] sm:$0xf]
  %v52 = vld [vmem:[%s1 + $0x4c] sm:$0xf]
  %v53 = vld [vmem:[%s1 + $0x50] sm:$0xf]
  %v54 = vld [vmem:[%s1 + $0x54] sm:$0xf]
  %v55 = vld [vmem:[%s1 + $0x58] sm:$0xf]
  %v56 = vld [vmem:[%s1 + $0x5c] sm:$0xf]
  %v57 = vld [vmem:[%s1 + $0x60] sm:$0xf]
  %v58 = vld [vmem:[%s1 + $0x64] sm:$0xf]
  %v59 = vld [vmem:[%s1 + $0x68] sm:$0xf]
  %v60 = vld [vmem:[%s1 + $0x6c] sm:$0xf]
  %v61 = vld [vmem:[%s1 + $0x70] sm:$0xf]
  %v62 = vld [vmem:[%s1 + $0x74] sm:$0xf]
  %v63 = vld [vmem:[%s1 + $0x78] sm:$0xf]
  %v64 = vld [vmem:[%s1 + $0x7c] sm:$0xf]
  %v81 = vunpack.c.l.b16 %v17
  %v82 = vunpack.c.h.b16 %v17
  %v83 = vunpack.c.l.b16 %v18
  %v84 = vunpack.c.h.b16 %v18
  %v85 = vunpack.c.l.b16 %v19
  %v86 = vunpack.c.h.b16 %v19
  %v87 = vunpack.c.l.b16 %v20
  %v88 = vunpack.c.h.b16 %v20
  %v89 = vunpack.c.l.b16 %v21
  %v90 = vunpack.c.h.b16 %v21
  %v91 = vunpack.c.l.b16 %v22
  %v92 = vunpack.c.h.b16 %v22
  %v93 = vunpack.c.l.b16 %v23
  %v94 = vunpack.c.h.b16 %v23
  %v95 = vunpack.c.l.b16 %v24
  %v96 = vunpack.c.h.b16 %v24
  %v97 = vunpack.c.l.b16 %v25
  %v98 = vunpack.c.h.b16 %v25
  %v99 = vunpack.c.l.b16 %v26
  %v100 = vunpack.c.h.b16 %v26
  %v101 = vunpack.c.l.b16 %v27
  %v102 = vunpack.c.h.b16 %v27
  %v103 = vunpack.c.l.b16 %v28
  %v104 = vunpack.c.h.b16 %v28
  %v105 = vunpack.c.l.b16 %v29
  %v106 = vunpack.c.h.b16 %v29
  %v107 = vunpack.c.l.b16 %v30
  %v108 = vunpack.c.h.b16 %v30
  %v109 = vunpack.c.l.b16 %v31
  %v110 = vunpack.c.h.b16 %v31
  %v111 = vunpack.c.l.b16 %v32
  %v112 = vunpack.c.h.b16 %v32
  %v113 = vpack.c.b16 %v83, %v81
  %v114 = vpack.c.b16 %v84, %v82
  %v115 = vpack.c.b16 %v87, %v85
  %v116 = vpack.c.b16 %v88, %v86
  %v117 = vpack.c.b16 %v91, %v89
  %v118 = vpack.c.b16 %v92, %v90
  %v119 = vpack.c.b16 %v95, %v93
  %v120 = vpack.c.b16 %v96, %v94
  %v121 = vpack.c.b16 %v99, %v97
  %v122 = vpack.c.b16 %v100, %v98
  %v123 = vpack.c.b16 %v103, %v101
  %v124 = vpack.c.b16 %v104, %v102
  %v125 = vpack.c.b16 %v107, %v105
  %v126 = vpack.c.b16 %v108, %v106
  %v127 = vpack.c.b16 %v111, %v109
  %v128 = vpack.c.b16 %v112, %v110
  %v177 = vunpack.c.l.b16 %v33
  %v178 = vunpack.c.l.b16 %v34
  %v179 = vunpack.c.l.b16 %v35
  %v180 = vunpack.c.l.b16 %v36
  %v181 = vunpack.c.l.b16 %v37
  %v182 = vunpack.c.l.b16 %v38
  %v183 = vunpack.c.l.b16 %v39
  %v184 = vunpack.c.l.b16 %v40
  %v185 = vunpack.c.l.b16 %v41
  %v186 = vunpack.c.l.b16 %v42
  %v187 = vunpack.c.l.b16 %v43
  %v188 = vunpack.c.l.b16 %v44
  %v189 = vunpack.c.l.b16 %v45
  %v190 = vunpack.c.l.b16 %v46
  %v191 = vunpack.c.l.b16 %v47
  %v192 = vunpack.c.l.b16 %v48
  %v193 = vunpack.c.l.b16 %v49
  %v194 = vunpack.c.l.b16 %v50
  %v195 = vunpack.c.l.b16 %v51
  %v196 = vunpack.c.l.b16 %v52
  %v197 = vunpack.c.l.b16 %v53
  %v198 = vunpack.c.l.b16 %v54
  %v199 = vunpack.c.l.b16 %v55
  %v200 = vunpack.c.l.b16 %v56
  %v201 = vunpack.c.l.b16 %v57
  %v202 = vunpack.c.l.b16 %v58
  %v203 = vunpack.c.l.b16 %v59
  %v204 = vunpack.c.l.b16 %v60
  %v205 = vunpack.c.l.b16 %v61
  %v206 = vunpack.c.l.b16 %v62
  %v207 = vunpack.c.l.b16 %v63
  %v208 = vunpack.c.l.b16 %v64
  %v209 = vpack.c.b16 %v178, %v177
  %v210 = vpack.c.b16 %v180, %v179
  %v211 = vpack.c.b16 %v182, %v181
  %v212 = vpack.c.b16 %v184, %v183
  %v213 = vpack.c.b16 %v186, %v185
  %v214 = vpack.c.b16 %v188, %v187
  %v215 = vpack.c.b16 %v190, %v189
  %v216 = vpack.c.b16 %v192, %v191
  %v217 = vpack.c.b16 %v194, %v193
  %v218 = vpack.c.b16 %v196, %v195
  %v219 = vpack.c.b16 %v198, %v197
  %v220 = vpack.c.b16 %v200, %v199
  %v221 = vpack.c.b16 %v202, %v201
  %v222 = vpack.c.b16 %v204, %v203
  %v223 = vpack.c.b16 %v206, %v205
  %v224 = vpack.c.b16 %v208, %v207
  %241 = vmatpush.bf16.msra.mxu0 %v216
  %242 = vmatpush.bf16.msra.mxu0 %v215
  %243 = vmatpush.bf16.msra.mxu0 %v214
  %244 = vmatpush.bf16.msra.mxu0 %v213
  %245 = vmatpush.bf16.msra.mxu0 %v212
  %246 = vmatpush.bf16.msra.mxu0 %v211
  %247 = vmatpush.bf16.msra.mxu0 %v210
  %248 = vmatpush.bf16.msra.mxu0 %v209
  %249 = vmatmul.bf16.gmra.mxu0 %v113
  %v250 = vpop.f32.mrf.mxu0
  %v251 = vadd.f32 0.0, %v250
  %v252 = vpop.f32.mrf.mxu0
  %v253 = vadd.f32 0.0, %v252
  %254 = vmatmul.bf16.gmra.mxu0 %v115
  %v255 = vpop.f32.mrf.mxu0
  %v256 = vadd.f32 0.0, %v255
  %v257 = vpop.f32.mrf.mxu0
  %v258 = vadd.f32 0.0, %v257
  %259 = vmatmul.bf16.gmra.mxu0 %v117
  %v260 = vpop.f32.mrf.mxu0
  %v261 = vadd.f32 0.0, %v260
  %v262 = vpop.f32.mrf.mxu0
  %v263 = vadd.f32 0.0, %v262
  %264 = vmatmul.bf16.gmra.mxu0 %v119
  %v265 = vpop.f32.mrf.mxu0
  %v266 = vadd.f32 0.0, %v265
  %v267 = vpop.f32.mrf.mxu0
  %v268 = vadd.f32 0.0, %v267
  %269 = vmatmul.bf16.gmra.mxu0 %v121
  %v270 = vpop.f32.mrf.mxu0
  %v271 = vadd.f32 0.0, %v270
  %v272 = vpop.f32.mrf.mxu0
  %v273 = vadd.f32 0.0, %v272
  %274 = vmatmul.bf16.gmra.mxu0 %v123
  %v275 = vpop.f32.mrf.mxu0
  %v276 = vadd.f32 0.0, %v275
  %v277 = vpop.f32.mrf.mxu0
  %v278 = vadd.f32 0.0, %v277
  %279 = vmatmul.bf16.gmra.mxu0 %v125
  %v280 = vpop.f32.mrf.mxu0
  %v281 = vadd.f32 0.0, %v280
  %v282 = vpop.f32.mrf.mxu0
  %v283 = vadd.f32 0.0, %v282
  %284 = vmatmul.bf16.gmra.mxu0 %v127
  %v285 = vpop.f32.mrf.mxu0
  %v286 = vadd.f32 0.0, %v285
  %v287 = vpop.f32.mrf.mxu0
  %v288 = vadd.f32 0.0, %v287
  %289 = vdwg.mxu0
  %290 = vmatpush.bf16.msra.mxu0 %v224
  %291 = vmatpush.bf16.msra.mxu0 %v223
  %292 = vmatpush.bf16.msra.mxu0 %v222
  %293 = vmatpush.bf16.msra.mxu0 %v221
  %294 = vmatpush.bf16.msra.mxu0 %v220
  %295 = vmatpush.bf16.msra.mxu0 %v219
  %296 = vmatpush.bf16.msra.mxu0 %v218
  %297 = vmatpush.bf16.msra.mxu0 %v217
  %298 = vmatmul.bf16.gmra.mxu0 %v114
  %v299 = vpop.f32.mrf.mxu0
  %v300 = vadd.f32 %v251, %v299
  %v301 = vpop.f32.mrf.mxu0
  %v302 = vadd.f32 %v253, %v301
  %303 = vmatmul.bf16.gmra.mxu0 %v116
  %v304 = vpop.f32.mrf.mxu0
  %v305 = vadd.f32 %v256, %v304
  %v306 = vpop.f32.mrf.mxu0
  %v307 = vadd.f32 %v258, %v306
  %308 = vmatmul.bf16.gmra.mxu0 %v118
  %v309 = vpop.f32.mrf.mxu0
  %v310 = vadd.f32 %v261, %v309
  %v311 = vpop.f32.mrf.mxu0
  %v312 = vadd.f32 %v263, %v311
  %313 = vmatmul.bf16.gmra.mxu0 %v120
  %v314 = vpop.f32.mrf.mxu0
  %v315 = vadd.f32 %v266, %v314
  %v316 = vpop.f32.mrf.mxu0
  %v317 = vadd.f32 %v268, %v316
  %318 = vmatmul.bf16.gmra.mxu0 %v122
  %v319 = vpop.f32.mrf.mxu0
  %v320 = vadd.f32 %v271, %v319
  %v321 = vpop.f32.mrf.mxu0
  %v322 = vadd.f32 %v273, %v321
  %323 = vmatmul.bf16.gmra.mxu0 %v124
  %v324 = vpop.f32.mrf.mxu0
  %v325 = vadd.f32 %v276, %v324
  %v326 = vpop.f32.mrf.mxu0
  %v327 = vadd.f32 %v278, %v326
  %328 = vmatmul.bf16.gmra.mxu0 %v126
  %v329 = vpop.f32.mrf.mxu0
  %v330 = vadd.f32 %v281, %v329
  %v331 = vpop.f32.mrf.mxu0
  %v332 = vadd.f32 %v283, %v331
  %333 = vmatmul.bf16.gmra.mxu0 %v128
  %v334 = vpop.f32.mrf.mxu0
  %v335 = vadd.f32 %v286, %v334
  %v336 = vpop.f32.mrf.mxu0
  %v337 = vadd.f32 %v288, %v336
  %338 = vdwg.mxu0
  %v339 = vld [vmem:[%s2] sm:$0x1]
  %v341 = vperm.slane %v339, 0
  %v343 = vadd.f32 %v300, %v341
  %v344 = vadd.f32 %v302, %v341
  %v345 = vadd.f32 %v305, %v341
  %v346 = vadd.f32 %v307, %v341
  %v347 = vadd.f32 %v310, %v341
  %v348 = vadd.f32 %v312, %v341
  %v349 = vadd.f32 %v315, %v341
  %v350 = vadd.f32 %v317, %v341
  %v351 = vadd.f32 %v320, %v341
  %v352 = vadd.f32 %v322, %v341
  %v353 = vadd.f32 %v325, %v341
  %v354 = vadd.f32 %v327, %v341
  %v355 = vadd.f32 %v330, %v341
  %v356 = vadd.f32 %v332, %v341
  %v357 = vadd.f32 %v335, %v341
  %v358 = vadd.f32 %v337, %v341
  %v359 = vpack.c.bf16 %v343, %v343
  %v360 = vpack.c.bf16 %v344, %v344
  %v361 = vpack.c.bf16 %v345, %v345
  %v362 = vpack.c.bf16 %v346, %v346
  %v363 = vpack.c.bf16 %v347, %v347
  %v364 = vpack.c.bf16 %v348, %v348
  %v365 = vpack.c.bf16 %v349, %v349
  %v366 = vpack.c.bf16 %v350, %v350
  %v367 = vpack.c.bf16 %v351, %v351
  %v368 = vpack.c.bf16 %v352, %v352
  %v369 = vpack.c.bf16 %v353, %v353
  %v370 = vpack.c.bf16 %v354, %v354
  %v371 = vpack.c.bf16 %v355, %v355
  %v372 = vpack.c.bf16 %v356, %v356
  %v373 = vpack.c.bf16 %v357, %v357
  %v374 = vpack.c.bf16 %v358, %v358
  %375 = vst [vmem:[%s3] sm:$0xf] %v359
  %376 = vst [vmem:[%s3 + $0x4] sm:$0xf] %v360
  %377 = vst [vmem:[%s3 + $0x8] sm:$0xf] %v361
  %378 = vst [vmem:[%s3 + $0xc] sm:$0xf] %v362
  %379 = vst [vmem:[%s3 + $0x10] sm:$0xf] %v363
  %380 = vst [vmem:[%s3 + $0x14] sm:$0xf] %v364
  %381 = vst [vmem:[%s3 + $0x18] sm:$0xf] %v365
  %382 = vst [vmem:[%s3 + $0x1c] sm:$0xf] %v366
  %383 = vst [vmem:[%s3 + $0x20] sm:$0xf] %v367
  %384 = vst [vmem:[%s3 + $0x24] sm:$0xf] %v368
  %385 = vst [vmem:[%s3 + $0x28] sm:$0xf] %v369
  %386 = vst [vmem:[%s3 + $0x2c] sm:$0xf] %v370
  %387 = vst [vmem:[%s3 + $0x30] sm:$0xf] %v371
  %388 = vst [vmem:[%s3 + $0x34] sm:$0xf] %v372
  %389 = vst [vmem:[%s3 + $0x38] sm:$0xf] %v373
  %390 = vst [vmem:[%s3 + $0x3c] sm:$0xf] %v374
  %v391 = vadd.f32 %v300, %v302
  %v392 = vadd.f32 %v391, %v305
  %v393 = vadd.f32 %v392, %v307
  %v394 = vadd.f32 %v393, %v310
  %v395 = vadd.f32 %v394, %v312
  %v396 = vadd.f32 %v395, %v315
  %v397 = vadd.f32 %v396, %v317
  %v398 = vadd.f32 %v397, %v320
  %v399 = vadd.f32 %v398, %v322
  %v400 = vadd.f32 %v399, %v325
  %v401 = vadd.f32 %v400, %v327
  %v402 = vadd.f32 %v401, %v330
  %v403 = vadd.f32 %v402, %v332
  %v404 = vadd.f32 %v403, %v335
  %v405 = vadd.f32 %v404, %v337
  %v406 = vrot.slane %v405, 4
  %v407 = vadd.f32 %v405, %v406
  %v408 = vrot.slane %v407, 2
  %v409 = vadd.f32 %v407, %v408
  %v410 = vrot.slane %v409, 1
  %v411 = vadd.f32 %v409, %v410
  %412 = vst [vmem:[%s4] sm:$0x1] %v411
  %v413 = vmul.f32 %v300, %v300
  %v414 = vmul.f32 %v302, %v302
  %v415 = vmul.f32 %v305, %v305
  %v416 = vmul.f32 %v307, %v307
  %v417 = vmul.f32 %v310, %v310
  %v418 = vmul.f32 %v312, %v312
  %v419 = vmul.f32 %v315, %v315
  %v420 = vmul.f32 %v317, %v317
  %v421 = vmul.f32 %v320, %v320
  %v422 = vmul.f32 %v322, %v322
  %v423 = vmul.f32 %v325, %v325
  %v424 = vmul.f32 %v327, %v327
  %v425 = vmul.f32 %v330, %v330
  %v426 = vmul.f32 %v332, %v332
  %v427 = vmul.f32 %v335, %v335
  %v428 = vmul.f32 %v337, %v337
  %v429 = vadd.f32 %v413, %v414
  %v430 = vadd.f32 %v429, %v415
  %v431 = vadd.f32 %v430, %v416
  %v432 = vadd.f32 %v431, %v417
  %v433 = vadd.f32 %v432, %v418
  %v434 = vadd.f32 %v433, %v419
  %v435 = vadd.f32 %v434, %v420
  %v436 = vadd.f32 %v435, %v421
  %v437 = vadd.f32 %v436, %v422
  %v438 = vadd.f32 %v437, %v423
  %v439 = vadd.f32 %v438, %v424
  %v440 = vadd.f32 %v439, %v425
  %v441 = vadd.f32 %v440, %v426
  %v442 = vadd.f32 %v441, %v427
  %v443 = vadd.f32 %v442, %v428
  %v444 = vrot.slane %v443, 4
  %v445 = vadd.f32 %v443, %v444
  %v446 = vrot.slane %v445, 2
  %v447 = vadd.f32 %v445, %v446
  %v448 = vrot.slane %v447, 1
  %v449 = vadd.f32 %v447, %v448
  %450 = vst [vmem:[%s5] sm:$0x1] %v449
  // Predicated region
  $region14: #{discriminator_forward.11} parent=0 // pred_check
    _
  $region15: #{discriminator_forward.11} parent=0 // pred_check_branch
    %452 = sbr.rel (0) target = $region17
  $region16: #{discriminator_forward.11} parent=0 // pred_region
    _
  $region17: #{discriminator_forward.11} parent=0 // pred_fallthru
    _
  // Predicated region
  $region18: #{discriminator_forward.11} parent=0 // pred_check
    _
  $region19: #{discriminator_forward.11} parent=0 // pred_check_branch
    %454 = sbr.rel (0) target = $region21
  $region20: #{discriminator_forward.11} parent=0 // pred_region
    _
  $region21: #{discriminator_forward.11} parent=0 // pred_fallthru
    _
  // Predicated region
  $region22: #{discriminator_forward.11} parent=0 // pred_check
    _
  $region23: #{discriminator_forward.11} parent=0 // pred_check_branch
    %456 = sbr.rel (0) target = $region25
  $region24: #{discriminator_forward.11} parent=0 // pred_region
    _
  $region25: #{discriminator_forward.11} parent=0 // pred_fallthru
    _
  // Predicated region
  $region26: #{discriminator_forward.11} parent=0 // pred_check
    _
  $region27: #{discriminator_forward.11} parent=0 // pred_check_branch
    %458 = sbr.rel (0) target = $region29
  $region28: #{discriminator_forward.11} parent=0 // pred_region
    _
  $region29: #{discriminator_forward.11} parent=0 // pred_fallthru
    _
  // Predicated region
  $region30: #{discriminator_forward.11} parent=0 // pred_check
    _
  $region31: #{discriminator_forward.11} parent=0 // pred_check_branch
    %460 = sbr.rel (0) target = $region33
  $region32: #{discriminator_forward.11} parent=0 // pred_region
    _
  $region33: #{discriminator_forward.11} parent=0 // pred_fallthru
    _
  // Predicated region
  $region34: #{discriminator_forward.11} parent=0 // pred_check
    _
  $region35: #{discriminator_forward.11} parent=0 // pred_check_branch
    %462 = sbr.rel (0) target = $region37
  $region36: #{discriminator_forward.11} parent=0 // pred_region
    _
  $region37: #{discriminator_forward.11} parent=0 // pred_fallthru
    _

// kernel: discriminator_forward.12
$region0: #{discriminator_forward.12}
  #allocation0 [shape = 'u32[]', space=smem, size = 0x4, offset = 0x4, fixed_abs, tag = 'smem constant byte address 0x4 - core index']
  #allocation1 [shape = 'u32[72,128]{1,0:T(1,128)}', space=vmem, size = 0x9000, scoped, tag = 'internal scratch']
  %s0 = inlined_call_operand.vmem [shape: bf16[128,128], index: 0, kind: input, shape index: {}]
  %s1 = inlined_call_operand.vmem [shape: f32[1,128], index: 1, kind: input, shape index: {}]
  %s2 = inlined_call_operand.vmem [shape: f32[1,128], index: 2, kind: input, shape index: {}]
  %s3 = inlined_call_operand.vmem [shape: bf16[128,128], index: 3, kind: output, shape index: {}]
  %s4 = sld [smem:[#allocation0]]
  $region22: #{discriminator_forward.12} parent=0
    _
  %s6 = ssub.s32 1, %s4
  %s7 = scalar_select 0, %s6, %s4
  // Predicated region
  $region2: #{discriminator_forward.12} parent=0 // pred_check
    _
  $region3: #{discriminator_forward.12} parent=0 // pred_check_branch
    %9 = sbr.rel (0) target = $region5
  $region4: #{discriminator_forward.12} parent=0 // pred_region
    _
  $region5: #{discriminator_forward.12} parent=0 // pred_fallthru
    _
  // Predicated region
  $region6: #{discriminator_forward.12} parent=0 // pred_check
    _
  $region7: #{discriminator_forward.12} parent=0 // pred_check_branch
    %11 = sbr.rel (0) target = $region9
  $region8: #{discriminator_forward.12} parent=0 // pred_region
    _
  $region9: #{discriminator_forward.12} parent=0 // pred_fallthru
    _
  // Predicated region
  $region10: #{discriminator_forward.12} parent=0 // pred_check
    _
  $region11: #{discriminator_forward.12} parent=0 // pred_check_branch
    %13 = sbr.rel (0) target = $region13
  $region12: #{discriminator_forward.12} parent=0 // pred_region
    _
  $region13: #{discriminator_forward.12} parent=0 // pred_fallthru
    _
  %v14 = vld [vmem:[%s0] sm:$0xf]
  %v15 = vld [vmem:[%s0 + $0x4] sm:$0xf]
  %v16 = vld [vmem:[%s0 + $0x8] sm:$0xf]
  %v17 = vld [vmem:[%s0 + $0xc] sm:$0xf]
  %v18 = vld [vmem:[%s0 + $0x10] sm:$0xf]
  %v19 = vld [vmem:[%s0 + $0x14] sm:$0xf]
  %v20 = vld [vmem:[%s0 + $0x18] sm:$0xf]
  %v21 = vld [vmem:[%s0 + $0x1c] sm:$0xf]
  %v22 = vld [vmem:[%s0 + $0x20] sm:$0xf]
  %v23 = vld [vmem:[%s0 + $0x24] sm:$0xf]
  %v24 = vld [vmem:[%s0 + $0x28] sm:$0xf]
  %v25 = vld [vmem:[%s0 + $0x2c] sm:$0xf]
  %v26 = vld [vmem:[%s0 + $0x30] sm:$0xf]
  %v27 = vld [vmem:[%s0 + $0x34] sm:$0xf]
  %v28 = vld [vmem:[%s0 + $0x38] sm:$0xf]
  %v29 = vld [vmem:[%s0 + $0x3c] sm:$0xf]
  %v30 = vunpack.c.l.bf16 %v14
  %v31 = vunpack.c.l.bf16 %v15
  %v32 = vunpack.c.l.bf16 %v16
  %v33 = vunpack.c.l.bf16 %v17
  %v34 = vunpack.c.l.bf16 %v18
  %v35 = vunpack.c.l.bf16 %v19
  %v36 = vunpack.c.l.bf16 %v20
  %v37 = vunpack.c.l.bf16 %v21
  %v38 = vunpack.c.l.bf16 %v22
  %v39 = vunpack.c.l.bf16 %v23
  %v40 = vunpack.c.l.bf16 %v24
  %v41 = vunpack.c.l.bf16 %v25
  %v42 = vunpack.c.l.bf16 %v26
  %v43 = vunpack.c.l.bf16 %v27
  %v44 = vunpack.c.l.bf16 %v28
  %v45 = vunpack.c.l.bf16 %v29
  %v46 = vld [vmem:[%s1] sm:$0x1]
  %v48 = vperm.slane %v46, 0
  %v50 = vmul.f32 %v30, %v48
  %v51 = vmul.f32 %v31, %v48
  %v52 = vmul.f32 %v32, %v48
  %v53 = vmul.f32 %v33, %v48
  %v54 = vmul.f32 %v34, %v48
  %v55 = vmul.f32 %v35, %v48
  %v56 = vmul.f32 %v36, %v48
  %v57 = vmul.f32 %v37, %v48
  %v58 = vmul.f32 %v38, %v48
  %v59 = vmul.f32 %v39, %v48
  %v60 = vmul.f32 %v40, %v48
  %v61 = vmul.f32 %v41, %v48
  %v62 = vmul.f32 %v42, %v48
  %v63 = vmul.f32 %v43, %v48
  %v64 = vmul.f32 %v44, %v48
  %v65 = vmul.f32 %v45, %v48
  %v66 = vld [vmem:[%s2] sm:$0x1]
  %v68 = vperm.slane %v66, 0
  %v70 = vadd.f32 %v50, %v68
  %v71 = vadd.f32 %v51, %v68
  %v72 = vadd.f32 %v52, %v68
  %v73 = vadd.f32 %v53, %v68
  %v74 = vadd.f32 %v54, %v68
  %v75 = vadd.f32 %v55, %v68
  %v76 = vadd.f32 %v56, %v68
  %v77 = vadd.f32 %v57, %v68
  %v78 = vadd.f32 %v58, %v68
  %v79 = vadd.f32 %v59, %v68
  %v80 = vadd.f32 %v60, %v68
  %v81 = vadd.f32 %v61, %v68
  %v82 = vadd.f32 %v62, %v68
  %v83 = vadd.f32 %v63, %v68
  %v84 = vadd.f32 %v64, %v68
  %v85 = vadd.f32 %v65, %v68
  %vm86 = vcmp.gt.f32.partialorder %v70, 0.0
  %vm87 = vcmp.gt.f32.partialorder %v71, 0.0
  %vm88 = vcmp.gt.f32.partialorder %v72, 0.0
  %vm89 = vcmp.gt.f32.partialorder %v73, 0.0
  %vm90 = vcmp.gt.f32.partialorder %v74, 0.0
  %vm91 = vcmp.gt.f32.partialorder %v75, 0.0
  %vm92 = vcmp.gt.f32.partialorder %v76, 0.0
  %vm93 = vcmp.gt.f32.partialorder %v77, 0.0
  %vm94 = vcmp.gt.f32.partialorder %v78, 0.0
  %vm95 = vcmp.gt.f32.partialorder %v79, 0.0
  %vm96 = vcmp.gt.f32.partialorder %v80, 0.0
  %vm97 = vcmp.gt.f32.partialorder %v81, 0.0
  %vm98 = vcmp.gt.f32.partialorder %v82, 0.0
  %vm99 = vcmp.gt.f32.partialorder %v83, 0.0
  %vm100 = vcmp.gt.f32.partialorder %v84, 0.0
  %vm101 = vcmp.gt.f32.partialorder %v85, 0.0
  %v102 = vmul.f32 %v70, 0.2
  %v103 = vmul.f32 %v71, 0.2
  %v104 = vmul.f32 %v72, 0.2
  %v105 = vmul.f32 %v73, 0.2
  %v106 = vmul.f32 %v74, 0.2
  %v107 = vmul.f32 %v75, 0.2
  %v108 = vmul.f32 %v76, 0.2
  %v109 = vmul.f32 %v77, 0.2
  %v110 = vmul.f32 %v78, 0.2
  %v111 = vmul.f32 %v79, 0.2
  %v112 = vmul.f32 %v80, 0.2
  %v113 = vmul.f32 %v81, 0.2
  %v114 = vmul.f32 %v82, 0.2
  %v115 = vmul.f32 %v83, 0.2
  %v116 = vmul.f32 %v84, 0.2
  %v117 = vmul.f32 %v85, 0.2
  %v118 = vsel %vm86, %v70, %v102
  %v119 = vsel %vm87, %v71, %v103
  %v120 = vsel %vm88, %v72, %v104
  %v121 = vsel %vm89, %v73, %v105
  %v122 = vsel %vm90, %v74, %v106
  %v123 = vsel %vm91, %v75, %v107
  %v124 = vsel %vm92, %v76, %v108
  %v125 = vsel %vm93, %v77, %v109
  %v126 = vsel %vm94, %v78, %v110
  %v127 = vsel %vm95, %v79, %v111
  %v128 = vsel %vm96, %v80, %v112
  %v129 = vsel %vm97, %v81, %v113
  %v130 = vsel %vm98, %v82, %v114
  %v131 = vsel %vm99, %v83, %v115
  %v132 = vsel %vm100, %v84, %v116
  %v133 = vsel %vm101, %v85, %v117
  %v134 = vpack.c.bf16 %v118, %v118
  %v135 = vpack.c.bf16 %v119, %v119
  %v136 = vpack.c.bf16 %v120, %v120
  %v137 = vpack.c.bf16 %v121, %v121
  %v138 = vpack.c.bf16 %v122, %v122
  %v139 = vpack.c.bf16 %v123, %v123
  %v140 = vpack.c.bf16 %v124, %v124
  %v141 = vpack.c.bf16 %v125, %v125
  %v142 = vpack.c.bf16 %v126, %v126
  %v143 = vpack.c.bf16 %v127, %v127
  %v144 = vpack.c.bf16 %v128, %v128
  %v145 = vpack.c.bf16 %v129, %v129
  %v146 = vpack.c.bf16 %v130, %v130
  %v147 = vpack.c.bf16 %v131, %v131
  %v148 = vpack.c.bf16 %v132, %v132
  %v149 = vpack.c.bf16 %v133, %v133
  %150 = vst [vmem:[%s3] sm:$0xf] %v134
  %151 = vst [vmem:[%s3 + $0x4] sm:$0xf] %v135
  %152 = vst [vmem:[%s3 + $0x8] sm:$0xf] %v136
  %153 = vst [vmem:[%s3 + $0xc] sm:$0xf] %v137
  %154 = vst [vmem:[%s3 + $0x10] sm:$0xf] %v138
  %155 = vst [vmem:[%s3 + $0x14] sm:$0xf] %v139
  %156 = vst [vmem:[%s3 + $0x18] sm:$0xf] %v140
  %157 = vst [vmem:[%s3 + $0x1c] sm:$0xf] %v141
  %158 = vst [vmem:[%s3 + $0x20] sm:$0xf] %v142
  %159 = vst [vmem:[%s3 + $0x24] sm:$0xf] %v143
  %160 = vst [vmem:[%s3 + $0x28] sm:$0xf] %v144
  %161 = vst [vmem:[%s3 + $0x2c] sm:$0xf] %v145
  %162 = vst [vmem:[%s3 + $0x30] sm:$0xf] %v146
  %163 = vst [vmem:[%s3 + $0x34] sm:$0xf] %v147
  %164 = vst [vmem:[%s3 + $0x38] sm:$0xf] %v148
  %165 = vst [vmem:[%s3 + $0x3c] sm:$0xf] %v149
  // Predicated region
  $region14: #{discriminator_forward.12} parent=0 // pred_check
    _
  $region15: #{discriminator_forward.12} parent=0 // pred_check_branch
    %167 = sbr.rel (0) target = $region17
  $region16: #{discriminator_forward.12} parent=0 // pred_region
    _
  $region17: #{discriminator_forward.12} parent=0 // pred_fallthru
    _
  // Predicated region
  $region18: #{discriminator_forward.12} parent=0 // pred_check
    _
  $region19: #{discriminator_forward.12} parent=0 // pred_check_branch
    %169 = sbr.rel (0) target = $region21
  $region20: #{discriminator_forward.12} parent=0 // pred_region
    _
  $region21: #{discriminator_forward.12} parent=0 // pred_fallthru
    _

// kernel: discriminator_forward.13
$region0: #{discriminator_forward.13}
  #allocation0 [shape = 'u32[]', space=smem, size = 0x4, offset = 0x4, fixed_abs, tag = 'smem constant byte address 0x4 - core index']
  #allocation1 [shape = 'u32[72,128]{1,0:T(1,128)}', space=vmem, size = 0x9000, scoped, tag = 'internal scratch']
  %s0 = inlined_call_operand.vmem [shape: bf16[32,512], index: 0, kind: input, shape index: {}]
  %s1 = inlined_call_operand.vmem [shape: bf16[512,128], index: 1, kind: input, shape index: {}]
  %s2 = inlined_call_operand.vmem [shape: f32[1,128], index: 2, kind: input, shape index: {}]
  %s3 = inlined_call_operand.vmem [shape: bf16[32,128], index: 3, kind: output, shape index: {0}]
  %s4 = inlined_call_operand.vmem [shape: f32[1,128], index: 4, kind: output, shape index: {1}]
  %s5 = inlined_call_operand.vmem [shape: f32[1,128], index: 5, kind: output, shape index: {2}]
  %6 = xla_tuple %s3, %s4, %s5
  %s7 = sld [smem:[#allocation0]]
  $region38: #{discriminator_forward.13} parent=0
    _
  %s9 = ssub.s32 1, %s7
  %s10 = scalar_select 0, %s9, %s7
  // Predicated region
  $region2: #{discriminator_forward.13} parent=0 // pred_check
    _
  $region3: #{discriminator_forward.13} parent=0 // pred_check_branch
    %12 = sbr.rel (0) target = $region5
  $region4: #{discriminator_forward.13} parent=0 // pred_region
    _
  $region5: #{discriminator_forward.13} parent=0 // pred_fallthru
    _
  // Predicated region
  $region6: #{discriminator_forward.13} parent=0 // pred_check
    _
  $region7: #{discriminator_forward.13} parent=0 // pred_check_branch
    %14 = sbr.rel (0) target = $region9
  $region8: #{discriminator_forward.13} parent=0 // pred_region
    _
  $region9: #{discriminator_forward.13} parent=0 // pred_fallthru
    _
  // Predicated region
  $region10: #{discriminator_forward.13} parent=0 // pred_check
    _
  $region11: #{discriminator_forward.13} parent=0 // pred_check_branch
    %16 = sbr.rel (0) target = $region13
  $region12: #{discriminator_forward.13} parent=0 // pred_region
    _
  $region13: #{discriminator_forward.13} parent=0 // pred_fallthru
    _
  %v17 = vld [vmem:[%s0] sm:$0xff]
  %v18 = vld [vmem:[%s0 + $0x8] sm:$0xff]
  %v19 = vld [vmem:[%s0 + $0x10] sm:$0xff]
  %v20 = vld [vmem:[%s0 + $0x18] sm:$0xff]
  %v21 = vld [vmem:[%s0 + $0x20] sm:$0xff]
  %v22 = vld [vmem:[%s0 + $0x28] sm:$0xff]
  %v23 = vld [vmem:[%s0 + $0x30] sm:$0xff]
  %v24 = vld [vmem:[%s0 + $0x38] sm:$0xff]
  %v25 = vld [vmem:[%s1] sm:$0xf]
  %v26 = vld [vmem:[%s1 + $0x4] sm:$0xf]
  %v27 = vld [vmem:[%s1 + $0x8] sm:$0xf]
  %v28 = vld [vmem:[%s1 + $0xc] sm:$0xf]
  %v29 = vld [vmem:[%s1 + $0x10] sm:$0xf]
  %v30 = vld [vmem:[%s1 + $0x14] sm:$0xf]
  %v31 = vld [vmem:[%s1 + $0x18] sm:$0xf]
  %v32 = vld [vmem:[%s1 + $0x1c] sm:$0xf]
  %v33 = vld [vmem:[%s1 + $0x20] sm:$0xf]
  %v34 = vld [vmem:[%s1 + $0x24] sm:$0xf]
  %v35 = vld [vmem:[%s1 + $0x28] sm:$0xf]
  %v36 = vld [vmem:[%s1 + $0x2c] sm:$0xf]
  %v37 = vld [vmem:[%s1 + $0x30] sm:$0xf]
  %v38 = vld [vmem:[%s1 + $0x34] sm:$0xf]
  %v39 = vld [vmem:[%s1 + $0x38] sm:$0xf]
  %v40 = vld [vmem:[%s1 + $0x3c] sm:$0xf]
  %v41 = vld [vmem:[%s1 + $0x40] sm:$0xf]
  %v42 = vld [vmem:[%s1 + $0x44] sm:$0xf]
  %v43 = vld [vmem:[%s1 + $0x48] sm:$0xf]
  %v44 = vld [vmem:[%s1 + $0x4c] sm:$0xf]
  %v45 = vld [vmem:[%s1 + $0x50] sm:$0xf]
  %v46 = vld [vmem:[%s1 + $0x54] sm:$0xf]
  %v47 = vld [vmem:[%s1 + $0x58] sm:$0xf]
  %v48 = vld [vmem:[%s1 + $0x5c] sm:$0xf]
  %v49 = vld [vmem:[%s1 + $0x60] sm:$0xf]
  %v50 = vld [vmem:[%s1 + $0x64] sm:$0xf]
  %v51 = vld [vmem:[%s1 + $0x68] sm:$0xf]
  %v52 = vld [vmem:[%s1 + $0x6c] sm:$0xf]
  %v53 = vld [vmem:[%s1 + $0x70] sm:$0xf]
  %v54 = vld [vmem:[%s1 + $0x74] sm:$0xf]
  %v55 = vld [vmem:[%s1 + $0x78] sm:$0xf]
  %v56 = vld [vmem:[%s1 + $0x7c] sm:$0xf]
  %v57 = vld [vmem:[%s1 + $0x80] sm:$0xf]
  %v58 = vld [vmem:[%s1 + $0x84] sm:$0xf]
  %v59 = vld [vmem:[%s1 + $0x88] sm:$0xf]
  %v60 = vld [vmem:[%s1 + $0x8c] sm:$0xf]
  %v61 = vld [vmem:[%s1 + $0x90] sm:$0xf]
  %v62 = vld [vmem:[%s1 + $0x94] sm:$0xf]
  %v63 = vld [vmem:[%s1 + $0x98] sm:$0xf]
  %v64 = vld [vmem:[%s1 + $0x9c] sm:$0xf]
  %v65 = vld [vmem:[%s1 + $0xa0] sm:$0xf]
  %v66 = vld [vmem:[%s1 + $0xa4] sm:$0xf]
  %v67 = vld [vmem:[%s1 + $0xa8] sm:$0xf]
  %v68 = vld [vmem:[%s1 + $0xac] sm:$0xf]
  %v69 = vld [vmem:[%s1 + $0xb0] sm:$0xf]
  %v70 = vld [vmem:[%s1 + $0xb4] sm:$0xf]
  %v71 = vld [vmem:[%s1 + $0xb8] sm:$0xf]
  %v72 = vld [vmem:[%s1 + $0xbc] sm:$0xf]
  %v73 = vld [vmem:[%s1 + $0xc0] sm:$0xf]
  %v74 = vld [vmem:[%s1 + $0xc4] sm:$0xf]
  %v75 = vld [vmem:[%s1 + $0xc8] sm:$0xf]
  %v76 = vld [vmem:[%s1 + $0xcc] sm:$0xf]
  %v77 = vld [vmem:[%s1 + $0xd0] sm:$0xf]
  %v78 = vld [vmem:[%s1 + $0xd4] sm:$0xf]
  %v79 = vld [vmem:[%s1 + $0xd8] sm:$0xf]
  %v80 = vld [vmem:[%s1 + $0xdc] sm:$0xf]
  %v81 = vld [vmem:[%s1 + $0xe0] sm:$0xf]
  %v82 = vld [vmem:[%s1 + $0xe4] sm:$0xf]
  %v83 = vld [vmem:[%s1 + $0xe8] sm:$0xf]
  %v84 = vld [vmem:[%s1 + $0xec] sm:$0xf]
  %v85 = vld [vmem:[%s1 + $0xf0] sm:$0xf]
  %v86 = vld [vmem:[%s1 + $0xf4] sm:$0xf]
  %v87 = vld [vmem:[%s1 + $0xf8] sm:$0xf]
  %v88 = vld [vmem:[%s1 + $0xfc] sm:$0xf]
  %v97 = vunpack.c.l.b16 %v17
  %v98 = vunpack.c.h.b16 %v17
  %v99 = vunpack.c.l.b16 %v18
  %v100 = vunpack.c.h.b16 %v18
  %v101 = vunpack.c.l.b16 %v19
  %v102 = vunpack.c.h.b16 %v19
  %v103 = vunpack.c.l.b16 %v20
  %v104 = vunpack.c.h.b16 %v20
  %v105 = vunpack.c.l.b16 %v21
  %v106 = vunpack.c.h.b16 %v21
  %v107 = vunpack.c.l.b16 %v22
  %v108 = vunpack.c.h.b16 %v22
  %v109 = vunpack.c.l.b16 %v23
  %v110 = vunpack.c.h.b16 %v23
  %v111 = vunpack.c.l.b16 %v24
  %v112 = vunpack.c.h.b16 %v24
  %v113 = vpack.c.b16 %v101, %v97
  %v114 = vpack.c.b16 %v102, %v98
  %v115 = vpack.c.b16 %v103, %v99
  %v116 = vpack.c.b16 %v104, %v100
  %v117 = vpack.c.b16 %v109, %v105
  %v118 = vpack.c.b16 %v110, %v106
  %v119 = vpack.c.b16 %v111, %v107
  %v120 = vpack.c.b16 %v112, %v108
  %v193 = vunpack.c.l.b16 %v25
  %v194 = vunpack.c.l.b16 %v26
  %v195 = vunpack.c.l.b16 %v27
  %v196 = vunpack.c.l.b16 %v28
  %v197 = vunpack.c.l.b16 %v29
  %v198 = vunpack.c.l.b16 %v30
  %v199 = vunpack.c.l.b16 %v31
  %v200 = vunpack.c.l.b16 %v32
  %v201 = vunpack.c.l.b16 %v33
  %v202 = vunpack.c.l.b16 %v34
  %v203 = vunpack.c.l.b16 %v35
  %v204 = vunpack.c.l.b16 %v36
  %v205 = vunpack.c.l.b16 %v37
  %v206 = vunpack.c.l.b16 %v38
  %v207 = vunpack.c.l.b16 %v39
  %v208 = vunpack.c.l.b16 %v40
  %v209 = vunpack.c.l.b16 %v41
  %v210 = vunpack.c.l.b16 %v42
  %v211 = vunpack.c.l.b16 %v43
  %v212 = vunpack.c.l.b16 %v44
  %v213 = vunpack.c.l.b16 %v45
  %v214 = vunpack.c.l.b16 %v46
  %v215 = vunpack.c.l.b16 %v47
  %v216 = vunpack.c.l.b16 %v48
  %v217 = vunpack.c.l.b16 %v49
  %v218 = vunpack.c.l.b16 %v50
  %v219 = vunpack.c.l.b16 %v51
  %v220 = vunpack.c.l.b16 %v52
  %v221 = vunpack.c.l.b16 %v53
  %v222 = vunpack.c.l.b16 %v54
  %v223 = vunpack.c.l.b16 %v55
  %v224 = vunpack.c.l.b16 %v56
  %v225 = vunpack.c.l.b16 %v57
  %v226 = vunpack.c.l.b16 %v58
  %v227 = vunpack.c.l.b16 %v59
  %v228 = vunpack.c.l.b16 %v60
  %v229 = vunpack.c.l.b16 %v61
  %v230 = vunpack.c.l.b16 %v62
  %v231 = vunpack.c.l.b16 %v63
  %v232 = vunpack.c.l.b16 %v64
  %v233 = vunpack.c.l.b16 %v65
  %v234 = vunpack.c.l.b16 %v66
  %v235 = vunpack.c.l.b16 %v67
  %v236 = vunpack.c.l.b16 %v68
  %v237 = vunpack.c.l.b16 %v69
  %v238 = vunpack.c.l.b16 %v70
  %v239 = vunpack.c.l.b16 %v71
  %v240 = vunpack.c.l.b16 %v72
  %v241 = vunpack.c.l.b16 %v73
  %v242 = vunpack.c.l.b16 %v74
  %v243 = vunpack.c.l.b16 %v75
  %v244 = vunpack.c.l.b16 %v76
  %v245 = vunpack.c.l.b16 %v77
  %v246 = vunpack.c.l.b16 %v78
  %v247 = vunpack.c.l.b16 %v79
  %v248 = vunpack.c.l.b16 %v80
  %v249 = vunpack.c.l.b16 %v81
  %v250 = vunpack.c.l.b16 %v82
  %v251 = vunpack.c.l.b16 %v83
  %v252 = vunpack.c.l.b16 %v84
  %v253 = vunpack.c.l.b16 %v85
  %v254 = vunpack.c.l.b16 %v86
  %v255 = vunpack.c.l.b16 %v87
  %v256 = vunpack.c.l.b16 %v88
  %v257 = vpack.c.b16 %v194, %v193
  %v258 = vpack.c.b16 %v196, %v195
  %v259 = vpack.c.b16 %v198, %v197
  %v260 = vpack.c.b16 %v200, %v199
  %v261 = vpack.c.b16 %v202, %v201
  %v262 = vpack.c.b16 %v204, %v203
  %v263 = vpack.c.b16 %v206, %v205
  %v264 = vpack.c.b16 %v208, %v207
  %v265 = vpack.c.b16 %v210, %v209
  %v266 = vpack.c.b16 %v212, %v211
  %v267 = vpack.c.b16 %v214, %v213
  %v268 = vpack.c.b16 %v216, %v215
  %v269 = vpack.c.b16 %v218, %v217
  %v270 = vpack.c.b16 %v220, %v219
  %v271 = vpack.c.b16 %v222, %v221
  %v272 = vpack.c.b16 %v224, %v223
  %v273 = vpack.c.b16 %v226, %v225
  %v274 = vpack.c.b16 %v228, %v227
  %v275 = vpack.c.b16 %v230, %v229
  %v276 = vpack.c.b16 %v232, %v231
  %v277 = vpack.c.b16 %v234, %v233
  %v278 = vpack.c.b16 %v236, %v235
  %v279 = vpack.c.b16 %v238, %v237
  %v280 = vpack.c.b16 %v240, %v239
  %v281 = vpack.c.b16 %v242, %v241
  %v282 = vpack.c.b16 %v244, %v243
  %v283 = vpack.c.b16 %v246, %v245
  %v284 = vpack.c.b16 %v248, %v247
  %v285 = vpack.c.b16 %v250, %v249
  %v286 = vpack.c.b16 %v252, %v251
  %v287 = vpack.c.b16 %v254, %v253
  %v288 = vpack.c.b16 %v256, %v255
  %321 = vmatpush.bf16.msra.mxu0 %v264
  %322 = vmatpush.bf16.msra.mxu0 %v263
  %323 = vmatpush.bf16.msra.mxu0 %v262
  %324 = vmatpush.bf16.msra.mxu0 %v261
  %325 = vmatpush.bf16.msra.mxu0 %v260
  %326 = vmatpush.bf16.msra.mxu0 %v259
  %327 = vmatpush.bf16.msra.mxu0 %v258
  %328 = vmatpush.bf16.msra.mxu0 %v257
  %329 = vmatmul.bf16.gmra.mxu0 %v113
  %v330 = vpop.f32.mrf.mxu0
  %v331 = vadd.f32 0.0, %v330
  %v332 = vpop.f32.mrf.mxu0
  %v333 = vadd.f32 0.0, %v332
  %334 = vmatmul.bf16.gmra.mxu0 %v117
  %v335 = vpop.f32.mrf.mxu0
  %v336 = vadd.f32 0.0, %v335
  %v337 = vpop.f32.mrf.mxu0
  %v338 = vadd.f32 0.0, %v337
  %339 = vdwg.mxu0
  %340 = vmatpush.bf16.msra.mxu0 %v272
  %341 = vmatpush.bf16.msra.mxu0 %v271
  %342 = vmatpush.bf16.msra.mxu0 %v270
  %343 = vmatpush.bf16.msra.mxu0 %v269
  %344 = vmatpush.bf16.msra.mxu0 %v268
  %345 = vmatpush.bf16.msra.mxu0 %v267
  %346 = vmatpush.bf16.msra.mxu0 %v266
  %347 = vmatpush.bf16.msra.mxu0 %v265
  %348 = vmatmul.bf16.gmra.mxu0 %v114
  %v349 = vpop.f32.mrf.mxu0
  %v350 = vadd.f32 %v331, %v349
  %v351 = vpop.f32.mrf.mxu0
  %v352 = vadd.f32 %v333, %v351
  %353 = vmatmul.bf16.gmra.mxu0 %v118
  %v354 = vpop.f32.mrf.mxu0
  %v355 = vadd.f32 %v336, %v354
  %v356 = vpop.f32.mrf.mxu0
  %v357 = vadd.f32 %v338, %v356
  %358 = vdwg.mxu0
  %359 = vmatpush.bf16.msra.mxu0 %v280
  %360 = vmatpush.bf16.msra.mxu0 %v279
  %361 = vmatpush.bf16.msra.mxu0 %v278
  %362 = vmatpush.bf16.msra.mxu0 %v277
  %363 = vmatpush.bf16.msra.mxu0 %v276
  %364 = vmatpush.bf16.msra.mxu0 %v275
  %365 = vmatpush.bf16.msra.mxu0 %v274
  %366 = vmatpush.bf16.msra.mxu0 %v273
  %367 = vmatmul.bf16.gmra.mxu0 %v115
  %v368 = vpop.f32.mrf.mxu0
  %v369 = vadd.f32 %v350, %v368
  %v370 = vpop.f32.mrf.mxu0
  %v371 = vadd.f32 %v352, %v370
  %372 = vmatmul.bf16.gmra.mxu0 %v119
  %v373 = vpop.f32.mrf.mxu0
  %v374 = vadd.f32 %v355, %v373
  %v375 = vpop.f32.mrf.mxu0
  %v376 = vadd.f32 %v357, %v375
  %377 = vdwg.mxu0
  %378 = vmatpush.bf16.msra.mxu0 %v288
  %379 = vmatpush.bf16.msra.mxu0 %v287
  %380 = vmatpush.bf16.msra.mxu0 %v286
  %381 = vmatpush.bf16.msra.mxu0 %v285
  %382 = vmatpush.bf16.msra.mxu0 %v284
  %383 = vmatpush.bf16.msra.mxu0 %v283
  %384 = vmatpush.bf16.msra.mxu0 %v282
  %385 = vmatpush.bf16.msra.mxu0 %v281
  %386 = vmatmul.bf16.gmra.mxu0 %v116
  %v387 = vpop.f32.mrf.mxu0
  %v388 = vadd.f32 %v369, %v387
  %v389 = vpop.f32.mrf.mxu0
  %v390 = vadd.f32 %v371, %v389
  %391 = vmatmul.bf16.gmra.mxu0 %v120
  %v392 = vpop.f32.mrf.mxu0
  %v393 = vadd.f32 %v374, %v392
  %v394 = vpop.f32.mrf.mxu0
  %v395 = vadd.f32 %v376, %v394
  %396 = vdwg.mxu0
  %v397 = vld [vmem:[%s2] sm:$0x1]
  %v399 = vperm.slane %v397, 0
  %v401 = vadd.f32 %v388, %v399
  %v402 = vadd.f32 %v390, %v399
  %v403 = vadd.f32 %v393, %v399
  %v404 = vadd.f32 %v395, %v399
  %v405 = vpack.c.bf16 %v401, %v401
  %v406 = vpack.c.bf16 %v402, %v402
  %v407 = vpack.c.bf16 %v403, %v403
  %v408 = vpack.c.bf16 %v404, %v404
  %409 = vst [vmem:[%s3] sm:$0xf] %v405
  %410 = vst [vmem:[%s3 + $0x4] sm:$0xf] %v406
  %411 = vst [vmem:[%s3 + $0x8] sm:$0xf] %v407
  %412 = vst [vmem:[%s3 + $0xc] sm:$0xf] %v408
  %v413 = vadd.f32 %v388, %v390
  %v414 = vadd.f32 %v413, %v393
  %v415 = vadd.f32 %v414, %v395
  %v416 = vrot.slane %v415, 4
  %v417 = vadd.f32 %v415, %v416
  %v418 = vrot.slane %v417, 2
  %v419 = vadd.f32 %v417, %v418
  %v420 = vrot.slane %v419, 1
  %v421 = vadd.f32 %v419, %v420
  %422 = vst [vmem:[%s4] sm:$0x1] %v421
  %v423 = vmul.f32 %v388, %v388
  %v424 = vmul.f32 %v390, %v390
  %v425 = vmul.f32 %v393, %v393
  %v426 = vmul.f32 %v395, %v395
  %v427 = vadd.f32 %v423, %v424
  %v428 = vadd.f32 %v427, %v425
  %v429 = vadd.f32 %v428, %v426
  %v430 = vrot.slane %v429, 4
  %v431 = vadd.f32 %v429, %v430
  %v432 = vrot.slane %v431, 2
  %v433 = vadd.f32 %v431, %v432
  %v434 = vrot.slane %v433, 1
  %v435 = vadd.f32 %v433, %v434
  %436 = vst [vmem:[%s5] sm:$0x1] %v435
  // Predicated region
  $region14: #{discriminator_forward.13} parent=0 // pred_check
    _
  $region15: #{discriminator_forward.13} parent=0 // pred_check_branch
    %438 = sbr.rel (0) target = $region17
  $region16: #{discriminator_forward.13} parent=0 // pred_region
    _
  $region17: #{discriminator_forward.13} parent=0 // pred_fallthru
    _
  // Predicated region
  $region18: #{discriminator_forward.13} parent=0 // pred_check
    _
  $region19: #{discriminator_forward.13} parent=0 // pred_check_branch
    %440 = sbr.rel (0) target = $region21
  $region20: #{discriminator_forward.13} parent=0 // pred_region
    _
  $region21: #{discriminator_forward.13} parent=0 // pred_fallthru
    _
  // Predicated region
  $region22: #{discriminator_forward.13} parent=0 // pred_check
    _
  $region23: #{discriminator_forward.13} parent=0 // pred_check_branch
    %442 = sbr.rel (0) target = $region25
  $region24: #{discriminator_forward.13} parent=0 // pred_region
    _
  $region25: #{discriminator_forward.13} parent=0 // pred_fallthru
    _
  // Predicated region
  $region26: #{discriminator_forward.13} parent=0 // pred_check
    _
  $region27: #{discriminator_forward.13} parent=0 // pred_check_branch
    %444 = sbr.rel (0) target = $region29
  $region28: #{discriminator_forward.13} parent=0 // pred_region
    _
  $region29: #{discriminator_forward.13} parent=0 // pred_fallthru
    _
  // Predicated region
  $region30: #{discriminator_forward.13} parent=0 // pred_check
    _
  $region31: #{discriminator_forward.13} parent=0 // pred_check_branch
    %446 = sbr.rel (0) target = $region33
  $region32: #{discriminator_forward.13} parent=0 // pred_region
    _
  $region33: #{discriminator_forward.13} parent=0 // pred_fallthru
    _
  // Predicated region
  $region34: #{discriminator_forward.13} parent=0 // pred_check
    _
  $region35: #{discriminator_forward.13} parent=0 // pred_check_branch
    %448 = sbr.rel (0) target = $region37
  $region36: #{discriminator_forward.13} parent=0 // pred_region
    _
  $region37: #{discriminator_forward.13} parent=0 // pred_fallthru
    _

// kernel: discriminator_forward.14
$region0: #{discriminator_forward.14}
  #allocation0 [shape = 'u32[]', space=smem, size = 0x4, offset = 0x4, fixed_abs, tag = 'smem constant byte address 0x4 - core index']
  #allocation1 [shape = 'u32[72,128]{1,0:T(1,128)}', space=vmem, size = 0x9000, scoped, tag = 'internal scratch']
  %s0 = inlined_call_operand.vmem [shape: bf16[32,128], index: 0, kind: input, shape index: {}]
  %s1 = inlined_call_operand.vmem [shape: f32[1,128], index: 1, kind: input, shape index: {}]
  %s2 = inlined_call_operand.vmem [shape: f32[1,128], index: 2, kind: input, shape index: {}]
  %s3 = inlined_call_operand.vmem [shape: bf16[32,128], index: 3, kind: output, shape index: {}]
  %s4 = sld [smem:[#allocation0]]
  $region22: #{discriminator_forward.14} parent=0
    _
  %s6 = ssub.s32 1, %s4
  %s7 = scalar_select 0, %s6, %s4
  // Predicated region
  $region2: #{discriminator_forward.14} parent=0 // pred_check
    _
  $region3: #{discriminator_forward.14} parent=0 // pred_check_branch
    %9 = sbr.rel (0) target = $region5
  $region4: #{discriminator_forward.14} parent=0 // pred_region
    _
  $region5: #{discriminator_forward.14} parent=0 // pred_fallthru
    _
  // Predicated region
  $region6: #{discriminator_forward.14} parent=0 // pred_check
    _
  $region7: #{discriminator_forward.14} parent=0 // pred_check_branch
    %11 = sbr.rel (0) target = $region9
  $region8: #{discriminator_forward.14} parent=0 // pred_region
    _
  $region9: #{discriminator_forward.14} parent=0 // pred_fallthru
    _
  // Predicated region
  $region10: #{discriminator_forward.14} parent=0 // pred_check
    _
  $region11: #{discriminator_forward.14} parent=0 // pred_check_branch
    %13 = sbr.rel (0) target = $region13
  $region12: #{discriminator_forward.14} parent=0 // pred_region
    _
  $region13: #{discriminator_forward.14} parent=0 // pred_fallthru
    _
  %v14 = vld [vmem:[%s0] sm:$0xf]
  %v15 = vld [vmem:[%s0 + $0x4] sm:$0xf]
  %v16 = vld [vmem:[%s0 + $0x8] sm:$0xf]
  %v17 = vld [vmem:[%s0 + $0xc] sm:$0xf]
  %v18 = vunpack.c.l.bf16 %v14
  %v19 = vunpack.c.l.bf16 %v15
  %v20 = vunpack.c.l.bf16 %v16
  %v21 = vunpack.c.l.bf16 %v17
  %v22 = vld [vmem:[%s1] sm:$0x1]
  %v24 = vperm.slane %v22, 0
  %v26 = vmul.f32 %v18, %v24
  %v27 = vmul.f32 %v19, %v24
  %v28 = vmul.f32 %v20, %v24
  %v29 = vmul.f32 %v21, %v24
  %v30 = vld [vmem:[%s2] sm:$0x1]
  %v32 = vperm.slane %v30, 0
  %v34 = vadd.f32 %v26, %v32
  %v35 = vadd.f32 %v27, %v32
  %v36 = vadd.f32 %v28, %v32
  %v37 = vadd.f32 %v29, %v32
  %vm38 = vcmp.gt.f32.partialorder %v34, 0.0
  %vm39 = vcmp.gt.f32.partialorder %v35, 0.0
  %vm40 = vcmp.gt.f32.partialorder %v36, 0.0
  %vm41 = vcmp.gt.f32.partialorder %v37, 0.0
  %v42 = vmul.f32 %v34, 0.2
  %v43 = vmul.f32 %v35, 0.2
  %v44 = vmul.f32 %v36, 0.2
  %v45 = vmul.f32 %v37, 0.2
  %v46 = vsel %vm38, %v34, %v42
  %v47 = vsel %vm39, %v35, %v43
  %v48 = vsel %vm40, %v36, %v44
  %v49 = vsel %vm41, %v37, %v45
  %v50 = vpack.c.bf16 %v46, %v46
  %v51 = vpack.c.bf16 %v47, %v47
  %v52 = vpack.c.bf16 %v48, %v48
  %v53 = vpack.c.bf16 %v49, %v49
  %54 = vst [vmem:[%s3] sm:$0xf] %v50
  %55 = vst [vmem:[%s3 + $0x4] sm:$0xf] %v51
  %56 = vst [vmem:[%s3 + $0x8] sm:$0xf] %v52
  %57 = vst [vmem:[%s3 + $0xc] sm:$0xf] %v53
  // Predicated region
  $region14: #{discriminator_forward.14} parent=0 // pred_check
    _
  $region15: #{discriminator_forward.14} parent=0 // pred_check_branch
    %59 = sbr.rel (0) target = $region17
  $region16: #{discriminator_forward.14} parent=0 // pred_region
    _
  $region17: #{discriminator_forward.14} parent=0 // pred_fallthru
    _
  // Predicated region
  $region18: #{discriminator_forward.14} parent=0 // pred_check
    _
  $region19: #{discriminator_forward.14} parent=0 // pred_check_branch
    %61 = sbr.rel (0) target = $region21
  $region20: #{discriminator_forward.14} parent=0 // pred_region
    _
  $region21: #{discriminator_forward.14} parent=0 // pred_fallthru
    _

// kernel: discriminator_forward.15
$region0: #{discriminator_forward.15}
  #allocation0 [shape = 'u32[]', space=smem, size = 0x4, offset = 0x4, fixed_abs, tag = 'smem constant byte address 0x4 - core index']
  #allocation1 [shape = 'u32[72,128]{1,0:T(1,128)}', space=vmem, size = 0x9000, scoped, tag = 'internal scratch']
  %s0 = inlined_call_operand.vmem [shape: bf16[2,1024], index: 0, kind: input, shape index: {}]
  %s1 = inlined_call_operand.vmem [shape: bf16[1024,128], index: 1, kind: input, shape index: {}]
  %s2 = inlined_call_operand.vmem [shape: f32[1,128], index: 2, kind: input, shape index: {}]
  %s3 = inlined_call_operand.vmem [shape: f32[2,128], index: 3, kind: output, shape index: {}]
  %s4 = sld [smem:[#allocation0]]
  $region22: #{discriminator_forward.15} parent=0
    _
  %s6 = ssub.s32 1, %s4
  %s7 = scalar_select 0, %s6, %s4
  // Predicated region
  $region2: #{discriminator_forward.15} parent=0 // pred_check
    _
  $region3: #{discriminator_forward.15} parent=0 // pred_check_branch
    %9 = sbr.rel (0) target = $region5
  $region4: #{discriminator_forward.15} parent=0 // pred_region
    _
  $region5: #{discriminator_forward.15} parent=0 // pred_fallthru
    _
  // Predicated region
  $region6: #{discriminator_forward.15} parent=0 // pred_check
    _
  $region7: #{discriminator_forward.15} parent=0 // pred_check_branch
    %11 = sbr.rel (0) target = $region9
  $region8: #{discriminator_forward.15} parent=0 // pred_region
    _
  $region9: #{discriminator_forward.15} parent=0 // pred_fallthru
    _
  // Predicated region
  $region10: #{discriminator_forward.15} parent=0 // pred_check
    _
  $region11: #{discriminator_forward.15} parent=0 // pred_check_branch
    %13 = sbr.rel (0) target = $region13
  $region12: #{discriminator_forward.15} parent=0 // pred_region
    _
  $region13: #{discriminator_forward.15} parent=0 // pred_fallthru
    _
  %v14 = vld [vmem:[%s0] sm:$0xff]
  %v15 = vld [vmem:[%s1] sm:$0xf]
  %v16 = vld [vmem:[%s1 + $0x4] sm:$0xf]
  %v17 = vld [vmem:[%s1 + $0x8] sm:$0xf]
  %v18 = vld [vmem:[%s1 + $0xc] sm:$0xf]
  %v19 = vld [vmem:[%s1 + $0x10] sm:$0xf]
  %v20 = vld [vmem:[%s1 + $0x14] sm:$0xf]
  %v21 = vld [vmem:[%s1 + $0x18] sm:$0xf]
  %v22 = vld [vmem:[%s1 + $0x1c] sm:$0xf]
  %v23 = vld [vmem:[%s1 + $0x20] sm:$0xf]
  %v24 = vld [vmem:[%s1 + $0x24] sm:$0xf]
  %v25 = vld [vmem:[%s1 + $0x28] sm:$0xf]
  %v26 = vld [vmem:[%s1 + $0x2c] sm:$0xf]
  %v27 = vld [vmem:[%s1 + $0x30] sm:$0xf]
  %v28 = vld [vmem:[%s1 + $0x34] sm:$0xf]
  %v29 = vld [vmem:[%s1 + $0x38] sm:$0xf]
  %v30 = vld [vmem:[%s1 + $0x3c] sm:$0xf]
  %v31 = vld [vmem:[%s1 + $0x40] sm:$0xf]
  %v32 = vld [vmem:[%s1 + $0x44] sm:$0xf]
  %v33 = vld [vmem:[%s1 + $0x48] sm:$0xf]
  %v34 = vld [vmem:[%s1 + $0x4c] sm:$0xf]
  %v35 = vld [vmem:[%s1 + $0x50] sm:$0xf]
  %v36 = vld [vmem:[%s1 + $0x54] sm:$0xf]
  %v37 = vld [vmem:[%s1 + $0x58] sm:$0xf]
  %v38 = vld [vmem:[%s1 + $0x5c] sm:$0xf]
  %v39 = vld [vmem:[%s1 + $0x60] sm:$0xf]
  %v40 = vld [vmem:[%s1 + $0x64] sm:$0xf]
  %v41 = vld [vmem:[%s1 + $0x68] sm:$0xf]
  %v42 = vld [vmem:[%s1 + $0x6c] sm:$0xf]
  %v43 = vld [vmem:[%s1 + $0x70] sm:$0xf]
  %v44 = vld [vmem:[%s1 + $0x74] sm:$0xf]
  %v45 = vld [vmem:[%s1 + $0x78] sm:$0xf]
  %v46 = vld [vmem:[%s1 + $0x7c] sm:$0xf]
  %v47 = vld [vmem:[%s1 + $0x80] sm:$0xf]
  %v48 = vld [vmem:[%s1 + $0x84] sm:$0xf]
  %v49 = vld [vmem:[%s1 + $0x88] sm:$0xf]
  %v50 = vld [vmem:[%s1 + $0x8c] sm:$0xf]
  %v51 = vld [vmem:[%s1 + $0x90] sm:$0xf]
  %v52 = vld [vmem:[%s1 + $0x94] sm:$0xf]
  %v53 = vld [vmem:[%s1 + $0x98] sm:$0xf]
  %v54 = vld [vmem:[%s1 + $0x9c] sm:$0xf]
  %v55 = vld [vmem:[%s1 + $0xa0] sm:$0xf]
  %v56 = vld [vmem:[%s1 + $0xa4] sm:$0xf]
  %v57 = vld [vmem:[%s1 + $0xa8] sm:$0xf]
  %v58 = vld [vmem:[%s1 + $0xac] sm:$0xf]
  %v59 = vld [vmem:[%s1 + $0xb0] sm:$0xf]
  %v60 = vld [vmem:[%s1 + $0xb4] sm:$0xf]
  %v61 = vld [vmem:[%s1 + $0xb8] sm:$0xf]
  %v62 = vld [vmem:[%s1 + $0xbc] sm:$0xf]
  %v63 = vld [vmem:[%s1 + $0xc0] sm:$0xf]
  %v64 = vld [vmem:[%s1 + $0xc4] sm:$0xf]
  %v65 = vld [vmem:[%s1 + $0xc8] sm:$0xf]
  %v66 = vld [vmem:[%s1 + $0xcc] sm:$0xf]
  %v67 = vld [vmem:[%s1 + $0xd0] sm:$0xf]
  %v68 = vld [vmem:[%s1 + $0xd4] sm:$0xf]
  %v69 = vld [vmem:[%s1 + $0xd8] sm:$0xf]
  %v70 = vld [vmem:[%s1 + $0xdc] sm:$0xf]
  %v71 = vld [vmem:[%s1 + $0xe0] sm:$0xf]
  %v72 = vld [vmem:[%s1 + $0xe4] sm:$0xf]
  %v73 = vld [vmem:[%s1 + $0xe8] sm:$0xf]
  %v74 = vld [vmem:[%s1 + $0xec] sm:$0xf]
  %v75 = vld [vmem:[%s1 + $0xf0] sm:$0xf]
  %v76 = vld [vmem:[%s1 + $0xf4] sm:$0xf]
  %v77 = vld [vmem:[%s1 + $0xf8] sm:$0xf]
  %v78 = vld [vmem:[%s1 + $0xfc] sm:$0xf]
  %v79 = vld [vmem:[%s1 + $0x100] sm:$0xf]
  %v80 = vld [vmem:[%s1 + $0x104] sm:$0xf]
  %v81 = vld [vmem:[%s1 + $0x108] sm:$0xf]
  %v82 = vld [vmem:[%s1 + $0x10c] sm:$0xf]
  %v83 = vld [vmem:[%s1 + $0x110] sm:$0xf]
  %v84 = vld [vmem:[%s1 + $0x114] sm:$0xf]
  %v85 = vld [vmem:[%s1 + $0x118] sm:$0xf]
  %v86 = vld [vmem:[%s1 + $0x11c] sm:$0xf]
  %v87 = vld [vmem:[%s1 + $0x120] sm:$0xf]
  %v88 = vld [vmem:[%s1 + $0x124] sm:$0xf]
  %v89 = vld [vmem:[%s1 + $0x128] sm:$0xf]
  %v90 = vld [vmem:[%s1 + $0x12c] sm:$0xf]
  %v91 = vld [vmem:[%s1 + $0x130] sm:$0xf]
  %v92 = vld [vmem:[%s1 + $0x134] sm:$0xf]
  %v93 = vld [vmem:[%s1 + $0x138] sm:$0xf]
  %v94 = vld [vmem:[%s1 + $0x13c] sm:$0xf]
  %v95 = vld [vmem:[%s1 + $0x140] sm:$0xf]
  %v96 = vld [vmem:[%s1 + $0x144] sm:$0xf]
  %v97 = vld [vmem:[%s1 + $0x148] sm:$0xf]
  %v98 = vld [vmem:[%s1 + $0x14c] sm:$0xf]
  %v99 = vld [vmem:[%s1 + $0x150] sm:$0xf]
  %v100 = vld [vmem:[%s1 + $0x154] sm:$0xf]
  %v101 = vld [vmem:[%s1 + $0x158] sm:$0xf]
  %v102 = vld [vmem:[%s1 + $0x15c] sm:$0xf]
  %v103 = vld [vmem:[%s1 + $0x160] sm:$0xf]
  %v104 = vld [vmem:[%s1 + $0x164] sm:$0xf]
  %v105 = vld [vmem:[%s1 + $0x168] sm:$0xf]
  %v106 = vld [vmem:[%s1 + $0x16c] sm:$0xf]
  %v107 = vld [vmem:[%s1 + $0x170] sm:$0xf]
  %v108 = vld [vmem:[%s1 + $0x174] sm:$0xf]
  %v109 = vld [vmem:[%s1 + $0x178] sm:$0xf]
  %v110 = vld [vmem:[%s1 + $0x17c] sm:$0xf]
  %v111 = vld [vmem:[%s1 + $0x180] sm:$0xf]
  %v112 = vld [vmem:[%s1 + $0x184] sm:$0xf]
  %v113 = vld [vmem:[%s1 + $0x188] sm:$0xf]
  %v114 = vld [vmem:[%s1 + $0x18c] sm:$0xf]
  %v115 = vld [vmem:[%s1 + $0x190] sm:$0xf]
  %v116 = vld [vmem:[%s1 + $0x194] sm:$0xf]
  %v117 = vld [vmem:[%s1 + $0x198] sm:$0xf]
  %v118 = vld [vmem:[%s1 + $0x19c] sm:$0xf]
  %v119 = vld [vmem:[%s1 + $0x1a0] sm:$0xf]
  %v120 = vld [vmem:[%s1 + $0x1a4] sm:$0xf]
  %v121 = vld [vmem:[%s1 + $0x1a8] sm:$0xf]
  %v122 = vld [vmem:[%s1 + $0x1ac] sm:$0xf]
  %v123 = vld [vmem:[%s1 + $0x1b0] sm:$0xf]
  %v124 = vld [vmem:[%s1 + $0x1b4] sm:$0xf]
  %v125 = vld [vmem:[%s1 + $0x1b8] sm:$0xf]
  %v126 = vld [vmem:[%s1 + $0x1bc] sm:$0xf]
  %v127 = vld [vmem:[%s1 + $0x1c0] sm:$0xf]
  %v128 = vld [vmem:[%s1 + $0x1c4] sm:$0xf]
  %v129 = vld [vmem:[%s1 + $0x1c8] sm:$0xf]
  %v130 = vld [vmem:[%s1 + $0x1cc] sm:$0xf]
  %v131 = vld [vmem:[%s1 + $0x1d0] sm:$0xf]
  %v132 = vld [vmem:[%s1 + $0x1d4] sm:$0xf]
  %v133 = vld [vmem:[%s1 + $0x1d8] sm:$0xf]
  %v134 = vld [vmem:[%s1 + $0x1dc] sm:$0xf]
  %v135 = vld [vmem:[%s1 + $0x1e0] sm:$0xf]
  %v136 = vld [vmem:[%s1 + $0x1e4] sm:$0xf]
  %v137 = vld [vmem:[%s1 + $0x1e8] sm:$0xf]
  %v138 = vld [vmem:[%s1 + $0x1ec] sm:$0xf]
  %v139 = vld [vmem:[%s1 + $0x1f0] sm:$0xf]
  %v140 = vld [vmem:[%s1 + $0x1f4] sm:$0xf]
  %v141 = vld [vmem:[%s1 + $0x1f8] sm:$0xf]
  %v142 = vld [vmem:[%s1 + $0x1fc] sm:$0xf]
  %v143 = vld [vmem:[%s2] sm:$0x1]
  %v145 = vperm.slane %v143, 0
  %148 = vst [vmem:[#allocation1] ss:$9 sm:$0xff] %v14
  %v149 = vld [vmem:[#allocation1] sm:$0xff]
  %v150 = vld [vmem:[#allocation1 + $0x9] sm:$0xff]
  %v151 = vld [vmem:[#allocation1 + $0x12] sm:$0xff]
  %v152 = vld [vmem:[#allocation1 + $0x1b] sm:$0xff]
  %v153 = vld [vmem:[#allocation1 + $0x24] sm:$0xff]
  %v154 = vld [vmem:[#allocation1 + $0x2d] sm:$0xff]
  %v155 = vld [vmem:[#allocation1 + $0x36] sm:$0xff]
  %v156 = vld [vmem:[#allocation1 + $0x3f] sm:$0xff]
  %v293 = vunpack.c.l.b16 %v15
  %v294 = vunpack.c.l.b16 %v16
  %v295 = vunpack.c.l.b16 %v17
  %v296 = vunpack.c.l.b16 %v18
  %v297 = vunpack.c.l.b16 %v19
  %v298 = vunpack.c.l.b16 %v20
  %v299 = vunpack.c.l.b16 %v21
  %v300 = vunpack.c.l.b16 %v22
  %v301 = vunpack.c.l.b16 %v23
  %v302 = vunpack.c.l.b16 %v24
  %v303 = vunpack.c.l.b16 %v25
  %v304 = vunpack.c.l.b16 %v26
  %v305 = vunpack.c.l.b16 %v27
  %v306 = vunpack.c.l.b16 %v28
  %v307 = vunpack.c.l.b16 %v29
  %v308 = vunpack.c.l.b16 %v30
  %v309 = vunpack.c.l.b16 %v31
  %v310 = vunpack.c.l.b16 %v32
  %v311 = vunpack.c.l.b16 %v33
  %v312 = vunpack.c.l.b16 %v34
  %v313 = vunpack.c.l.b16 %v35
  %v314 = vunpack.c.l.b16 %v36
  %v315 = vunpack.c.l.b16 %v37
  %v316 = vunpack.c.l.b16 %v38
  %v317 = vunpack.c.l.b16 %v39
  %v318 = vunpack.c.l.b16 %v40
  %v319 = vunpack.c.l.b16 %v41
  %v320 = vunpack.c.l.b16 %v42
  %v321 = vunpack.c.l.b16 %v43
  %v322 = vunpack.c.l.b16 %v44
  %v323 = vunpack.c.l.b16 %v45
  %v324 = vunpack.c.l.b16 %v46
  %v325 = vunpack.c.l.b16 %v47
  %v326 = vunpack.c.l.b16 %v48
  %v327 = vunpack.c.l.b16 %v49
  %v328 = vunpack.c.l.b16 %v50
  %v329 = vunpack.c.l.b16 %v51
  %v330 = vunpack.c.l.b16 %v52
  %v331 = vunpack.c.l.b16 %v53
  %v332 = vunpack.c.l.b16 %v54
  %v333 = vunpack.c.l.b16 %v55
  %v334 = vunpack.c.l.b16 %v56
  %v335 = vunpack.c.l.b16 %v57
  %v336 = vunpack.c.l.b16 %v58
  %v337 = vunpack.c.l.b16 %v59
  %v338 = vunpack.c.l.b16 %v60
  %v339 = vunpack.c.l.b16 %v61
  %v340 = vunpack.c.l.b16 %v62
  %v341 = vunpack.c.l.b16 %v63
  %v342 = vunpack.c.l.b16 %v64
  %v343 = vunpack.c.l.b16 %v65
  %v344 = vunpack.c.l.b16 %v66
  %v345 = vunpack.c.l.b16 %v67
  %v346 = vunpack.c.l.b16 %v68
  %v347 = vunpack.c.l.b16 %v69
  %v348 = vunpack.c.l.b16 %v70
  %v349 = vunpack.c.l.b16 %v71
  %v350 = vunpack.c.l.b16 %v72
  %v351 = vunpack.c.l.b16 %v73
  %v352 = vunpack.c.l.b16 %v74
  %v353 = vunpack.c.l.b16 %v75
  %v354 = vunpack.c.l.b16 %v76
  %v355 = vunpack.c.l.b16 %v77
  %v356 = vunpack.c.l.b16 %v78
  %v357 = vunpack.c.l.b16 %v79
  %v358 = vunpack.c.l.b16 %v80
  %v359 = vunpack.c.l.b16 %v81
  %v360 = vunpack.c.l.b16 %v82
  %v361 = vunpack.c.l.b16 %v83
  %v362 = vunpack.c.l.b16 %v84
  %v363 = vunpack.c.l.b16 %v85
  %v364 = vunpack.c.l.b16 %v86
  %v365 = vunpack.c.l.b16 %v87
  %v366 = vunpack.c.l.b16 %v88
  %v367 = vunpack.c.l.b16 %v89
  %v368 = vunpack.c.l.b16 %v90
  %v369 = vunpack.c.l.b16 %v91
  %v370 = vunpack.c.l.b16 %v92
  %v371 = vunpack.c.l.b16 %v93
  %v372 = vunpack.c.l.b16 %v94
  %v373 = vunpack.c.l.b16 %v95
  %v374 = vunpack.c.l.b16 %v96
  %v375 = vunpack.c.l.b16 %v97
  %v376 = vunpack.c.l.b16 %v98
  %v377 = vunpack.c.l.b16 %v99
  %v378 = vunpack.c.l.b16 %v100
  %v379 = vunpack.c.l.b16 %v101
  %v380 = vunpack.c.l.b16 %v102
  %v381 = vunpack.c.l.b16 %v103
  %v382 = vunpack.c.l.b16 %v104
  %v383 = vunpack.c.l.b16 %v105
  %v384 = vunpack.c.l.b16 %v106
  %v385 = vunpack.c.l.b16 %v107
  %v386 = vunpack.c.l.b16 %v108
  %v387 = vunpack.c.l.b16 %v109
  %v388 = vunpack.c.l.b16 %v110
  %v389 = vunpack.c.l.b16 %v111
  %v390 = vunpack.c.l.b16 %v112
  %v391 = vunpack.c.l.b16 %v113
  %v392 = vunpack.c.l.b16 %v114
  %v393 = vunpack.c.l.b16 %v115
  %v394 = vunpack.c.l.b16 %v116
  %v395 = vunpack.c.l.b16 %v117
  %v396 = vunpack.c.l.b16 %v118
  %v397 = vunpack.c.l.b16 %v119
  %v398 = vunpack.c.l.b16 %v120
  %v399 = vunpack.c.l.b16 %v121
  %v400 = vunpack.c.l.b16 %v122
  %v401 = vunpack.c.l.b16 %v123
  %v402 = vunpack.c.l.b16 %v124
  %v403 = vunpack.c.l.b16 %v125
  %v404 = vunpack.c.l.b16 %v126
  %v405 = vunpack.c.l.b16 %v127
  %v406 = vunpack.c.l.b16 %v128
  %v407 = vunpack.c.l.b16 %v129
  %v408 = vunpack.c.l.b16 %v130
  %v409 = vunpack.c.l.b16 %v131
  %v410 = vunpack.c.l.b16 %v132
  %v411 = vunpack.c.l.b16 %v133
  %v412 = vunpack.c.l.b16 %v134
  %v413 = vunpack.c.l.b16 %v135
  %v414 = vunpack.c.l.b16 %v136
  %v415 = vunpack.c.l.b16 %v137
  %v416 = vunpack.c.l.b16 %v138
  %v417 = vunpack.c.l.b16 %v139
  %v418 = vunpack.c.l.b16 %v140
  %v419 = vunpack.c.l.b16 %v141
  %v420 = vunpack.c.l.b16 %v142
  %v421 = vpack.c.b16 %v294, %v293
  %v422 = vpack.c.b16 %v296, %v295
  %v423 = vpack.c.b16 %v298, %v297
  %v424 = vpack.c.b16 %v300, %v299
  %v425 = vpack.c.b16 %v302, %v301
  %v426 = vpack.c.b16 %v304, %v303
  %v427 = vpack.c.b16 %v306, %v305
  %v428 = vpack.c.b16 %v308, %v307
  %v429 = vpack.c.b16 %v310, %v309
  %v430 = vpack.c.b16 %v312, %v311
  %v431 = vpack.c.b16 %v314, %v313
  %v432 = vpack.c.b16 %v316, %v315
  %v433 = vpack.c.b16 %v318, %v317
  %v434 = vpack.c.b16 %v320, %v319
  %v435 = vpack.c.b16 %v322, %v321
  %v436 = vpack.c.b16 %v324, %v323
  %v437 = vpack.c.b16 %v326, %v325
  %v438 = vpack.c.b16 %v328, %v327
  %v439 = vpack.c.b16 %v330, %v329
  %v440 = vpack.c.b16 %v332, %v331
  %v441 = vpack.c.b16 %v334, %v333
  %v442 = vpack.c.b16 %v336, %v335
  %v443 = vpack.c.b16 %v338, %v337
  %v444 = vpack.c.b16 %v340, %v339
  %v445 = vpack.c.b16 %v342, %v341
  %v446 = vpack.c.b16 %v344, %v343
  %v447 = vpack.c.b16 %v346, %v345
  %v448 = vpack.c.b16 %v348, %v347
  %v449 = vpack.c.b16 %v350, %v349
  %v450 = vpack.c.b16 %v352, %v351
  %v451 = vpack.c.b16 %v354, %v353
  %v452 = vpack.c.b16 %v356, %v355
  %v453 = vpack.c.b16 %v358, %v357
  %v454 = vpack.c.b16 %v360, %v359
  %v455 = vpack.c.b16 %v362, %v361
  %v456 = vpack.c.b16 %v364, %v363
  %v457 = vpack.c.b16 %v366, %v365
  %v458 = vpack.c.b16 %v368, %v367
  %v459 = vpack.c.b16 %v370, %v369
  %v460 = vpack.c.b16 %v372, %v371
  %v461 = vpack.c.b16 %v374, %v373
  %v462 = vpack.c.b16 %v376, %v375
  %v463 = vpack.c.b16 %v378, %v377
  %v464 = vpack.c.b16 %v380, %v379
  %v465 = vpack.c.b16 %v382, %v381
  %v466 = vpack.c.b16 %v384, %v383
  %v467 = vpack.c.b16 %v386, %v385
  %v468 = vpack.c.b16 %v388, %v387
  %v469 = vpack.c.b16 %v390, %v389
  %v470 = vpack.c.b16 %v392, %v391
  %v471 = vpack.c.b16 %v394, %v393
  %v472 = vpack.c.b16 %v396, %v395
  %v473 = vpack.c.b16 %v398, %v397
  %v474 = vpack.c.b16 %v400, %v399
  %v475 = vpack.c.b16 %v402, %v401
  %v476 = vpack.c.b16 %v404, %v403
  %v477 = vpack.c.b16 %v406, %v405
  %v478 = vpack.c.b16 %v408, %v407
  %v479 = vpack.c.b16 %v410, %v409
  %v480 = vpack.c.b16 %v412, %v411
  %v481 = vpack.c.b16 %v414, %v413
  %v482 = vpack.c.b16 %v416, %v415
  %v483 = vpack.c.b16 %v418, %v417
  %v484 = vpack.c.b16 %v420, %v419
  %549 = vmatpush.bf16.msra.mxu0 %v428
  %550 = vmatpush.bf16.msra.mxu0 %v427
  %551 = vmatpush.bf16.msra.mxu0 %v426
  %552 = vmatpush.bf16.msra.mxu0 %v425
  %553 = vmatpush.bf16.msra.mxu0 %v424
  %554 = vmatpush.bf16.msra.mxu0 %v423
  %555 = vmatpush.bf16.msra.mxu0 %v422
  %556 = vmatpush.bf16.msra.mxu0 %v421
  %557 = vmatmul.bf16.gmra.mxu0 %v149
  %v558 = vpop.f32.mrf.mxu0
  %v559 = vadd.f32 %v145, %v558
  %v560 = vpop.f32.mrf.mxu0
  %561 = vdwg.mxu0
  %562 = vmatpush.bf16.msra.mxu0 %v436
  %563 = vmatpush.bf16.msra.mxu0 %v435
  %564 = vmatpush.bf16.msra.mxu0 %v434
  %565 = vmatpush.bf16.msra.mxu0 %v433
  %566 = vmatpush.bf16.msra.mxu0 %v432
  %567 = vmatpush.bf16.msra.mxu0 %v431
  %568 = vmatpush.bf16.msra.mxu0 %v430
  %569 = vmatpush.bf16.msra.mxu0 %v429
  %570 = vmatmul.bf16.gmra.mxu0 %v150
  %v571 = vpop.f32.mrf.mxu0
  %v572 = vadd.f32 %v559, %v571
  %v573 = vpop.f32.mrf.mxu0
  %574 = vdwg.mxu0
  %575 = vmatpush.bf16.msra.mxu0 %v444
  %576 = vmatpush.bf16.msra.mxu0 %v443
  %577 = vmatpush.bf16.msra.mxu0 %v442
  %578 = vmatpush.bf16.msra.mxu0 %v441
  %579 = vmatpush.bf16.msra.mxu0 %v440
  %580 = vmatpush.bf16.msra.mxu0 %v439
  %581 = vmatpush.bf16.msra.mxu0 %v438
  %582 = vmatpush.bf16.msra.mxu0 %v437
  %583 = vmatmul.bf16.gmra.mxu0 %v151
  %v584 = vpop.f32.mrf.mxu0
  %v585 = vadd.f32 %v572, %v584
  %v586 = vpop.f32.mrf.mxu0
  %587 = vdwg.mxu0
  %588 = vmatpush.bf16.msra.mxu0 %v452
  %589 = vmatpush.bf16.msra.mxu0 %v451
  %590 = vmatpush.bf16.msra.mxu0 %v450
  %591 = vmatpush.bf16.msra.mxu0 %v449
  %592 = vmatpush.bf16.msra.mxu0 %v448
  %593 = vmatpush.bf16.msra.mxu0 %v447
  %594 = vmatpush.bf16.msra.mxu0 %v446
  %595 = vmatpush.bf16.msra.mxu0 %v445
  %596 = vmatmul.bf16.gmra.mxu0 %v152
  %v597 = vpop.f32.mrf.mxu0
  %v598 = vadd.f32 %v585, %v597
  %v599 = vpop.f32.mrf.mxu0
  %600 = vdwg.mxu0
  %601 = vmatpush.bf16.msra.mxu0 %v460
  %602 = vmatpush.bf16.msra.mxu0 %v459
  %603 = vmatpush.bf16.msra.mxu0 %v458
  %604 = vmatpush.bf16.msra.mxu0 %v457
  %605 = vmatpush.bf16.msra.mxu0 %v456
  %606 = vmatpush.bf16.msra.mxu0 %v455
  %607 = vmatpush.bf16.msra.mxu0 %v454
  %608 = vmatpush.bf16.msra.mxu0 %v453
  %609 = vmatmul.bf16.gmra.mxu0 %v153
  %v610 = vpop.f32.mrf.mxu0
  %v611 = vadd.f32 %v598, %v610
  %v612 = vpop.f32.mrf.mxu0
  %613 = vdwg.mxu0
  %614 = vmatpush.bf16.msra.mxu0 %v468
  %615 = vmatpush.bf16.msra.mxu0 %v467
  %616 = vmatpush.bf16.msra.mxu0 %v466
  %617 = vmatpush.bf16.msra.mxu0 %v465
  %618 = vmatpush.bf16.msra.mxu0 %v464
  %619 = vmatpush.bf16.msra.mxu0 %v463
  %620 = vmatpush.bf16.msra.mxu0 %v462
  %621 = vmatpush.bf16.msra.mxu0 %v461
  %622 = vmatmul.bf16.gmra.mxu0 %v154
  %v623 = vpop.f32.mrf.mxu0
  %v624 = vadd.f32 %v611, %v623
  %v625 = vpop.f32.mrf.mxu0
  %626 = vdwg.mxu0
  %627 = vmatpush.bf16.msra.mxu0 %v476
  %628 = vmatpush.bf16.msra.mxu0 %v475
  %629 = vmatpush.bf16.msra.mxu0 %v474
  %630 = vmatpush.bf16.msra.mxu0 %v473
  %631 = vmatpush.bf16.msra.mxu0 %v472
  %632 = vmatpush.bf16.msra.mxu0 %v471
  %633 = vmatpush.bf16.msra.mxu0 %v470
  %634 = vmatpush.bf16.msra.mxu0 %v469
  %635 = vmatmul.bf16.gmra.mxu0 %v155
  %v636 = vpop.f32.mrf.mxu0
  %v637 = vadd.f32 %v624, %v636
  %v638 = vpop.f32.mrf.mxu0
  %639 = vdwg.mxu0
  %640 = vmatpush.bf16.msra.mxu0 %v484
  %641 = vmatpush.bf16.msra.mxu0 %v483
  %642 = vmatpush.bf16.msra.mxu0 %v482
  %643 = vmatpush.bf16.msra.mxu0 %v481
  %644 = vmatpush.bf16.msra.mxu0 %v480
  %645 = vmatpush.bf16.msra.mxu0 %v479
  %646 = vmatpush.bf16.msra.mxu0 %v478
  %647 = vmatpush.bf16.msra.mxu0 %v477
  %648 = vmatmul.bf16.gmra.mxu0 %v156
  %v649 = vpop.f32.mrf.mxu0
  %v650 = vadd.f32 %v637, %v649
  %v651 = vpop.f32.mrf.mxu0
  %652 = vdwg.mxu0
  %v653 = vsub.f32 0.0, %v650
  %v654 = vmul.f32 %v653, 1.442695
  %v655 = vpow.pop %v654
  %v656 = vadd.f32 %v655, 1.0
  %v657 = vrcp.pop %v656
  %v658 = vmul.f32 %v656, %v657
  %v659 = vsub.f32 1.0, %v658
  %v660 = vmul.f32 %v657, %v659
  %v661 = vadd.f32 %v657, %v660
  %vm662 = vweird.f32 %v656
  %vm663 = vweird.f32 %v657
  %vm664 = vmor %vm662, %vm663
  %v665 = vsel %vm664, %v657, %v661
  %v666 = vand.u32 2147483647, %v656
  %vm667 = vcmp.eq.f32.partialorder %v666, 8.507059e+37
  %v668 = vand.u32 %v656, 2147483648
  %v669 = vor.u32 1.1754944e-38, %v668
  %v670 = vsel %vm667, %v669, %v665
  %v671 = vmul.f32 1.0, %v670
  %672 = vst [vmem:[%s3] sm:$0x3] %v671
  // Predicated region
  $region14: #{discriminator_forward.15} parent=0 // pred_check
    _
  $region15: #{discriminator_forward.15} parent=0 // pred_check_branch
    %674 = sbr.rel (0) target = $region17
  $region16: #{discriminator_forward.15} parent=0 // pred_region
    _
  $region17: #{discriminator_forward.15} parent=0 // pred_fallthru
    _
  // Predicated region
  $region18: #{discriminator_forward.15} parent=0 // pred_check
    _
  $region19: #{discriminator_forward.15} parent=0 // pred_check_branch
    %676 = sbr.rel (0) target = $region21
  $region20: #{discriminator_forward.15} parent=0 // pred_region
    _
  $region21: #{discriminator_forward.15} parent=0 // pred_fallthru
    _

</llo_original>
